<compile_context>
chip_gen: v7x
topology: tpu7x:2x2x1
jax: 0.10.0
libtpu: 0.0.40
codegen_flags: <defaults>
</compile_context>

<pallas_src>
import jax
import jax.numpy as jnp
from jax.experimental import pallas as pl
from jax.experimental.pallas import tpu as pltpu


def _resblock_kernel(x_ref, w1_ref, b1_ref, w2_ref, b2_ref, o_ref,
                     xpad_ref, hpad_ref):
    # x_ref  : (1, H, W, Cin)   bf16 input block (one batch element, unpadded)
    # w1_ref : (9*Cin,  Cmid)   bf16, 3x3 taps folded into the contraction dim
    # w2_ref : (9*Cmid, Cout)   bf16
    # b*_ref : (1, C)           f32 biases
    # o_ref  : (1, Cout, H*W)   f32 output (lane-dense: last dim multiple of 128)
    # xpad_ref: VMEM (H+2, W+2, Cin)  f32 scratch (zero halo + interior copy)
    # hpad_ref: VMEM (H+2, W+2, Cmid) f32 scratch for the ReLU intermediate
    _, H, W, Cin = x_ref.shape
    Cmid = w1_ref.shape[1]
    Hp, Wp = H + 2, W + 2

    # Zero only the 1-pixel halo (the interior is fully overwritten below).
    # Done every grid step so it is correct regardless of how the "parallel"
    # batch axis is sharded across TensorCores (per-core scratch, no portable
    # "first iteration on this core" predicate).  Cost: 8 tiny vector stores.
    def _zero_halo(ref, c):
        ref[0:1, :, :] = jnp.zeros((1, Wp, c), ref.dtype)
        ref[Hp - 1:Hp, :, :] = jnp.zeros((1, Wp, c), ref.dtype)
        ref[:, 0:1, :] = jnp.zeros((Hp, 1, c), ref.dtype)
        ref[:, Wp - 1:Wp, :] = jnp.zeros((Hp, 1, c), ref.dtype)

    _zero_halo(xpad_ref, Cin)
    _zero_halo(hpad_ref, Cmid)

    # Interior of the padded input (halo stays zero).
    xpad_ref[1:H + 1, 1:W + 1, :] = x_ref[0].astype(xpad_ref.dtype)

    def im2col(pad_ref, c):
        # One (H*W, 9*c) operand: the 9 conv taps folded into the contraction.
        # The (H, W, c) -> (H*W, c) reshape collapses leading dims only (the
        # lane dim is untouched), which Mosaic handles without heavy relayout.
        return jnp.concatenate(
            [pad_ref[ky:ky + H, kx:kx + W, :].reshape(H * W, c)
             for ky in range(3) for kx in range(3)], axis=-1)

    # ---- conv1: single matmul, K = 9*Cin, f32 accumulation on the MXU ----
    cols1 = im2col(xpad_ref, Cin).astype(jnp.bfloat16)
    acc1 = jnp.dot(cols1, w1_ref[...], preferred_element_type=jnp.float32)
    h1 = jnp.maximum(acc1 + b1_ref[...], 0.0)              # bias + ReLU in f32

    # Padded intermediate for conv2 (interior only; halo already zero).
    hpad_ref[1:H + 1, 1:W + 1, :] = h1.reshape(H, W, Cmid)

    # ---- conv2: single matmul, K = 9*Cmid ----
    cols2 = im2col(hpad_ref, Cmid).astype(jnp.bfloat16)
    acc2 = jnp.dot(cols2, w2_ref[...], preferred_element_type=jnp.float32)
    out = acc2 + b2_ref[...]                                # (H*W, Cout), f32

    # Lane-dense store: (Cout, H*W) puts the long axis on lanes; the transpose
    # is a small (H*W, Cout) f32 XLU op, far cheaper than lane-masked stores.
    o_ref[...] = out.T[None].astype(o_ref.dtype)


def resblock_forward(x_nchw, w1, b1, w2, b2):
    """ResBlock.forward == block(x).  x_nchw: (N, C, H, W) float32.
    w1, w2: (3, 3, Cin, Cout) HWIO conv weights; b1, b2: (Cout,)."""
    N, C, H, W = x_nchw.shape
    Cin, Cmid = w1.shape[2], w1.shape[3]
    Cout = w2.shape[3]
    assert Cin == C and w2.shape[2] == Cmid

    # NCHW -> NHWC, bf16 activations (halves input HBM/DMA traffic).
    x = jnp.transpose(x_nchw, (0, 2, 3, 1)).astype(jnp.bfloat16)
    # Fold the 3x3 taps into the contraction dimension of the weights
    # (HWIO reshape gives (ky, kx, cin)-major rows, matching im2col columns).
    w1f = w1.reshape(9 * Cin, Cmid).astype(jnp.bfloat16)
    w2f = w2.reshape(9 * Cmid, Cout).astype(jnp.bfloat16)
    b1r = b1.reshape(1, Cmid).astype(jnp.float32)
    b2r = b2.reshape(1, Cout).astype(jnp.float32)

    flops = 2 * N * H * W * (9 * Cin * Cmid + 9 * Cmid * Cout)
    bytes_accessed = (x.size * 2 + w1f.size * 2 + w2f.size * 2
                      + b1r.size * 4 + b2r.size * 4 + N * Cout * H * W * 4)

    out_flat = pl.pallas_call(
        _resblock_kernel,
        out_shape=jax.ShapeDtypeStruct((N, Cout, H * W), jnp.float32),
        grid_spec=pltpu.PrefetchScalarGridSpec(
            num_scalar_prefetch=0,
            grid=(N,),                                       # one batch elem per step
            in_specs=[
                pl.BlockSpec((1, H, W, C), lambda n: (n, 0, 0, 0)),
                # Grid-invariant index_maps: weights/biases stay VMEM-resident.
                pl.BlockSpec((9 * Cin, Cmid), lambda n: (0, 0)),
                pl.BlockSpec((1, Cmid), lambda n: (0, 0)),
                pl.BlockSpec((9 * Cmid, Cout), lambda n: (0, 0)),
                pl.BlockSpec((1, Cout), lambda n: (0, 0)),
            ],
            out_specs=pl.BlockSpec((1, Cout, H * W), lambda n: (n, 0, 0)),
            scratch_shapes=[
                pltpu.VMEM((H + 2, W + 2, Cin), jnp.float32),
                pltpu.VMEM((H + 2, W + 2, Cmid), jnp.float32),
            ],
        ),
        compiler_params=pltpu.CompilerParams(
            dimension_semantics=("parallel",),               # megacore on v7x
            vmem_limit_bytes=32 * 1024 * 1024,               # headroom on v7x 64 MiB
        ),
        cost_estimate=pl.CostEstimate(flops=flops, transcendentals=0,
                                      bytes_accessed=bytes_accessed),
    )(x, w1f, b1r, w2f, b2r)

    # (N, Cout, H*W) -> NCHW is a pure reshape (no transpose).
    return out_flat.reshape(N, Cout, H, W)


def _reference(x_nchw, w1, b1, w2, b2):
    """Pure-JAX reference mirroring the kernel's bf16 operand quantization."""
    f32 = jnp.float32
    xq = x_nchw.astype(jnp.bfloat16).astype(f32)
    w1q = w1.astype(jnp.bfloat16).astype(f32)
    w2q = w2.astype(jnp.bfloat16).astype(f32)

    x = jnp.transpose(xq, (0, 2, 3, 1))
    dn = jax.lax.conv_dimension_numbers(x.shape, w1.shape,
                                        ("NHWC", "HWIO", "NHWC"))
    h = jax.lax.conv_general_dilated(
        x, w1q, (1, 1), "SAME", dimension_numbers=dn,
        precision=jax.lax.Precision.HIGHEST) + b1
    h = jnp.maximum(h, 0.0)
    hq = h.astype(jnp.bfloat16).astype(f32)                  # conv2 operand is bf16
    o = jax.lax.conv_general_dilated(
        hq, w2q, (1, 1), "SAME", dimension_numbers=dn,
        precision=jax.lax.Precision.HIGHEST) + b2
    return jnp.transpose(o, (0, 3, 1, 2))


if __name__ == "__main__":
    N, C, H, W = 2, 4, 16, 16
    key = jax.random.PRNGKey(0)
    kx, k1, kb1, k2, kb2 = jax.random.split(key, 5)

    x = jax.random.normal(kx, (N, C, H, W), jnp.float32)
    # Deterministic synthetic parameters (HWIO layout): Conv2d(C, C, 3, pad=1) x 2
    w1 = jax.random.normal(k1, (3, 3, C, C), jnp.float32) * 0.1
    b1 = jax.random.normal(kb1, (C,), jnp.float32) * 0.1
    w2 = jax.random.normal(k2, (3, 3, C, C), jnp.float32) * 0.1
    b2 = jax.random.normal(kb2, (C,), jnp.float32) * 0.1

    out = jax.block_until_ready(resblock_forward(x, w1, b1, w2, b2))

    ref = _reference(x, w1, b1, w2, b2)
    assert out.shape == (N, C, H, W)
    assert jnp.allclose(out, ref, atol=1e-3, rtol=1e-3), "mismatch vs reference"
    print("KERNEL_OK")
</pallas_src>

<mosaic_0001>
module attributes {stable_mosaic.version = 11 : i64} {
  func.func @_resblock_kernel(%arg0: i32, %arg1: memref<1x16x16x4xbf16, #tpu.memory_space<vmem>>, %arg2: memref<36x4xbf16, #tpu.memory_space<vmem>>, %arg3: memref<1x4xf32, #tpu.memory_space<vmem>>, %arg4: memref<36x4xbf16, #tpu.memory_space<vmem>>, %arg5: memref<1x4xf32, #tpu.memory_space<vmem>>, %arg6: memref<1x4x256xf32, #tpu.memory_space<vmem>>, %arg7: memref<18x18x4xf32, #tpu.memory_space<vmem>>, %arg8: memref<18x18x4xf32, #tpu.memory_space<vmem>>) attributes {dimension_semantics = [#tpu.dimension_semantics<parallel>], iteration_bounds = array<i64: 2>, scalar_prefetch = 0 : i64, scratch_operands = 2 : i64, tpu.core_type = #tpu.core_type<tc>, window_params = [{transform_indices = @transform_0, window_bounds = array<i64: 1, 16, 16, 4>}, {pipeline_mode = #tpu.pipeline_mode<synchronous>, transform_indices = @transform_1, window_bounds = array<i64: 36, 4>}, {pipeline_mode = #tpu.pipeline_mode<synchronous>, transform_indices = @transform_2, window_bounds = array<i64: 1, 4>}, {pipeline_mode = #tpu.pipeline_mode<synchronous>, transform_indices = @transform_3, window_bounds = array<i64: 36, 4>}, {pipeline_mode = #tpu.pipeline_mode<synchronous>, transform_indices = @transform_4, window_bounds = array<i64: 1, 4>}, {transform_indices = @transform_5, window_bounds = array<i64: 1, 4, 256>}]} {
    %cst = arith.constant 0.000000e+00 : f32
    %0 = vector.broadcast %cst : f32 to vector<1x18x4xf32>
    %c0 = arith.constant 0 : index
    %c0_0 = arith.constant 0 : index
    %c0_1 = arith.constant 0 : index
    %1 = vector.load %arg7[%c0, %c0_0, %c0_1] : memref<18x18x4xf32, #tpu.memory_space<vmem>>, vector<1x18x4xf32>
    tpu.vector_store %arg7[%c0, %c0_0, %c0_1], %0 {strides = array<i32>} : memref<18x18x4xf32, #tpu.memory_space<vmem>>, vector<1x18x4xf32>,
    %cst_2 = arith.constant 0.000000e+00 : f32
    %2 = vector.broadcast %cst_2 : f32 to vector<1x18x4xf32>
    %c17 = arith.constant 17 : index
    %c0_3 = arith.constant 0 : index
    %c0_4 = arith.constant 0 : index
    %3 = vector.load %arg7[%c17, %c0_3, %c0_4] : memref<18x18x4xf32, #tpu.memory_space<vmem>>, vector<1x18x4xf32>
    tpu.vector_store %arg7[%c17, %c0_3, %c0_4], %2 {strides = array<i32>} : memref<18x18x4xf32, #tpu.memory_space<vmem>>, vector<1x18x4xf32>,
    %cst_5 = arith.constant 0.000000e+00 : f32
    %4 = vector.broadcast %cst_5 : f32 to vector<18x1x4xf32>
    %c0_6 = arith.constant 0 : index
    %c0_7 = arith.constant 0 : index
    %c0_8 = arith.constant 0 : index
    %5 = vector.load %arg7[%c0_6, %c0_7, %c0_8] : memref<18x18x4xf32, #tpu.memory_space<vmem>>, vector<18x1x4xf32>
    tpu.vector_store %arg7[%c0_6, %c0_7, %c0_8], %4 {strides = array<i32>} : memref<18x18x4xf32, #tpu.memory_space<vmem>>, vector<18x1x4xf32>,
    %cst_9 = arith.constant 0.000000e+00 : f32
    %6 = vector.broadcast %cst_9 : f32 to vector<18x1x4xf32>
    %c0_10 = arith.constant 0 : index
    %c17_11 = arith.constant 17 : index
    %c0_12 = arith.constant 0 : index
    %7 = vector.load %arg7[%c0_10, %c17_11, %c0_12] : memref<18x18x4xf32, #tpu.memory_space<vmem>>, vector<18x1x4xf32>
    tpu.vector_store %arg7[%c0_10, %c17_11, %c0_12], %6 {strides = array<i32>} : memref<18x18x4xf32, #tpu.memory_space<vmem>>, vector<18x1x4xf32>,
    %cst_13 = arith.constant 0.000000e+00 : f32
    %8 = vector.broadcast %cst_13 : f32 to vector<1x18x4xf32>
    %c0_14 = arith.constant 0 : index
    %c0_15 = arith.constant 0 : index
    %c0_16 = arith.constant 0 : index
    %9 = vector.load %arg8[%c0_14, %c0_15, %c0_16] : memref<18x18x4xf32, #tpu.memory_space<vmem>>, vector<1x18x4xf32>
    tpu.vector_store %arg8[%c0_14, %c0_15, %c0_16], %8 {strides = array<i32>} : memref<18x18x4xf32, #tpu.memory_space<vmem>>, vector<1x18x4xf32>,
    %cst_17 = arith.constant 0.000000e+00 : f32
    %10 = vector.broadcast %cst_17 : f32 to vector<1x18x4xf32>
    %c17_18 = arith.constant 17 : index
    %c0_19 = arith.constant 0 : index
    %c0_20 = arith.constant 0 : index
    %11 = vector.load %arg8[%c17_18, %c0_19, %c0_20] : memref<18x18x4xf32, #tpu.memory_space<vmem>>, vector<1x18x4xf32>
    tpu.vector_store %arg8[%c17_18, %c0_19, %c0_20], %10 {strides = array<i32>} : memref<18x18x4xf32, #tpu.memory_space<vmem>>, vector<1x18x4xf32>,
    %cst_21 = arith.constant 0.000000e+00 : f32
    %12 = vector.broadcast %cst_21 : f32 to vector<18x1x4xf32>
    %c0_22 = arith.constant 0 : index
    %c0_23 = arith.constant 0 : index
    %c0_24 = arith.constant 0 : index
    %13 = vector.load %arg8[%c0_22, %c0_23, %c0_24] : memref<18x18x4xf32, #tpu.memory_space<vmem>>, vector<18x1x4xf32>
    tpu.vector_store %arg8[%c0_22, %c0_23, %c0_24], %12 {strides = array<i32>} : memref<18x18x4xf32, #tpu.memory_space<vmem>>, vector<18x1x4xf32>,
    %cst_25 = arith.constant 0.000000e+00 : f32
    %14 = vector.broadcast %cst_25 : f32 to vector<18x1x4xf32>
    %c0_26 = arith.constant 0 : index
    %c17_27 = arith.constant 17 : index
    %c0_28 = arith.constant 0 : index
    %15 = vector.load %arg8[%c0_26, %c17_27, %c0_28] : memref<18x18x4xf32, #tpu.memory_space<vmem>>, vector<18x1x4xf32>
    tpu.vector_store %arg8[%c0_26, %c17_27, %c0_28], %14 {strides = array<i32>} : memref<18x18x4xf32, #tpu.memory_space<vmem>>, vector<18x1x4xf32>,
    %c0_29 = arith.constant 0 : index
    %c0_30 = arith.constant 0 : index
    %c0_31 = arith.constant 0 : index
    %c0_32 = arith.constant 0 : index
    %16 = vector.load %arg1[%c0_29, %c0_30, %c0_31, %c0_32] : memref<1x16x16x4xbf16, #tpu.memory_space<vmem>>, vector<1x16x16x4xbf16>
    %17 = vector.shape_cast %16 : vector<1x16x16x4xbf16> to vector<16x16x4xbf16>
    %18 = arith.extf %17 : vector<16x16x4xbf16> to vector<16x16x4xf32>
    %c1 = arith.constant 1 : index
    %c1_33 = arith.constant 1 : index
    %c0_34 = arith.constant 0 : index
    %19 = vector.load %arg7[%c1, %c1_33, %c0_34] : memref<18x18x4xf32, #tpu.memory_space<vmem>>, vector<16x16x4xf32>
    tpu.vector_store %arg7[%c1, %c1_33, %c0_34], %18 {strides = array<i32>} : memref<18x18x4xf32, #tpu.memory_space<vmem>>, vector<16x16x4xf32>,
    %c0_35 = arith.constant 0 : index
    %c0_36 = arith.constant 0 : index
    %c0_37 = arith.constant 0 : index
    %20 = vector.load %arg7[%c0_35, %c0_36, %c0_37] : memref<18x18x4xf32, #tpu.memory_space<vmem>>, vector<16x16x4xf32>
    %21 = vector.shape_cast %20 : vector<16x16x4xf32> to vector<256x4xf32>
    %c0_38 = arith.constant 0 : index
    %c1_39 = arith.constant 1 : index
    %c0_40 = arith.constant 0 : index
    %22 = vector.load %arg7[%c0_38, %c1_39, %c0_40] : memref<18x18x4xf32, #tpu.memory_space<vmem>>, vector<16x16x4xf32>
    %23 = vector.shape_cast %22 : vector<16x16x4xf32> to vector<256x4xf32>
    %c0_41 = arith.constant 0 : index
    %c2 = arith.constant 2 : index
    %c0_42 = arith.constant 0 : index
    %24 = vector.load %arg7[%c0_41, %c2, %c0_42] : memref<18x18x4xf32, #tpu.memory_space<vmem>>, vector<16x16x4xf32>
    %25 = vector.shape_cast %24 : vector<16x16x4xf32> to vector<256x4xf32>
    %c1_43 = arith.constant 1 : index
    %c0_44 = arith.constant 0 : index
    %c0_45 = arith.constant 0 : index
    %26 = vector.load %arg7[%c1_43, %c0_44, %c0_45] : memref<18x18x4xf32, #tpu.memory_space<vmem>>, vector<16x16x4xf32>
    %27 = vector.shape_cast %26 : vector<16x16x4xf32> to vector<256x4xf32>
    %c1_46 = arith.constant 1 : index
    %c1_47 = arith.constant 1 : index
    %c0_48 = arith.constant 0 : index
    %28 = vector.load %arg7[%c1_46, %c1_47, %c0_48] : memref<18x18x4xf32, #tpu.memory_space<vmem>>, vector<16x16x4xf32>
    %29 = vector.shape_cast %28 : vector<16x16x4xf32> to vector<256x4xf32>
    %c1_49 = arith.constant 1 : index
    %c2_50 = arith.constant 2 : index
    %c0_51 = arith.constant 0 : index
    %30 = vector.load %arg7[%c1_49, %c2_50, %c0_51] : memref<18x18x4xf32, #tpu.memory_space<vmem>>, vector<16x16x4xf32>
    %31 = vector.shape_cast %30 : vector<16x16x4xf32> to vector<256x4xf32>
    %c2_52 = arith.constant 2 : index
    %c0_53 = arith.constant 0 : index
    %c0_54 = arith.constant 0 : index
    %32 = vector.load %arg7[%c2_52, %c0_53, %c0_54] : memref<18x18x4xf32, #tpu.memory_space<vmem>>, vector<16x16x4xf32>
    %33 = vector.shape_cast %32 : vector<16x16x4xf32> to vector<256x4xf32>
    %c2_55 = arith.constant 2 : index
    %c1_56 = arith.constant 1 : index
    %c0_57 = arith.constant 0 : index
    %34 = vector.load %arg7[%c2_55, %c1_56, %c0_57] : memref<18x18x4xf32, #tpu.memory_space<vmem>>, vector<16x16x4xf32>
    %35 = vector.shape_cast %34 : vector<16x16x4xf32> to vector<256x4xf32>
    %c2_58 = arith.constant 2 : index
    %c2_59 = arith.constant 2 : index
    %c0_60 = arith.constant 0 : index
    %36 = vector.load %arg7[%c2_58, %c2_59, %c0_60] : memref<18x18x4xf32, #tpu.memory_space<vmem>>, vector<16x16x4xf32>
    %37 = vector.shape_cast %36 : vector<16x16x4xf32> to vector<256x4xf32>
    %38 = tpu.concatenate %21, %23, %25, %27, %29, %31, %33, %35, %37 in 1 : vector<256x4xf32>, vector<256x4xf32>, vector<256x4xf32>, vector<256x4xf32>, vector<256x4xf32>, vector<256x4xf32>, vector<256x4xf32>, vector<256x4xf32>, vector<256x4xf32> -> vector<256x36xf32>
    %39 = arith.truncf %38 : vector<256x36xf32> to vector<256x36xbf16>
    %c0_61 = arith.constant 0 : index
    %c0_62 = arith.constant 0 : index
    %40 = vector.load %arg2[%c0_61, %c0_62] : memref<36x4xbf16, #tpu.memory_space<vmem>>, vector<36x4xbf16>
    %cst_63 = arith.constant dense<0.000000e+00> : vector<256x4xf32>
    %41 = tpu.matmul %39, %40, %cst_63 {dimension_numbers = #tpu.dot_dimension_numbers<[1], [0], [0], [1], [0, 0, 1, 1], [], []>} : vector<256x36xbf16>, vector<36x4xbf16>, vector<256x4xf32> -> vector<256x4xf32>
    %c0_64 = arith.constant 0 : index
    %c0_65 = arith.constant 0 : index
    %42 = vector.load %arg3[%c0_64, %c0_65] : memref<1x4xf32, #tpu.memory_space<vmem>>, vector<1x4xf32>
    %43 = vector.broadcast %42 : vector<1x4xf32> to vector<256x4xf32>
    %44 = arith.addf %41, %43 : vector<256x4xf32>
    %cst_66 = arith.constant 0.000000e+00 : f32
    %45 = vector.broadcast %cst_66 : f32 to vector<256x4xf32>
    %46 = arith.maximumf %44, %45 : vector<256x4xf32>
    %47 = vector.shape_cast %46 : vector<256x4xf32> to vector<16x16x4xf32>
    %c1_67 = arith.constant 1 : index
    %c1_68 = arith.constant 1 : index
    %c0_69 = arith.constant 0 : index
    %48 = vector.load %arg8[%c1_67, %c1_68, %c0_69] : memref<18x18x4xf32, #tpu.memory_space<vmem>>, vector<16x16x4xf32>
    tpu.vector_store %arg8[%c1_67, %c1_68, %c0_69], %47 {strides = array<i32>} : memref<18x18x4xf32, #tpu.memory_space<vmem>>, vector<16x16x4xf32>,
    %c0_70 = arith.constant 0 : index
    %c0_71 = arith.constant 0 : index
    %c0_72 = arith.constant 0 : index
    %49 = vector.load %arg8[%c0_70, %c0_71, %c0_72] : memref<18x18x4xf32, #tpu.memory_space<vmem>>, vector<16x16x4xf32>
    %50 = vector.shape_cast %49 : vector<16x16x4xf32> to vector<256x4xf32>
    %c0_73 = arith.constant 0 : index
    %c1_74 = arith.constant 1 : index
    %c0_75 = arith.constant 0 : index
    %51 = vector.load %arg8[%c0_73, %c1_74, %c0_75] : memref<18x18x4xf32, #tpu.memory_space<vmem>>, vector<16x16x4xf32>
    %52 = vector.shape_cast %51 : vector<16x16x4xf32> to vector<256x4xf32>
    %c0_76 = arith.constant 0 : index
    %c2_77 = arith.constant 2 : index
    %c0_78 = arith.constant 0 : index
    %53 = vector.load %arg8[%c0_76, %c2_77, %c0_78] : memref<18x18x4xf32, #tpu.memory_space<vmem>>, vector<16x16x4xf32>
    %54 = vector.shape_cast %53 : vector<16x16x4xf32> to vector<256x4xf32>
    %c1_79 = arith.constant 1 : index
    %c0_80 = arith.constant 0 : index
    %c0_81 = arith.constant 0 : index
    %55 = vector.load %arg8[%c1_79, %c0_80, %c0_81] : memref<18x18x4xf32, #tpu.memory_space<vmem>>, vector<16x16x4xf32>
    %56 = vector.shape_cast %55 : vector<16x16x4xf32> to vector<256x4xf32>
    %c1_82 = arith.constant 1 : index
    %c1_83 = arith.constant 1 : index
    %c0_84 = arith.constant 0 : index
    %57 = vector.load %arg8[%c1_82, %c1_83, %c0_84] : memref<18x18x4xf32, #tpu.memory_space<vmem>>, vector<16x16x4xf32>
    %58 = vector.shape_cast %57 : vector<16x16x4xf32> to vector<256x4xf32>
    %c1_85 = arith.constant 1 : index
    %c2_86 = arith.constant 2 : index
    %c0_87 = arith.constant 0 : index
    %59 = vector.load %arg8[%c1_85, %c2_86, %c0_87] : memref<18x18x4xf32, #tpu.memory_space<vmem>>, vector<16x16x4xf32>
    %60 = vector.shape_cast %59 : vector<16x16x4xf32> to vector<256x4xf32>
    %c2_88 = arith.constant 2 : index
    %c0_89 = arith.constant 0 : index
    %c0_90 = arith.constant 0 : index
    %61 = vector.load %arg8[%c2_88, %c0_89, %c0_90] : memref<18x18x4xf32, #tpu.memory_space<vmem>>, vector<16x16x4xf32>
    %62 = vector.shape_cast %61 : vector<16x16x4xf32> to vector<256x4xf32>
    %c2_91 = arith.constant 2 : index
    %c1_92 = arith.constant 1 : index
    %c0_93 = arith.constant 0 : index
    %63 = vector.load %arg8[%c2_91, %c1_92, %c0_93] : memref<18x18x4xf32, #tpu.memory_space<vmem>>, vector<16x16x4xf32>
    %64 = vector.shape_cast %63 : vector<16x16x4xf32> to vector<256x4xf32>
    %c2_94 = arith.constant 2 : index
    %c2_95 = arith.constant 2 : index
    %c0_96 = arith.constant 0 : index
    %65 = vector.load %arg8[%c2_94, %c2_95, %c0_96] : memref<18x18x4xf32, #tpu.memory_space<vmem>>, vector<16x16x4xf32>
    %66 = vector.shape_cast %65 : vector<16x16x4xf32> to vector<256x4xf32>
    %67 = tpu.concatenate %50, %52, %54, %56, %58, %60, %62, %64, %66 in 1 : vector<256x4xf32>, vector<256x4xf32>, vector<256x4xf32>, vector<256x4xf32>, vector<256x4xf32>, vector<256x4xf32>, vector<256x4xf32>, vector<256x4xf32>, vector<256x4xf32> -> vector<256x36xf32>
    %68 = arith.truncf %67 : vector<256x36xf32> to vector<256x36xbf16>
    %c0_97 = arith.constant 0 : index
    %c0_98 = arith.constant 0 : index
    %69 = vector.load %arg4[%c0_97, %c0_98] : memref<36x4xbf16, #tpu.memory_space<vmem>>, vector<36x4xbf16>
    %cst_99 = arith.constant dense<0.000000e+00> : vector<256x4xf32>
    %70 = tpu.matmul %68, %69, %cst_99 {dimension_numbers = #tpu.dot_dimension_numbers<[1], [0], [0], [1], [0, 0, 1, 1], [], []>} : vector<256x36xbf16>, vector<36x4xbf16>, vector<256x4xf32> -> vector<256x4xf32>
    %c0_100 = arith.constant 0 : index
    %c0_101 = arith.constant 0 : index
    %71 = vector.load %arg5[%c0_100, %c0_101] : memref<1x4xf32, #tpu.memory_space<vmem>>, vector<1x4xf32>
    %72 = vector.broadcast %71 : vector<1x4xf32> to vector<256x4xf32>
    %73 = arith.addf %70, %72 : vector<256x4xf32>
    %74 = tpu.transpose %73, [1, 0] : vector<256x4xf32> -> vector<4x256xf32>
    %75 = vector.shape_cast %74 : vector<4x256xf32> to vector<1x4x256xf32>
    %c0_102 = arith.constant 0 : index
    %c0_103 = arith.constant 0 : index
    %c0_104 = arith.constant 0 : index
    %76 = vector.load %arg6[%c0_102, %c0_103, %c0_104] : memref<1x4x256xf32, #tpu.memory_space<vmem>>, vector<1x4x256xf32>
    tpu.vector_store %arg6[%c0_102, %c0_103, %c0_104], %75 {strides = array<i32>} : memref<1x4x256xf32, #tpu.memory_space<vmem>>, vector<1x4x256xf32>,
    return
  }
  func.func @transform_0(%arg0: i32) -> (i32, i32, i32, i32) {
    %c0_i32 = arith.constant 0 : i32
    %c0_i32_0 = arith.constant 0 : i32
    %c0_i32_1 = arith.constant 0 : i32
    %c0_i32_2 = arith.constant 0 : i32
    return %arg0, %c0_i32, %c0_i32_0, %c0_i32_1 : i32, i32, i32, i32
  }
  func.func @transform_1(%arg0: i32) -> (i32, i32) {
    %c0_i32 = arith.constant 0 : i32
    %c0_i32_0 = arith.constant 0 : i32
    %c0_i32_1 = arith.constant 0 : i32
    return %c0_i32, %c0_i32_0 : i32, i32
  }
  func.func @transform_2(%arg0: i32) -> (i32, i32) {
    %c0_i32 = arith.constant 0 : i32
    %c0_i32_0 = arith.constant 0 : i32
    %c0_i32_1 = arith.constant 0 : i32
    return %c0_i32, %c0_i32_0 : i32, i32
  }
  func.func @transform_3(%arg0: i32) -> (i32, i32) {
    %c0_i32 = arith.constant 0 : i32
    %c0_i32_0 = arith.constant 0 : i32
    %c0_i32_1 = arith.constant 0 : i32
    return %c0_i32, %c0_i32_0 : i32, i32
  }
  func.func @transform_4(%arg0: i32) -> (i32, i32) {
    %c0_i32 = arith.constant 0 : i32
    %c0_i32_0 = arith.constant 0 : i32
    %c0_i32_1 = arith.constant 0 : i32
    return %c0_i32, %c0_i32_0 : i32, i32
  }
  func.func @transform_5(%arg0: i32) -> (i32, i32, i32) {
    %c0_i32 = arith.constant 0 : i32
    %c0_i32_0 = arith.constant 0 : i32
    %c0_i32_1 = arith.constant 0 : i32
    return %arg0, %c0_i32, %c0_i32_0 : i32, i32, i32
  }
}

</mosaic_0001>

<llo_original>
// kernel: tpu_custom_call.1
$region0: #{tpu_custom_call.1}
  #allocation0 [shape = 'u32[]', space=smem, size = 0x4, offset = 0x4, fixed_abs, tag = 'smem constant byte address 0x4 - core index']
  #allocation1 [shape = 'u32[144,128]{1,0:T(1,128)}', space=vmem, size = 0x12000, scoped, tag = 'internal scratch']
  #allocation2 [shape = 'f32[18,18,4]{2,1,0:T(8,128)}', space=vmem, size = 0x36000, scoped, tag = 'scratch operand']
  #allocation3 [shape = 'f32[18,18,4]{2,1,0:T(8,128)}', space=vmem, size = 0x36000, scoped, tag = 'scratch operand']
  %s0 = inlined_call_operand.vmem [shape: bf16[2,16,16,4], index: 0, kind: input, shape index: {}]
  %s1 = inlined_call_operand.vmem [shape: bf16[36,4], index: 1, kind: input, shape index: {}]
  %s2 = inlined_call_operand.vmem [shape: f32[1,4], index: 2, kind: input, shape index: {}]
  %s3 = inlined_call_operand.vmem [shape: bf16[36,4], index: 3, kind: input, shape index: {}]
  %s4 = inlined_call_operand.vmem [shape: f32[1,4], index: 4, kind: input, shape index: {}]
  %s5 = inlined_call_operand.hbm [shape: f32[2,4,256], index: 5, kind: output, shape index: {}]
  %s6 = sld [smem:[#allocation0]]
  $region53: #{tpu_custom_call.1} parent=0
    _
  %s8 = ssub.s32 1, %s6
  %s9 = scalar_select 0, %s8, %s6
  $region1: #{tpu_custom_call.1} parent=0
    #allocation4 [shape = 'u8[8192]{0}', space=vmem, size = 0x2000, scoped, tag = 'output window, operand 0']
    #allocation5 [shape = 's32[2]{0}', space=sflag, size = 0x8, scoped, tag = 'scoped memory for tpu_custom_call.1']
    %10 = vsyncpa [#allocation5], 0
    %s11 = scalar_lea.sflag [#allocation5], 1
    %12 = vsyncpa %s11, 0
    loop: start=0, step=1, limit=4
    $region2: #{tpu_custom_call.1} parent=1 // loop_pre_header
      _
    $region3: #{tpu_custom_call.1} parent=1 // loop_header
      %s14 = sphi 0, %s18
      %p15 = scmp.ge.s32.totalorder %s14, 4
      %s24 = sphi 0, %s26
      %s27 = sphi 0, %s24
      %s28 = sphi 0, %s27
      %s44 = sphi 0, %s28
      %s48 = sphi 0, %s48
      %s50 = sphi 0, %s48
      %s51 = sphi 0, %s50
      %s65 = sphi 0, %s51
      %s69 = sphi 0, %s69
      %s71 = sphi 0, %s69
      %s72 = sphi 0, %s71
      %s86 = sphi 0, %s72
      %s90 = sphi 0, %s90
      %s92 = sphi 0, %s90
      %s93 = sphi 0, %s92
      %s107 = sphi 0, %s93
      %s111 = sphi 0, %s111
      %s113 = sphi 0, %s111
      %s114 = sphi 0, %s113
      %s128 = sphi 0, %s114
      %s134 = sphi 0, %s136
      %s137 = sphi 0, %s134
      %s138 = sphi 0, %s137
      %s154 = sphi 0, %s138
    $region4: #{tpu_custom_call.1} parent=1 // loop_header_branch
      %17 = sbr.rel (%p15) target = $region8
    $region5: #{tpu_custom_call.1} parent=1 // loop_body
      %s19 = ssub.s32 %s14, 1
      %s20 = ssub.s32 %s14, 2
      %s21 = sadd.s32 %s14, 1
      %s22 = ssub.s32 %s14, %s21
      %p23 = scmp.eq.s32.totalorder %s22, 0
      %s25 = sadd.s32 %s24, 1
      %s26 = scalar_select %p23, %s24, %s25
      %p29 = pneg %p23
      %p30 = scmp.eq.s32.totalorder %s14, 1
      %p31 = por %p29, %p30
      %p32 = scmp.ne.s32.totalorder %s24, %s27
      %p33 = scmp.eq.s32.totalorder %s14, 0
      %p34 = por %p32, %p33
      %p35 = scmp.ne.s32.totalorder %s24, %s27
      %p36 = scmp.eq.s32.totalorder %s19, 1
      %p37 = por %p35, %p36
      %p38 = scmp.ne.s32.totalorder %s27, %s28
      %p39 = scmp.eq.s32.totalorder %s19, 0
      %p40 = por %p38, %p39
      %p41 = scmp.ne.s32.totalorder %s27, %s28
      %p42 = scmp.eq.s32.totalorder %s20, 1
      %p43 = por %p41, %p42
      %p45 = scmp.ne.s32.totalorder %s28, %s44
      %p46 = scmp.eq.s32.totalorder %s20, 0
      %p47 = por %p45, %p46
      %s49 = sadd.s32 %s48, 1
      %p52 = scmp.eq.s32.totalorder %s14, 1
      %p53 = scmp.ne.s32.totalorder %s48, %s50
      %p54 = scmp.eq.s32.totalorder %s14, 0
      %p55 = por %p53, %p54
      %p56 = scmp.ne.s32.totalorder %s48, %s50
      %p57 = scmp.eq.s32.totalorder %s19, 1
      %p58 = por %p56, %p57
      %p59 = scmp.ne.s32.totalorder %s50, %s51
      %p60 = scmp.eq.s32.totalorder %s19, 0
      %p61 = por %p59, %p60
      %p62 = scmp.ne.s32.totalorder %s50, %s51
      %p63 = scmp.eq.s32.totalorder %s20, 1
      %p64 = por %p62, %p63
      %p66 = scmp.ne.s32.totalorder %s51, %s65
      %p67 = scmp.eq.s32.totalorder %s20, 0
      %p68 = por %p66, %p67
      %s70 = sadd.s32 %s69, 1
      %p73 = scmp.eq.s32.totalorder %s14, 1
      %p74 = scmp.ne.s32.totalorder %s69, %s71
      %p75 = scmp.eq.s32.totalorder %s14, 0
      %p76 = por %p74, %p75
      %p77 = scmp.ne.s32.totalorder %s69, %s71
      %p78 = scmp.eq.s32.totalorder %s19, 1
      %p79 = por %p77, %p78
      %p80 = scmp.ne.s32.totalorder %s71, %s72
      %p81 = scmp.eq.s32.totalorder %s19, 0
      %p82 = por %p80, %p81
      %p83 = scmp.ne.s32.totalorder %s71, %s72
      %p84 = scmp.eq.s32.totalorder %s20, 1
      %p85 = por %p83, %p84
      %p87 = scmp.ne.s32.totalorder %s72, %s86
      %p88 = scmp.eq.s32.totalorder %s20, 0
      %p89 = por %p87, %p88
      %s91 = sadd.s32 %s90, 1
      %p94 = scmp.eq.s32.totalorder %s14, 1
      %p95 = scmp.ne.s32.totalorder %s90, %s92
      %p96 = scmp.eq.s32.totalorder %s14, 0
      %p97 = por %p95, %p96
      %p98 = scmp.ne.s32.totalorder %s90, %s92
      %p99 = scmp.eq.s32.totalorder %s19, 1
      %p100 = por %p98, %p99
      %p101 = scmp.ne.s32.totalorder %s92, %s93
      %p102 = scmp.eq.s32.totalorder %s19, 0
      %p103 = por %p101, %p102
      %p104 = scmp.ne.s32.totalorder %s92, %s93
      %p105 = scmp.eq.s32.totalorder %s20, 1
      %p106 = por %p104, %p105
      %p108 = scmp.ne.s32.totalorder %s93, %s107
      %p109 = scmp.eq.s32.totalorder %s20, 0
      %p110 = por %p108, %p109
      %s112 = sadd.s32 %s111, 1
      %p115 = scmp.eq.s32.totalorder %s14, 1
      %p116 = scmp.ne.s32.totalorder %s111, %s113
      %p117 = scmp.eq.s32.totalorder %s14, 0
      %p118 = por %p116, %p117
      %p119 = scmp.ne.s32.totalorder %s111, %s113
      %p120 = scmp.eq.s32.totalorder %s19, 1
      %p121 = por %p119, %p120
      %p122 = scmp.ne.s32.totalorder %s113, %s114
      %p123 = scmp.eq.s32.totalorder %s19, 0
      %p124 = por %p122, %p123
      %p125 = scmp.ne.s32.totalorder %s113, %s114
      %p126 = scmp.eq.s32.totalorder %s20, 1
      %p127 = por %p125, %p126
      %p129 = scmp.ne.s32.totalorder %s114, %s128
      %p130 = scmp.eq.s32.totalorder %s20, 0
      %p131 = por %p129, %p130
      %s132 = ssub.s32 %s14, %s21
      %p133 = scmp.eq.s32.totalorder %s132, 0
      %s135 = sadd.s32 %s134, 1
      %s136 = scalar_select %p133, %s134, %s135
      %p139 = pneg %p133
      %p140 = scmp.eq.s32.totalorder %s14, 1
      %p141 = por %p139, %p140
      %p142 = scmp.ne.s32.totalorder %s134, %s137
      %p143 = scmp.eq.s32.totalorder %s14, 0
      %p144 = por %p142, %p143
      %p145 = scmp.ne.s32.totalorder %s134, %s137
      %p146 = scmp.eq.s32.totalorder %s19, 1
      %p147 = por %p145, %p146
      %p148 = scmp.ne.s32.totalorder %s137, %s138
      %p149 = scmp.eq.s32.totalorder %s19, 0
      %p150 = por %p148, %p149
      %p151 = scmp.ne.s32.totalorder %s137, %s138
      %p152 = scmp.eq.s32.totalorder %s20, 1
      %p153 = por %p151, %p152
      %p155 = scmp.ne.s32.totalorder %s138, %s154
      %p156 = scmp.eq.s32.totalorder %s20, 0
      %p157 = por %p155, %p156
      %p158 = scmp.le.s32.totalorder 1, %s14
      %p159 = scmp.lt.s32.totalorder %s14, 3
      %p160 = pnand %p158, %p159
      %p161 = pneg %p160
      // Predicated region
      $region9: #{tpu_custom_call.1} parent=5 // pred_check
        _
      $region10: #{tpu_custom_call.1} parent=5 // pred_check_branch
        %163 = sbr.rel (%p160) target = $region12
      $region11: #{tpu_custom_call.1} parent=5 // pred_region
        %s164 = ssub.s32 %s14, 1
        // Predicated region
        $region13: #{tpu_custom_call.1} parent=11 // pred_check
          %p165 = pneg %p61
        $region14: #{tpu_custom_call.1} parent=11 // pred_check_branch
          %167 = sbr.rel (%p165) target = $region16
        $region15: #{tpu_custom_call.1} parent=11 // pred_region
          _
        $region16: #{tpu_custom_call.1} parent=11 // pred_fallthru
          _
        // Predicated region
        $region17: #{tpu_custom_call.1} parent=11 // pred_check
          %p168 = pneg %p82
        $region18: #{tpu_custom_call.1} parent=11 // pred_check_branch
          %170 = sbr.rel (%p168) target = $region20
        $region19: #{tpu_custom_call.1} parent=11 // pred_region
          _
        $region20: #{tpu_custom_call.1} parent=11 // pred_fallthru
          _
        // Predicated region
        $region21: #{tpu_custom_call.1} parent=11 // pred_check
          %p171 = pneg %p103
        $region22: #{tpu_custom_call.1} parent=11 // pred_check_branch
          %173 = sbr.rel (%p171) target = $region24
        $region23: #{tpu_custom_call.1} parent=11 // pred_region
          _
        $region24: #{tpu_custom_call.1} parent=11 // pred_fallthru
          _
        // Predicated region
        $region25: #{tpu_custom_call.1} parent=11 // pred_check
          %p174 = pneg %p124
        $region26: #{tpu_custom_call.1} parent=11 // pred_check_branch
          %176 = sbr.rel (%p174) target = $region28
        $region27: #{tpu_custom_call.1} parent=11 // pred_region
          _
        $region28: #{tpu_custom_call.1} parent=11 // pred_fallthru
          _
      $region12: #{tpu_custom_call.1} parent=5 // pred_fallthru
        _
      %p177 = scmp.lt.s32.totalorder %s14, 2
      // Predicated region
      $region29: #{tpu_custom_call.1} parent=5 // pred_check
        %p178 = pneg %p177
      $region30: #{tpu_custom_call.1} parent=5 // pred_check_branch
        %180 = sbr.rel (%p178) target = $region32
      $region31: #{tpu_custom_call.1} parent=5 // pred_region
        // Predicated region
        $region33: #{tpu_custom_call.1} parent=31 // pred_check
          %p181 = pneg %p34
        $region34: #{tpu_custom_call.1} parent=31 // pred_check_branch
          %183 = sbr.rel (%p181) target = $region36
        $region35: #{tpu_custom_call.1} parent=31 // pred_region
          %p184 = scmp.lt.s32.totalorder %s14, 1
          %s185 = scalar_select %p184, %s14, 1
          %s186 = smul.addr %s185, 32
          %s187 = smul.addr %s186, 4
          %s188 = scalar_lea.vmem %s0, %s187
        $region36: #{tpu_custom_call.1} parent=31 // pred_fallthru
          _
      $region32: #{tpu_custom_call.1} parent=5 // pred_fallthru
        _
      %p189 = scmp.le.s32.totalorder 1, %s14
      %p190 = scmp.lt.s32.totalorder %s14, 3
      %p191 = pnand %p189, %p190
      %p192 = pneg %p191
      // Predicated region
      $region37: #{tpu_custom_call.1} parent=5 // pred_check
        _
      $region38: #{tpu_custom_call.1} parent=5 // pred_check_branch
        %194 = sbr.rel (%p191) target = $region40
      $region39: #{tpu_custom_call.1} parent=5 // pred_region
        %s195 = ssub.s32 %s14, 1
        %p196 = scmp.lt.s32.totalorder %s19, 1
        %s197 = scalar_select %p196, %s19, 1
        %s198 = smul.addr %s197, 32
        %s199 = smul.addr %s198, 4
        %s200 = scalar_lea.vmem %s0, %s199
        %p201 = pneg %p40
        %p202 = pneg %p37
        %p203 = pneg %p61
        %p204 = pneg %p58
        %p205 = pneg %p82
        %p206 = pneg %p79
        %p207 = pneg %p103
        %p208 = pneg %p100
        %p209 = pneg %p124
        %p210 = pneg %p121
        %p211 = pneg %p150
        %p212 = pneg %p147
        %s213 = sand.u32 %s137, 1
        %s214 = scalar_lea.sflag [#allocation5], %s213
        %s215 = sand.u32 %s137, 1
        %s216 = smul.addr %s215, 8
        %s217 = scalar_lea.vmem [#allocation4], %s216
        %p218 = scmp.lt.s32.totalorder %s19, 1
        %s219 = scalar_select %p218, %s19, 1
        %s220 = smul.addr %s219, 32
        %s221 = smul.addr %s220, 4
        %s222 = scalar_lea.vmem %s0, %s221
        %vm224 = vcmask 31744
        %225 = vst.msk [vmem:[#allocation2] sm:$0xff] %vm224, 0.0
        %226 = vst.msk [vmem:[#allocation2 + $0x8] sm:$0xff] %vm224, 0.0
        %vm227 = vcmask 25600
        %228 = vst.msk [vmem:[#allocation2 + $0x10] sm:$0x3] %vm227, 0.0
        %s229 = scalar_lea.vmem [#allocation2], 408
        %230 = vst.msk [vmem:[%s229] sm:$0xff] %vm224, 0.0
        %231 = vst.msk [vmem:[%s229 + $0x8] sm:$0xff] %vm224, 0.0
        %232 = vst.msk [vmem:[%s229 + $0x10] sm:$0x3] %vm227, 0.0
        %vm233 = vcmask 24576
        %234 = vst.msk [vmem:[#allocation2] sm:$0x1] %vm233, 0.0
        %235 = vst.msk [vmem:[#allocation2 + $0x18] sm:$0x1] %vm233, 0.0
        %236 = vst.msk [vmem:[#allocation2 + $0x30] sm:$0x1] %vm233, 0.0
        %237 = vst.msk [vmem:[#allocation2 + $0x48] sm:$0x1] %vm233, 0.0
        %238 = vst.msk [vmem:[#allocation2 + $0x60] sm:$0x1] %vm233, 0.0
        %239 = vst.msk [vmem:[#allocation2 + $0x78] sm:$0x1] %vm233, 0.0
        %240 = vst.msk [vmem:[#allocation2 + $0x90] sm:$0x1] %vm233, 0.0
        %241 = vst.msk [vmem:[#allocation2 + $0xa8] sm:$0x1] %vm233, 0.0
        %242 = vst.msk [vmem:[#allocation2 + $0xc0] sm:$0x1] %vm233, 0.0
        %243 = vst.msk [vmem:[#allocation2 + $0xd8] sm:$0x1] %vm233, 0.0
        %244 = vst.msk [vmem:[#allocation2 + $0xf0] sm:$0x1] %vm233, 0.0
        %245 = vst.msk [vmem:[#allocation2 + $0x108] sm:$0x1] %vm233, 0.0
        %246 = vst.msk [vmem:[#allocation2 + $0x120] sm:$0x1] %vm233, 0.0
        %247 = vst.msk [vmem:[#allocation2 + $0x138] sm:$0x1] %vm233, 0.0
        %248 = vst.msk [vmem:[#allocation2 + $0x150] sm:$0x1] %vm233, 0.0
        %249 = vst.msk [vmem:[#allocation2 + $0x168] sm:$0x1] %vm233, 0.0
        %250 = vst.msk [vmem:[#allocation2 + $0x180] sm:$0x1] %vm233, 0.0
        %251 = vst.msk [vmem:[#allocation2 + $0x198] sm:$0x1] %vm233, 0.0
        %252 = vst.msk [vmem:[#allocation2 + $0x11] sm:$0x1] %vm233, 0.0
        %253 = vst.msk [vmem:[#allocation2 + $0x29] sm:$0x1] %vm233, 0.0
        %254 = vst.msk [vmem:[#allocation2 + $0x41] sm:$0x1] %vm233, 0.0
        %255 = vst.msk [vmem:[#allocation2 + $0x59] sm:$0x1] %vm233, 0.0
        %256 = vst.msk [vmem:[#allocation2 + $0x71] sm:$0x1] %vm233, 0.0
        %257 = vst.msk [vmem:[#allocation2 + $0x89] sm:$0x1] %vm233, 0.0
        %258 = vst.msk [vmem:[#allocation2 + $0xa1] sm:$0x1] %vm233, 0.0
        %259 = vst.msk [vmem:[#allocation2 + $0xb9] sm:$0x1] %vm233, 0.0
        %260 = vst.msk [vmem:[#allocation2 + $0xd1] sm:$0x1] %vm233, 0.0
        %261 = vst.msk [vmem:[#allocation2 + $0xe9] sm:$0x1] %vm233, 0.0
        %262 = vst.msk [vmem:[#allocation2 + $0x101] sm:$0x1] %vm233, 0.0
        %263 = vst.msk [vmem:[#allocation2 + $0x119] sm:$0x1] %vm233, 0.0
        %264 = vst.msk [vmem:[#allocation2 + $0x131] sm:$0x1] %vm233, 0.0
        %265 = vst.msk [vmem:[#allocation2 + $0x149] sm:$0x1] %vm233, 0.0
        %266 = vst.msk [vmem:[#allocation2 + $0x161] sm:$0x1] %vm233, 0.0
        %267 = vst.msk [vmem:[#allocation2 + $0x179] sm:$0x1] %vm233, 0.0
        %268 = vst.msk [vmem:[#allocation2 + $0x191] sm:$0x1] %vm233, 0.0
        %269 = vst.msk [vmem:[#allocation2 + $0x1a9] sm:$0x1] %vm233, 0.0
        %270 = vst.msk [vmem:[#allocation3] sm:$0xff] %vm224, 0.0
        %271 = vst.msk [vmem:[#allocation3 + $0x8] sm:$0xff] %vm224, 0.0
        %272 = vst.msk [vmem:[#allocation3 + $0x10] sm:$0x3] %vm227, 0.0
        %s273 = scalar_lea.vmem [#allocation3], 408
        %274 = vst.msk [vmem:[%s273] sm:$0xff] %vm224, 0.0
        %275 = vst.msk [vmem:[%s273 + $0x8] sm:$0xff] %vm224, 0.0
        %276 = vst.msk [vmem:[%s273 + $0x10] sm:$0x3] %vm227, 0.0
        %277 = vst.msk [vmem:[#allocation3] sm:$0x1] %vm233, 0.0
        %278 = vst.msk [vmem:[#allocation3 + $0x18] sm:$0x1] %vm233, 0.0
        %279 = vst.msk [vmem:[#allocation3 + $0x30] sm:$0x1] %vm233, 0.0
        %280 = vst.msk [vmem:[#allocation3 + $0x48] sm:$0x1] %vm233, 0.0
        %281 = vst.msk [vmem:[#allocation3 + $0x60] sm:$0x1] %vm233, 0.0
        %282 = vst.msk [vmem:[#allocation3 + $0x78] sm:$0x1] %vm233, 0.0
        %283 = vst.msk [vmem:[#allocation3 + $0x90] sm:$0x1] %vm233, 0.0
        %284 = vst.msk [vmem:[#allocation3 + $0xa8] sm:$0x1] %vm233, 0.0
        %285 = vst.msk [vmem:[#allocation3 + $0xc0] sm:$0x1] %vm233, 0.0
        %286 = vst.msk [vmem:[#allocation3 + $0xd8] sm:$0x1] %vm233, 0.0
        %287 = vst.msk [vmem:[#allocation3 + $0xf0] sm:$0x1] %vm233, 0.0
        %288 = vst.msk [vmem:[#allocation3 + $0x108] sm:$0x1] %vm233, 0.0
        %289 = vst.msk [vmem:[#allocation3 + $0x120] sm:$0x1] %vm233, 0.0
        %290 = vst.msk [vmem:[#allocation3 + $0x138] sm:$0x1] %vm233, 0.0
        %291 = vst.msk [vmem:[#allocation3 + $0x150] sm:$0x1] %vm233, 0.0
        %292 = vst.msk [vmem:[#allocation3 + $0x168] sm:$0x1] %vm233, 0.0
        %293 = vst.msk [vmem:[#allocation3 + $0x180] sm:$0x1] %vm233, 0.0
        %294 = vst.msk [vmem:[#allocation3 + $0x198] sm:$0x1] %vm233, 0.0
        %295 = vst.msk [vmem:[#allocation3 + $0x11] sm:$0x1] %vm233, 0.0
        %296 = vst.msk [vmem:[#allocation3 + $0x29] sm:$0x1] %vm233, 0.0
        %297 = vst.msk [vmem:[#allocation3 + $0x41] sm:$0x1] %vm233, 0.0
        %298 = vst.msk [vmem:[#allocation3 + $0x59] sm:$0x1] %vm233, 0.0
        %299 = vst.msk [vmem:[#allocation3 + $0x71] sm:$0x1] %vm233, 0.0
        %300 = vst.msk [vmem:[#allocation3 + $0x89] sm:$0x1] %vm233, 0.0
        %301 = vst.msk [vmem:[#allocation3 + $0xa1] sm:$0x1] %vm233, 0.0
        %302 = vst.msk [vmem:[#allocation3 + $0xb9] sm:$0x1] %vm233, 0.0
        %303 = vst.msk [vmem:[#allocation3 + $0xd1] sm:$0x1] %vm233, 0.0
        %304 = vst.msk [vmem:[#allocation3 + $0xe9] sm:$0x1] %vm233, 0.0
        %305 = vst.msk [vmem:[#allocation3 + $0x101] sm:$0x1] %vm233, 0.0
        %306 = vst.msk [vmem:[#allocation3 + $0x119] sm:$0x1] %vm233, 0.0
        %307 = vst.msk [vmem:[#allocation3 + $0x131] sm:$0x1] %vm233, 0.0
        %308 = vst.msk [vmem:[#allocation3 + $0x149] sm:$0x1] %vm233, 0.0
        %309 = vst.msk [vmem:[#allocation3 + $0x161] sm:$0x1] %vm233, 0.0
        %310 = vst.msk [vmem:[#allocation3 + $0x179] sm:$0x1] %vm233, 0.0
        %311 = vst.msk [vmem:[#allocation3 + $0x191] sm:$0x1] %vm233, 0.0
        %312 = vst.msk [vmem:[#allocation3 + $0x1a9] sm:$0x1] %vm233, 0.0
        %v313 = vld [vmem:[%s222] sm:$0xf]
        %v314 = vld [vmem:[%s222 + $0x4] sm:$0xf]
        %v315 = vld [vmem:[%s222 + $0x8] sm:$0xf]
        %v316 = vld [vmem:[%s222 + $0xc] sm:$0xf]
        %v317 = vld [vmem:[%s222 + $0x10] sm:$0xf]
        %v318 = vld [vmem:[%s222 + $0x14] sm:$0xf]
        %v319 = vld [vmem:[%s222 + $0x18] sm:$0xf]
        %v320 = vld [vmem:[%s222 + $0x1c] sm:$0xf]
        %v321 = vld [vmem:[%s222 + $0x20] sm:$0xf]
        %v322 = vld [vmem:[%s222 + $0x24] sm:$0xf]
        %v323 = vld [vmem:[%s222 + $0x28] sm:$0xf]
        %v324 = vld [vmem:[%s222 + $0x2c] sm:$0xf]
        %v325 = vld [vmem:[%s222 + $0x30] sm:$0xf]
        %v326 = vld [vmem:[%s222 + $0x34] sm:$0xf]
        %v327 = vld [vmem:[%s222 + $0x38] sm:$0xf]
        %v328 = vld [vmem:[%s222 + $0x3c] sm:$0xf]
        %v329 = vld [vmem:[%s222 + $0x40] sm:$0xf]
        %v330 = vld [vmem:[%s222 + $0x44] sm:$0xf]
        %v331 = vld [vmem:[%s222 + $0x48] sm:$0xf]
        %v332 = vld [vmem:[%s222 + $0x4c] sm:$0xf]
        %v333 = vld [vmem:[%s222 + $0x50] sm:$0xf]
        %v334 = vld [vmem:[%s222 + $0x54] sm:$0xf]
        %v335 = vld [vmem:[%s222 + $0x58] sm:$0xf]
        %v336 = vld [vmem:[%s222 + $0x5c] sm:$0xf]
        %v337 = vld [vmem:[%s222 + $0x60] sm:$0xf]
        %v338 = vld [vmem:[%s222 + $0x64] sm:$0xf]
        %v339 = vld [vmem:[%s222 + $0x68] sm:$0xf]
        %v340 = vld [vmem:[%s222 + $0x6c] sm:$0xf]
        %v341 = vld [vmem:[%s222 + $0x70] sm:$0xf]
        %v342 = vld [vmem:[%s222 + $0x74] sm:$0xf]
        %v343 = vld [vmem:[%s222 + $0x78] sm:$0xf]
        %v344 = vld [vmem:[%s222 + $0x7c] sm:$0xf]
        %v345 = vunpack.c.l.bf16 %v313
        %v346 = vunpack.c.l.bf16 %v314
        %v347 = vunpack.c.l.bf16 %v315
        %v348 = vunpack.c.l.bf16 %v316
        %v349 = vunpack.c.l.bf16 %v317
        %v350 = vunpack.c.l.bf16 %v318
        %v351 = vunpack.c.l.bf16 %v319
        %v352 = vunpack.c.l.bf16 %v320
        %v353 = vunpack.c.l.bf16 %v321
        %v354 = vunpack.c.l.bf16 %v322
        %v355 = vunpack.c.l.bf16 %v323
        %v356 = vunpack.c.l.bf16 %v324
        %v357 = vunpack.c.l.bf16 %v325
        %v358 = vunpack.c.l.bf16 %v326
        %v359 = vunpack.c.l.bf16 %v327
        %v360 = vunpack.c.l.bf16 %v328
        %v361 = vunpack.c.l.bf16 %v329
        %v362 = vunpack.c.l.bf16 %v330
        %v363 = vunpack.c.l.bf16 %v331
        %v364 = vunpack.c.l.bf16 %v332
        %v365 = vunpack.c.l.bf16 %v333
        %v366 = vunpack.c.l.bf16 %v334
        %v367 = vunpack.c.l.bf16 %v335
        %v368 = vunpack.c.l.bf16 %v336
        %v369 = vunpack.c.l.bf16 %v337
        %v370 = vunpack.c.l.bf16 %v338
        %v371 = vunpack.c.l.bf16 %v339
        %v372 = vunpack.c.l.bf16 %v340
        %v373 = vunpack.c.l.bf16 %v341
        %v374 = vunpack.c.l.bf16 %v342
        %v375 = vunpack.c.l.bf16 %v343
        %v376 = vunpack.c.l.bf16 %v344
        %s377 = scalar_lea.vmem [#allocation2], 24
        %378 = vst.msk [vmem:[%s377 + $0x1] sm:$0xff] %vm224, %v345
        %379 = vst.msk [vmem:[%s377 + $0x9] sm:$0xff] %vm224, %v346
        %380 = vst.msk [vmem:[%s377 + $0x19] sm:$0xff] %vm224, %v347
        %381 = vst.msk [vmem:[%s377 + $0x21] sm:$0xff] %vm224, %v348
        %382 = vst.msk [vmem:[%s377 + $0x31] sm:$0xff] %vm224, %v349
        %383 = vst.msk [vmem:[%s377 + $0x39] sm:$0xff] %vm224, %v350
        %384 = vst.msk [vmem:[%s377 + $0x49] sm:$0xff] %vm224, %v351
        %385 = vst.msk [vmem:[%s377 + $0x51] sm:$0xff] %vm224, %v352
        %386 = vst.msk [vmem:[%s377 + $0x61] sm:$0xff] %vm224, %v353
        %387 = vst.msk [vmem:[%s377 + $0x69] sm:$0xff] %vm224, %v354
        %388 = vst.msk [vmem:[%s377 + $0x79] sm:$0xff] %vm224, %v355
        %389 = vst.msk [vmem:[%s377 + $0x81] sm:$0xff] %vm224, %v356
        %390 = vst.msk [vmem:[%s377 + $0x91] sm:$0xff] %vm224, %v357
        %391 = vst.msk [vmem:[%s377 + $0x99] sm:$0xff] %vm224, %v358
        %392 = vst.msk [vmem:[%s377 + $0xa9] sm:$0xff] %vm224, %v359
        %393 = vst.msk [vmem:[%s377 + $0xb1] sm:$0xff] %vm224, %v360
        %394 = vst.msk [vmem:[%s377 + $0xc1] sm:$0xff] %vm224, %v361
        %395 = vst.msk [vmem:[%s377 + $0xc9] sm:$0xff] %vm224, %v362
        %396 = vst.msk [vmem:[%s377 + $0xd9] sm:$0xff] %vm224, %v363
        %397 = vst.msk [vmem:[%s377 + $0xe1] sm:$0xff] %vm224, %v364
        %398 = vst.msk [vmem:[%s377 + $0xf1] sm:$0xff] %vm224, %v365
        %399 = vst.msk [vmem:[%s377 + $0xf9] sm:$0xff] %vm224, %v366
        %400 = vst.msk [vmem:[%s377 + $0x109] sm:$0xff] %vm224, %v367
        %401 = vst.msk [vmem:[%s377 + $0x111] sm:$0xff] %vm224, %v368
        %402 = vst.msk [vmem:[%s377 + $0x121] sm:$0xff] %vm224, %v369
        %403 = vst.msk [vmem:[%s377 + $0x129] sm:$0xff] %vm224, %v370
        %404 = vst.msk [vmem:[%s377 + $0x139] sm:$0xff] %vm224, %v371
        %405 = vst.msk [vmem:[%s377 + $0x141] sm:$0xff] %vm224, %v372
        %406 = vst.msk [vmem:[%s377 + $0x151] sm:$0xff] %vm224, %v373
        %407 = vst.msk [vmem:[%s377 + $0x159] sm:$0xff] %vm224, %v374
        %408 = vst.msk [vmem:[%s377 + $0x169] sm:$0xff] %vm224, %v375
        %409 = vst.msk [vmem:[%s377 + $0x171] sm:$0xff] %vm224, %v376
        %v410 = vld [vmem:[#allocation2] sm:$0xff]
        %v411 = vld [vmem:[#allocation2 + $0x8] sm:$0xff]
        %v412 = vld [vmem:[#allocation2 + $0x18] sm:$0xff]
        %v413 = vld [vmem:[#allocation2 + $0x20] sm:$0xff]
        %v414 = vld [vmem:[#allocation2 + $0x30] sm:$0xff]
        %v415 = vld [vmem:[#allocation2 + $0x38] sm:$0xff]
        %v416 = vld [vmem:[#allocation2 + $0x48] sm:$0xff]
        %v417 = vld [vmem:[#allocation2 + $0x50] sm:$0xff]
        %v418 = vld [vmem:[#allocation2 + $0x60] sm:$0xff]
        %v419 = vld [vmem:[#allocation2 + $0x68] sm:$0xff]
        %v420 = vld [vmem:[#allocation2 + $0x78] sm:$0xff]
        %v421 = vld [vmem:[#allocation2 + $0x80] sm:$0xff]
        %v422 = vld [vmem:[#allocation2 + $0x90] sm:$0xff]
        %v423 = vld [vmem:[#allocation2 + $0x98] sm:$0xff]
        %v424 = vld [vmem:[#allocation2 + $0xa8] sm:$0xff]
        %v425 = vld [vmem:[#allocation2 + $0xb0] sm:$0xff]
        %v426 = vld [vmem:[#allocation2 + $0xc0] sm:$0xff]
        %v427 = vld [vmem:[#allocation2 + $0xc8] sm:$0xff]
        %v428 = vld [vmem:[#allocation2 + $0xd8] sm:$0xff]
        %v429 = vld [vmem:[#allocation2 + $0xe0] sm:$0xff]
        %v430 = vld [vmem:[#allocation2 + $0xf0] sm:$0xff]
        %v431 = vld [vmem:[#allocation2 + $0xf8] sm:$0xff]
        %v432 = vld [vmem:[#allocation2 + $0x108] sm:$0xff]
        %v433 = vld [vmem:[#allocation2 + $0x110] sm:$0xff]
        %v434 = vld [vmem:[#allocation2 + $0x120] sm:$0xff]
        %v435 = vld [vmem:[#allocation2 + $0x128] sm:$0xff]
        %v436 = vld [vmem:[#allocation2 + $0x138] sm:$0xff]
        %v437 = vld [vmem:[#allocation2 + $0x140] sm:$0xff]
        %v438 = vld [vmem:[#allocation2 + $0x150] sm:$0xff]
        %v439 = vld [vmem:[#allocation2 + $0x158] sm:$0xff]
        %v440 = vld [vmem:[#allocation2 + $0x168] sm:$0xff]
        %v441 = vld [vmem:[#allocation2 + $0x170] sm:$0xff]
        %v442 = vld [vmem:[#allocation2 + $0x1] sm:$0xff]
        %v443 = vld [vmem:[#allocation2 + $0x9] sm:$0xff]
        %v444 = vld [vmem:[#allocation2 + $0x19] sm:$0xff]
        %v445 = vld [vmem:[#allocation2 + $0x21] sm:$0xff]
        %v446 = vld [vmem:[#allocation2 + $0x31] sm:$0xff]
        %v447 = vld [vmem:[#allocation2 + $0x39] sm:$0xff]
        %v448 = vld [vmem:[#allocation2 + $0x49] sm:$0xff]
        %v449 = vld [vmem:[#allocation2 + $0x51] sm:$0xff]
        %v450 = vld [vmem:[#allocation2 + $0x61] sm:$0xff]
        %v451 = vld [vmem:[#allocation2 + $0x69] sm:$0xff]
        %v452 = vld [vmem:[#allocation2 + $0x79] sm:$0xff]
        %v453 = vld [vmem:[#allocation2 + $0x81] sm:$0xff]
        %v454 = vld [vmem:[#allocation2 + $0x91] sm:$0xff]
        %v455 = vld [vmem:[#allocation2 + $0x99] sm:$0xff]
        %v456 = vld [vmem:[#allocation2 + $0xa9] sm:$0xff]
        %v457 = vld [vmem:[#allocation2 + $0xb1] sm:$0xff]
        %v458 = vld [vmem:[#allocation2 + $0xc1] sm:$0xff]
        %v459 = vld [vmem:[#allocation2 + $0xc9] sm:$0xff]
        %v460 = vld [vmem:[#allocation2 + $0xd9] sm:$0xff]
        %v461 = vld [vmem:[#allocation2 + $0xe1] sm:$0xff]
        %v462 = vld [vmem:[#allocation2 + $0xf1] sm:$0xff]
        %v463 = vld [vmem:[#allocation2 + $0xf9] sm:$0xff]
        %v464 = vld [vmem:[#allocation2 + $0x109] sm:$0xff]
        %v465 = vld [vmem:[#allocation2 + $0x111] sm:$0xff]
        %v466 = vld [vmem:[#allocation2 + $0x121] sm:$0xff]
        %v467 = vld [vmem:[#allocation2 + $0x129] sm:$0xff]
        %v468 = vld [vmem:[#allocation2 + $0x139] sm:$0xff]
        %v469 = vld [vmem:[#allocation2 + $0x141] sm:$0xff]
        %v470 = vld [vmem:[#allocation2 + $0x151] sm:$0xff]
        %v471 = vld [vmem:[#allocation2 + $0x159] sm:$0xff]
        %v472 = vld [vmem:[#allocation2 + $0x169] sm:$0xff]
        %v473 = vld [vmem:[#allocation2 + $0x171] sm:$0xff]
        %v474 = vld [vmem:[#allocation2 + $0x2] sm:$0xff]
        %v475 = vld [vmem:[#allocation2 + $0xa] sm:$0xff]
        %v476 = vld [vmem:[#allocation2 + $0x1a] sm:$0xff]
        %v477 = vld [vmem:[#allocation2 + $0x22] sm:$0xff]
        %v478 = vld [vmem:[#allocation2 + $0x32] sm:$0xff]
        %v479 = vld [vmem:[#allocation2 + $0x3a] sm:$0xff]
        %v480 = vld [vmem:[#allocation2 + $0x4a] sm:$0xff]
        %v481 = vld [vmem:[#allocation2 + $0x52] sm:$0xff]
        %v482 = vld [vmem:[#allocation2 + $0x62] sm:$0xff]
        %v483 = vld [vmem:[#allocation2 + $0x6a] sm:$0xff]
        %v484 = vld [vmem:[#allocation2 + $0x7a] sm:$0xff]
        %v485 = vld [vmem:[#allocation2 + $0x82] sm:$0xff]
        %v486 = vld [vmem:[#allocation2 + $0x92] sm:$0xff]
        %v487 = vld [vmem:[#allocation2 + $0x9a] sm:$0xff]
        %v488 = vld [vmem:[#allocation2 + $0xaa] sm:$0xff]
        %v489 = vld [vmem:[#allocation2 + $0xb2] sm:$0xff]
        %v490 = vld [vmem:[#allocation2 + $0xc2] sm:$0xff]
        %v491 = vld [vmem:[#allocation2 + $0xca] sm:$0xff]
        %v492 = vld [vmem:[#allocation2 + $0xda] sm:$0xff]
        %v493 = vld [vmem:[#allocation2 + $0xe2] sm:$0xff]
        %v494 = vld [vmem:[#allocation2 + $0xf2] sm:$0xff]
        %v495 = vld [vmem:[#allocation2 + $0xfa] sm:$0xff]
        %v496 = vld [vmem:[#allocation2 + $0x10a] sm:$0xff]
        %v497 = vld [vmem:[#allocation2 + $0x112] sm:$0xff]
        %v498 = vld [vmem:[#allocation2 + $0x122] sm:$0xff]
        %v499 = vld [vmem:[#allocation2 + $0x12a] sm:$0xff]
        %v500 = vld [vmem:[#allocation2 + $0x13a] sm:$0xff]
        %v501 = vld [vmem:[#allocation2 + $0x142] sm:$0xff]
        %v502 = vld [vmem:[#allocation2 + $0x152] sm:$0xff]
        %v503 = vld [vmem:[#allocation2 + $0x15a] sm:$0xff]
        %v504 = vld [vmem:[#allocation2 + $0x16a] sm:$0xff]
        %v505 = vld [vmem:[#allocation2 + $0x172] sm:$0xff]
        %v506 = vld [vmem:[%s377] sm:$0xff]
        %v507 = vld [vmem:[%s377 + $0x8] sm:$0xff]
        %v508 = vld [vmem:[%s377 + $0x18] sm:$0xff]
        %v509 = vld [vmem:[%s377 + $0x20] sm:$0xff]
        %v510 = vld [vmem:[%s377 + $0x30] sm:$0xff]
        %v511 = vld [vmem:[%s377 + $0x38] sm:$0xff]
        %v512 = vld [vmem:[%s377 + $0x48] sm:$0xff]
        %v513 = vld [vmem:[%s377 + $0x50] sm:$0xff]
        %v514 = vld [vmem:[%s377 + $0x60] sm:$0xff]
        %v515 = vld [vmem:[%s377 + $0x68] sm:$0xff]
        %v516 = vld [vmem:[%s377 + $0x78] sm:$0xff]
        %v517 = vld [vmem:[%s377 + $0x80] sm:$0xff]
        %v518 = vld [vmem:[%s377 + $0x90] sm:$0xff]
        %v519 = vld [vmem:[%s377 + $0x98] sm:$0xff]
        %v520 = vld [vmem:[%s377 + $0xa8] sm:$0xff]
        %v521 = vld [vmem:[%s377 + $0xb0] sm:$0xff]
        %v522 = vld [vmem:[%s377 + $0xc0] sm:$0xff]
        %v523 = vld [vmem:[%s377 + $0xc8] sm:$0xff]
        %v524 = vld [vmem:[%s377 + $0xd8] sm:$0xff]
        %v525 = vld [vmem:[%s377 + $0xe0] sm:$0xff]
        %v526 = vld [vmem:[%s377 + $0xf0] sm:$0xff]
        %v527 = vld [vmem:[%s377 + $0xf8] sm:$0xff]
        %v528 = vld [vmem:[%s377 + $0x108] sm:$0xff]
        %v529 = vld [vmem:[%s377 + $0x110] sm:$0xff]
        %v530 = vld [vmem:[%s377 + $0x120] sm:$0xff]
        %v531 = vld [vmem:[%s377 + $0x128] sm:$0xff]
        %v532 = vld [vmem:[%s377 + $0x138] sm:$0xff]
        %v533 = vld [vmem:[%s377 + $0x140] sm:$0xff]
        %v534 = vld [vmem:[%s377 + $0x150] sm:$0xff]
        %v535 = vld [vmem:[%s377 + $0x158] sm:$0xff]
        %v536 = vld [vmem:[%s377 + $0x168] sm:$0xff]
        %v537 = vld [vmem:[%s377 + $0x170] sm:$0xff]
        %v538 = vld [vmem:[%s377 + $0x1] sm:$0xff]
        %v539 = vld [vmem:[%s377 + $0x9] sm:$0xff]
        %v540 = vld [vmem:[%s377 + $0x19] sm:$0xff]
        %v541 = vld [vmem:[%s377 + $0x21] sm:$0xff]
        %v542 = vld [vmem:[%s377 + $0x31] sm:$0xff]
        %v543 = vld [vmem:[%s377 + $0x39] sm:$0xff]
        %v544 = vld [vmem:[%s377 + $0x49] sm:$0xff]
        %v545 = vld [vmem:[%s377 + $0x51] sm:$0xff]
        %v546 = vld [vmem:[%s377 + $0x61] sm:$0xff]
        %v547 = vld [vmem:[%s377 + $0x69] sm:$0xff]
        %v548 = vld [vmem:[%s377 + $0x79] sm:$0xff]
        %v549 = vld [vmem:[%s377 + $0x81] sm:$0xff]
        %v550 = vld [vmem:[%s377 + $0x91] sm:$0xff]
        %v551 = vld [vmem:[%s377 + $0x99] sm:$0xff]
        %v552 = vld [vmem:[%s377 + $0xa9] sm:$0xff]
        %v553 = vld [vmem:[%s377 + $0xb1] sm:$0xff]
        %v554 = vld [vmem:[%s377 + $0xc1] sm:$0xff]
        %v555 = vld [vmem:[%s377 + $0xc9] sm:$0xff]
        %v556 = vld [vmem:[%s377 + $0xd9] sm:$0xff]
        %v557 = vld [vmem:[%s377 + $0xe1] sm:$0xff]
        %v558 = vld [vmem:[%s377 + $0xf1] sm:$0xff]
        %v559 = vld [vmem:[%s377 + $0xf9] sm:$0xff]
        %v560 = vld [vmem:[%s377 + $0x109] sm:$0xff]
        %v561 = vld [vmem:[%s377 + $0x111] sm:$0xff]
        %v562 = vld [vmem:[%s377 + $0x121] sm:$0xff]
        %v563 = vld [vmem:[%s377 + $0x129] sm:$0xff]
        %v564 = vld [vmem:[%s377 + $0x139] sm:$0xff]
        %v565 = vld [vmem:[%s377 + $0x141] sm:$0xff]
        %v566 = vld [vmem:[%s377 + $0x151] sm:$0xff]
        %v567 = vld [vmem:[%s377 + $0x159] sm:$0xff]
        %v568 = vld [vmem:[%s377 + $0x169] sm:$0xff]
        %v569 = vld [vmem:[%s377 + $0x171] sm:$0xff]
        %v570 = vld [vmem:[%s377 + $0x2] sm:$0xff]
        %v571 = vld [vmem:[%s377 + $0xa] sm:$0xff]
        %v572 = vld [vmem:[%s377 + $0x1a] sm:$0xff]
        %v573 = vld [vmem:[%s377 + $0x22] sm:$0xff]
        %v574 = vld [vmem:[%s377 + $0x32] sm:$0xff]
        %v575 = vld [vmem:[%s377 + $0x3a] sm:$0xff]
        %v576 = vld [vmem:[%s377 + $0x4a] sm:$0xff]
        %v577 = vld [vmem:[%s377 + $0x52] sm:$0xff]
        %v578 = vld [vmem:[%s377 + $0x62] sm:$0xff]
        %v579 = vld [vmem:[%s377 + $0x6a] sm:$0xff]
        %v580 = vld [vmem:[%s377 + $0x7a] sm:$0xff]
        %v581 = vld [vmem:[%s377 + $0x82] sm:$0xff]
        %v582 = vld [vmem:[%s377 + $0x92] sm:$0xff]
        %v583 = vld [vmem:[%s377 + $0x9a] sm:$0xff]
        %v584 = vld [vmem:[%s377 + $0xaa] sm:$0xff]
        %v585 = vld [vmem:[%s377 + $0xb2] sm:$0xff]
        %v586 = vld [vmem:[%s377 + $0xc2] sm:$0xff]
        %v587 = vld [vmem:[%s377 + $0xca] sm:$0xff]
        %v588 = vld [vmem:[%s377 + $0xda] sm:$0xff]
        %v589 = vld [vmem:[%s377 + $0xe2] sm:$0xff]
        %v590 = vld [vmem:[%s377 + $0xf2] sm:$0xff]
        %v591 = vld [vmem:[%s377 + $0xfa] sm:$0xff]
        %v592 = vld [vmem:[%s377 + $0x10a] sm:$0xff]
        %v593 = vld [vmem:[%s377 + $0x112] sm:$0xff]
        %v594 = vld [vmem:[%s377 + $0x122] sm:$0xff]
        %v595 = vld [vmem:[%s377 + $0x12a] sm:$0xff]
        %v596 = vld [vmem:[%s377 + $0x13a] sm:$0xff]
        %v597 = vld [vmem:[%s377 + $0x142] sm:$0xff]
        %v598 = vld [vmem:[%s377 + $0x152] sm:$0xff]
        %v599 = vld [vmem:[%s377 + $0x15a] sm:$0xff]
        %v600 = vld [vmem:[%s377 + $0x16a] sm:$0xff]
        %v601 = vld [vmem:[%s377 + $0x172] sm:$0xff]
        %s602 = scalar_lea.vmem [#allocation2], 48
        %v603 = vld [vmem:[%s602] sm:$0xff]
        %v604 = vld [vmem:[%s602 + $0x8] sm:$0xff]
        %v605 = vld [vmem:[%s602 + $0x18] sm:$0xff]
        %v606 = vld [vmem:[%s602 + $0x20] sm:$0xff]
        %v607 = vld [vmem:[%s602 + $0x30] sm:$0xff]
        %v608 = vld [vmem:[%s602 + $0x38] sm:$0xff]
        %v609 = vld [vmem:[%s602 + $0x48] sm:$0xff]
        %v610 = vld [vmem:[%s602 + $0x50] sm:$0xff]
        %v611 = vld [vmem:[%s602 + $0x60] sm:$0xff]
        %v612 = vld [vmem:[%s602 + $0x68] sm:$0xff]
        %v613 = vld [vmem:[%s602 + $0x78] sm:$0xff]
        %v614 = vld [vmem:[%s602 + $0x80] sm:$0xff]
        %v615 = vld [vmem:[%s602 + $0x90] sm:$0xff]
        %v616 = vld [vmem:[%s602 + $0x98] sm:$0xff]
        %v617 = vld [vmem:[%s602 + $0xa8] sm:$0xff]
        %v618 = vld [vmem:[%s602 + $0xb0] sm:$0xff]
        %v619 = vld [vmem:[%s602 + $0xc0] sm:$0xff]
        %v620 = vld [vmem:[%s602 + $0xc8] sm:$0xff]
        %v621 = vld [vmem:[%s602 + $0xd8] sm:$0xff]
        %v622 = vld [vmem:[%s602 + $0xe0] sm:$0xff]
        %v623 = vld [vmem:[%s602 + $0xf0] sm:$0xff]
        %v624 = vld [vmem:[%s602 + $0xf8] sm:$0xff]
        %v625 = vld [vmem:[%s602 + $0x108] sm:$0xff]
        %v626 = vld [vmem:[%s602 + $0x110] sm:$0xff]
        %v627 = vld [vmem:[%s602 + $0x120] sm:$0xff]
        %v628 = vld [vmem:[%s602 + $0x128] sm:$0xff]
        %v629 = vld [vmem:[%s602 + $0x138] sm:$0xff]
        %v630 = vld [vmem:[%s602 + $0x140] sm:$0xff]
        %v631 = vld [vmem:[%s602 + $0x150] sm:$0xff]
        %v632 = vld [vmem:[%s602 + $0x158] sm:$0xff]
        %v633 = vld [vmem:[%s602 + $0x168] sm:$0xff]
        %v634 = vld [vmem:[%s602 + $0x170] sm:$0xff]
        %v635 = vld [vmem:[%s602 + $0x1] sm:$0xff]
        %v636 = vld [vmem:[%s602 + $0x9] sm:$0xff]
        %v637 = vld [vmem:[%s602 + $0x19] sm:$0xff]
        %v638 = vld [vmem:[%s602 + $0x21] sm:$0xff]
        %v639 = vld [vmem:[%s602 + $0x31] sm:$0xff]
        %v640 = vld [vmem:[%s602 + $0x39] sm:$0xff]
        %v641 = vld [vmem:[%s602 + $0x49] sm:$0xff]
        %v642 = vld [vmem:[%s602 + $0x51] sm:$0xff]
        %v643 = vld [vmem:[%s602 + $0x61] sm:$0xff]
        %v644 = vld [vmem:[%s602 + $0x69] sm:$0xff]
        %v645 = vld [vmem:[%s602 + $0x79] sm:$0xff]
        %v646 = vld [vmem:[%s602 + $0x81] sm:$0xff]
        %v647 = vld [vmem:[%s602 + $0x91] sm:$0xff]
        %v648 = vld [vmem:[%s602 + $0x99] sm:$0xff]
        %v649 = vld [vmem:[%s602 + $0xa9] sm:$0xff]
        %v650 = vld [vmem:[%s602 + $0xb1] sm:$0xff]
        %v651 = vld [vmem:[%s602 + $0xc1] sm:$0xff]
        %v652 = vld [vmem:[%s602 + $0xc9] sm:$0xff]
        %v653 = vld [vmem:[%s602 + $0xd9] sm:$0xff]
        %v654 = vld [vmem:[%s602 + $0xe1] sm:$0xff]
        %v655 = vld [vmem:[%s602 + $0xf1] sm:$0xff]
        %v656 = vld [vmem:[%s602 + $0xf9] sm:$0xff]
        %v657 = vld [vmem:[%s602 + $0x109] sm:$0xff]
        %v658 = vld [vmem:[%s602 + $0x111] sm:$0xff]
        %v659 = vld [vmem:[%s602 + $0x121] sm:$0xff]
        %v660 = vld [vmem:[%s602 + $0x129] sm:$0xff]
        %v661 = vld [vmem:[%s602 + $0x139] sm:$0xff]
        %v662 = vld [vmem:[%s602 + $0x141] sm:$0xff]
        %v663 = vld [vmem:[%s602 + $0x151] sm:$0xff]
        %v664 = vld [vmem:[%s602 + $0x159] sm:$0xff]
        %v665 = vld [vmem:[%s602 + $0x169] sm:$0xff]
        %v666 = vld [vmem:[%s602 + $0x171] sm:$0xff]
        %v667 = vld [vmem:[%s602 + $0x2] sm:$0xff]
        %v668 = vld [vmem:[%s602 + $0xa] sm:$0xff]
        %v669 = vld [vmem:[%s602 + $0x1a] sm:$0xff]
        %v670 = vld [vmem:[%s602 + $0x22] sm:$0xff]
        %v671 = vld [vmem:[%s602 + $0x32] sm:$0xff]
        %v672 = vld [vmem:[%s602 + $0x3a] sm:$0xff]
        %v673 = vld [vmem:[%s602 + $0x4a] sm:$0xff]
        %v674 = vld [vmem:[%s602 + $0x52] sm:$0xff]
        %v675 = vld [vmem:[%s602 + $0x62] sm:$0xff]
        %v676 = vld [vmem:[%s602 + $0x6a] sm:$0xff]
        %v677 = vld [vmem:[%s602 + $0x7a] sm:$0xff]
        %v678 = vld [vmem:[%s602 + $0x82] sm:$0xff]
        %v679 = vld [vmem:[%s602 + $0x92] sm:$0xff]
        %v680 = vld [vmem:[%s602 + $0x9a] sm:$0xff]
        %v681 = vld [vmem:[%s602 + $0xaa] sm:$0xff]
        %v682 = vld [vmem:[%s602 + $0xb2] sm:$0xff]
        %v683 = vld [vmem:[%s602 + $0xc2] sm:$0xff]
        %v684 = vld [vmem:[%s602 + $0xca] sm:$0xff]
        %v685 = vld [vmem:[%s602 + $0xda] sm:$0xff]
        %v686 = vld [vmem:[%s602 + $0xe2] sm:$0xff]
        %v687 = vld [vmem:[%s602 + $0xf2] sm:$0xff]
        %v688 = vld [vmem:[%s602 + $0xfa] sm:$0xff]
        %v689 = vld [vmem:[%s602 + $0x10a] sm:$0xff]
        %v690 = vld [vmem:[%s602 + $0x112] sm:$0xff]
        %v691 = vld [vmem:[%s602 + $0x122] sm:$0xff]
        %v692 = vld [vmem:[%s602 + $0x12a] sm:$0xff]
        %v693 = vld [vmem:[%s602 + $0x13a] sm:$0xff]
        %v694 = vld [vmem:[%s602 + $0x142] sm:$0xff]
        %v695 = vld [vmem:[%s602 + $0x152] sm:$0xff]
        %v696 = vld [vmem:[%s602 + $0x15a] sm:$0xff]
        %v697 = vld [vmem:[%s602 + $0x16a] sm:$0xff]
        %v698 = vld [vmem:[%s602 + $0x172] sm:$0xff]
        %731 = vrot.lane.b32.xlu0 %v442, 4
        %v732 = vpop.permute.xlu0 %731
        %733 = vrot.lane.b32.xlu0 %v443, 4
        %v734 = vpop.permute.xlu0 %733
        %735 = vrot.lane.b32.xlu0 %v444, 4
        %v736 = vpop.permute.xlu0 %735
        %737 = vrot.lane.b32.xlu0 %v445, 4
        %v738 = vpop.permute.xlu0 %737
        %739 = vrot.lane.b32.xlu0 %v446, 4
        %v740 = vpop.permute.xlu0 %739
        %741 = vrot.lane.b32.xlu0 %v447, 4
        %v742 = vpop.permute.xlu0 %741
        %743 = vrot.lane.b32.xlu0 %v448, 4
        %v744 = vpop.permute.xlu0 %743
        %745 = vrot.lane.b32.xlu0 %v449, 4
        %v746 = vpop.permute.xlu0 %745
        %747 = vrot.lane.b32.xlu0 %v450, 4
        %v748 = vpop.permute.xlu0 %747
        %749 = vrot.lane.b32.xlu0 %v451, 4
        %v750 = vpop.permute.xlu0 %749
        %751 = vrot.lane.b32.xlu0 %v452, 4
        %v752 = vpop.permute.xlu0 %751
        %753 = vrot.lane.b32.xlu0 %v453, 4
        %v754 = vpop.permute.xlu0 %753
        %755 = vrot.lane.b32.xlu0 %v454, 4
        %v756 = vpop.permute.xlu0 %755
        %757 = vrot.lane.b32.xlu0 %v455, 4
        %v758 = vpop.permute.xlu0 %757
        %759 = vrot.lane.b32.xlu0 %v456, 4
        %v760 = vpop.permute.xlu0 %759
        %761 = vrot.lane.b32.xlu0 %v457, 4
        %v762 = vpop.permute.xlu0 %761
        %763 = vrot.lane.b32.xlu0 %v458, 4
        %v764 = vpop.permute.xlu0 %763
        %765 = vrot.lane.b32.xlu0 %v459, 4
        %v766 = vpop.permute.xlu0 %765
        %767 = vrot.lane.b32.xlu0 %v460, 4
        %v768 = vpop.permute.xlu0 %767
        %769 = vrot.lane.b32.xlu0 %v461, 4
        %v770 = vpop.permute.xlu0 %769
        %771 = vrot.lane.b32.xlu0 %v462, 4
        %v772 = vpop.permute.xlu0 %771
        %773 = vrot.lane.b32.xlu0 %v463, 4
        %v774 = vpop.permute.xlu0 %773
        %775 = vrot.lane.b32.xlu0 %v464, 4
        %v776 = vpop.permute.xlu0 %775
        %777 = vrot.lane.b32.xlu0 %v465, 4
        %v778 = vpop.permute.xlu0 %777
        %779 = vrot.lane.b32.xlu0 %v466, 4
        %v780 = vpop.permute.xlu0 %779
        %781 = vrot.lane.b32.xlu0 %v467, 4
        %v782 = vpop.permute.xlu0 %781
        %783 = vrot.lane.b32.xlu0 %v468, 4
        %v784 = vpop.permute.xlu0 %783
        %785 = vrot.lane.b32.xlu0 %v469, 4
        %v786 = vpop.permute.xlu0 %785
        %787 = vrot.lane.b32.xlu0 %v470, 4
        %v788 = vpop.permute.xlu0 %787
        %789 = vrot.lane.b32.xlu0 %v471, 4
        %v790 = vpop.permute.xlu0 %789
        %791 = vrot.lane.b32.xlu0 %v472, 4
        %v792 = vpop.permute.xlu0 %791
        %793 = vrot.lane.b32.xlu0 %v473, 4
        %v794 = vpop.permute.xlu0 %793
        %859 = vrot.lane.b32.xlu0 %v474, 8
        %v860 = vpop.permute.xlu0 %859
        %861 = vrot.lane.b32.xlu0 %v475, 8
        %v862 = vpop.permute.xlu0 %861
        %863 = vrot.lane.b32.xlu0 %v476, 8
        %v864 = vpop.permute.xlu0 %863
        %865 = vrot.lane.b32.xlu0 %v477, 8
        %v866 = vpop.permute.xlu0 %865
        %867 = vrot.lane.b32.xlu0 %v478, 8
        %v868 = vpop.permute.xlu0 %867
        %869 = vrot.lane.b32.xlu0 %v479, 8
        %v870 = vpop.permute.xlu0 %869
        %871 = vrot.lane.b32.xlu0 %v480, 8
        %v872 = vpop.permute.xlu0 %871
        %873 = vrot.lane.b32.xlu0 %v481, 8
        %v874 = vpop.permute.xlu0 %873
        %875 = vrot.lane.b32.xlu0 %v482, 8
        %v876 = vpop.permute.xlu0 %875
        %877 = vrot.lane.b32.xlu0 %v483, 8
        %v878 = vpop.permute.xlu0 %877
        %879 = vrot.lane.b32.xlu0 %v484, 8
        %v880 = vpop.permute.xlu0 %879
        %881 = vrot.lane.b32.xlu0 %v485, 8
        %v882 = vpop.permute.xlu0 %881
        %883 = vrot.lane.b32.xlu0 %v486, 8
        %v884 = vpop.permute.xlu0 %883
        %885 = vrot.lane.b32.xlu0 %v487, 8
        %v886 = vpop.permute.xlu0 %885
        %887 = vrot.lane.b32.xlu0 %v488, 8
        %v888 = vpop.permute.xlu0 %887
        %889 = vrot.lane.b32.xlu0 %v489, 8
        %v890 = vpop.permute.xlu0 %889
        %891 = vrot.lane.b32.xlu0 %v490, 8
        %v892 = vpop.permute.xlu0 %891
        %893 = vrot.lane.b32.xlu0 %v491, 8
        %v894 = vpop.permute.xlu0 %893
        %895 = vrot.lane.b32.xlu0 %v492, 8
        %v896 = vpop.permute.xlu0 %895
        %897 = vrot.lane.b32.xlu0 %v493, 8
        %v898 = vpop.permute.xlu0 %897
        %899 = vrot.lane.b32.xlu0 %v494, 8
        %v900 = vpop.permute.xlu0 %899
        %901 = vrot.lane.b32.xlu0 %v495, 8
        %v902 = vpop.permute.xlu0 %901
        %903 = vrot.lane.b32.xlu0 %v496, 8
        %v904 = vpop.permute.xlu0 %903
        %905 = vrot.lane.b32.xlu0 %v497, 8
        %v906 = vpop.permute.xlu0 %905
        %907 = vrot.lane.b32.xlu0 %v498, 8
        %v908 = vpop.permute.xlu0 %907
        %909 = vrot.lane.b32.xlu0 %v499, 8
        %v910 = vpop.permute.xlu0 %909
        %911 = vrot.lane.b32.xlu0 %v500, 8
        %v912 = vpop.permute.xlu0 %911
        %913 = vrot.lane.b32.xlu0 %v501, 8
        %v914 = vpop.permute.xlu0 %913
        %915 = vrot.lane.b32.xlu0 %v502, 8
        %v916 = vpop.permute.xlu0 %915
        %917 = vrot.lane.b32.xlu0 %v503, 8
        %v918 = vpop.permute.xlu0 %917
        %919 = vrot.lane.b32.xlu0 %v504, 8
        %v920 = vpop.permute.xlu0 %919
        %921 = vrot.lane.b32.xlu0 %v505, 8
        %v922 = vpop.permute.xlu0 %921
        %987 = vrot.lane.b32.xlu0 %v506, 12
        %v988 = vpop.permute.xlu0 %987
        %989 = vrot.lane.b32.xlu0 %v507, 12
        %v990 = vpop.permute.xlu0 %989
        %991 = vrot.lane.b32.xlu0 %v508, 12
        %v992 = vpop.permute.xlu0 %991
        %993 = vrot.lane.b32.xlu0 %v509, 12
        %v994 = vpop.permute.xlu0 %993
        %995 = vrot.lane.b32.xlu0 %v510, 12
        %v996 = vpop.permute.xlu0 %995
        %997 = vrot.lane.b32.xlu0 %v511, 12
        %v998 = vpop.permute.xlu0 %997
        %999 = vrot.lane.b32.xlu0 %v512, 12
        %v1000 = vpop.permute.xlu0 %999
        %1001 = vrot.lane.b32.xlu0 %v513, 12
        %v1002 = vpop.permute.xlu0 %1001
        %1003 = vrot.lane.b32.xlu0 %v514, 12
        %v1004 = vpop.permute.xlu0 %1003
        %1005 = vrot.lane.b32.xlu0 %v515, 12
        %v1006 = vpop.permute.xlu0 %1005
        %1007 = vrot.lane.b32.xlu0 %v516, 12
        %v1008 = vpop.permute.xlu0 %1007
        %1009 = vrot.lane.b32.xlu0 %v517, 12
        %v1010 = vpop.permute.xlu0 %1009
        %1011 = vrot.lane.b32.xlu0 %v518, 12
        %v1012 = vpop.permute.xlu0 %1011
        %1013 = vrot.lane.b32.xlu0 %v519, 12
        %v1014 = vpop.permute.xlu0 %1013
        %1015 = vrot.lane.b32.xlu0 %v520, 12
        %v1016 = vpop.permute.xlu0 %1015
        %1017 = vrot.lane.b32.xlu0 %v521, 12
        %v1018 = vpop.permute.xlu0 %1017
        %1019 = vrot.lane.b32.xlu0 %v522, 12
        %v1020 = vpop.permute.xlu0 %1019
        %1021 = vrot.lane.b32.xlu0 %v523, 12
        %v1022 = vpop.permute.xlu0 %1021
        %1023 = vrot.lane.b32.xlu0 %v524, 12
        %v1024 = vpop.permute.xlu0 %1023
        %1025 = vrot.lane.b32.xlu0 %v525, 12
        %v1026 = vpop.permute.xlu0 %1025
        %1027 = vrot.lane.b32.xlu0 %v526, 12
        %v1028 = vpop.permute.xlu0 %1027
        %1029 = vrot.lane.b32.xlu0 %v527, 12
        %v1030 = vpop.permute.xlu0 %1029
        %1031 = vrot.lane.b32.xlu0 %v528, 12
        %v1032 = vpop.permute.xlu0 %1031
        %1033 = vrot.lane.b32.xlu0 %v529, 12
        %v1034 = vpop.permute.xlu0 %1033
        %1035 = vrot.lane.b32.xlu0 %v530, 12
        %v1036 = vpop.permute.xlu0 %1035
        %1037 = vrot.lane.b32.xlu0 %v531, 12
        %v1038 = vpop.permute.xlu0 %1037
        %1039 = vrot.lane.b32.xlu0 %v532, 12
        %v1040 = vpop.permute.xlu0 %1039
        %1041 = vrot.lane.b32.xlu0 %v533, 12
        %v1042 = vpop.permute.xlu0 %1041
        %1043 = vrot.lane.b32.xlu0 %v534, 12
        %v1044 = vpop.permute.xlu0 %1043
        %1045 = vrot.lane.b32.xlu0 %v535, 12
        %v1046 = vpop.permute.xlu0 %1045
        %1047 = vrot.lane.b32.xlu0 %v536, 12
        %v1048 = vpop.permute.xlu0 %1047
        %1049 = vrot.lane.b32.xlu0 %v537, 12
        %v1050 = vpop.permute.xlu0 %1049
        %1115 = vrot.lane.b32.xlu0 %v538, 16
        %v1116 = vpop.permute.xlu0 %1115
        %1117 = vrot.lane.b32.xlu0 %v539, 16
        %v1118 = vpop.permute.xlu0 %1117
        %1119 = vrot.lane.b32.xlu0 %v540, 16
        %v1120 = vpop.permute.xlu0 %1119
        %1121 = vrot.lane.b32.xlu0 %v541, 16
        %v1122 = vpop.permute.xlu0 %1121
        %1123 = vrot.lane.b32.xlu0 %v542, 16
        %v1124 = vpop.permute.xlu0 %1123
        %1125 = vrot.lane.b32.xlu0 %v543, 16
        %v1126 = vpop.permute.xlu0 %1125
        %1127 = vrot.lane.b32.xlu0 %v544, 16
        %v1128 = vpop.permute.xlu0 %1127
        %1129 = vrot.lane.b32.xlu0 %v545, 16
        %v1130 = vpop.permute.xlu0 %1129
        %1131 = vrot.lane.b32.xlu0 %v546, 16
        %v1132 = vpop.permute.xlu0 %1131
        %1133 = vrot.lane.b32.xlu0 %v547, 16
        %v1134 = vpop.permute.xlu0 %1133
        %1135 = vrot.lane.b32.xlu0 %v548, 16
        %v1136 = vpop.permute.xlu0 %1135
        %1137 = vrot.lane.b32.xlu0 %v549, 16
        %v1138 = vpop.permute.xlu0 %1137
        %1139 = vrot.lane.b32.xlu0 %v550, 16
        %v1140 = vpop.permute.xlu0 %1139
        %1141 = vrot.lane.b32.xlu0 %v551, 16
        %v1142 = vpop.permute.xlu0 %1141
        %1143 = vrot.lane.b32.xlu0 %v552, 16
        %v1144 = vpop.permute.xlu0 %1143
        %1145 = vrot.lane.b32.xlu0 %v553, 16
        %v1146 = vpop.permute.xlu0 %1145
        %1147 = vrot.lane.b32.xlu0 %v554, 16
        %v1148 = vpop.permute.xlu0 %1147
        %1149 = vrot.lane.b32.xlu0 %v555, 16
        %v1150 = vpop.permute.xlu0 %1149
        %1151 = vrot.lane.b32.xlu0 %v556, 16
        %v1152 = vpop.permute.xlu0 %1151
        %1153 = vrot.lane.b32.xlu0 %v557, 16
        %v1154 = vpop.permute.xlu0 %1153
        %1155 = vrot.lane.b32.xlu0 %v558, 16
        %v1156 = vpop.permute.xlu0 %1155
        %1157 = vrot.lane.b32.xlu0 %v559, 16
        %v1158 = vpop.permute.xlu0 %1157
        %1159 = vrot.lane.b32.xlu0 %v560, 16
        %v1160 = vpop.permute.xlu0 %1159
        %1161 = vrot.lane.b32.xlu0 %v561, 16
        %v1162 = vpop.permute.xlu0 %1161
        %1163 = vrot.lane.b32.xlu0 %v562, 16
        %v1164 = vpop.permute.xlu0 %1163
        %1165 = vrot.lane.b32.xlu0 %v563, 16
        %v1166 = vpop.permute.xlu0 %1165
        %1167 = vrot.lane.b32.xlu0 %v564, 16
        %v1168 = vpop.permute.xlu0 %1167
        %1169 = vrot.lane.b32.xlu0 %v565, 16
        %v1170 = vpop.permute.xlu0 %1169
        %1171 = vrot.lane.b32.xlu0 %v566, 16
        %v1172 = vpop.permute.xlu0 %1171
        %1173 = vrot.lane.b32.xlu0 %v567, 16
        %v1174 = vpop.permute.xlu0 %1173
        %1175 = vrot.lane.b32.xlu0 %v568, 16
        %v1176 = vpop.permute.xlu0 %1175
        %1177 = vrot.lane.b32.xlu0 %v569, 16
        %v1178 = vpop.permute.xlu0 %1177
        %1243 = vrot.lane.b32.xlu0 %v570, 20
        %v1244 = vpop.permute.xlu0 %1243
        %1245 = vrot.lane.b32.xlu0 %v571, 20
        %v1246 = vpop.permute.xlu0 %1245
        %1247 = vrot.lane.b32.xlu0 %v572, 20
        %v1248 = vpop.permute.xlu0 %1247
        %1249 = vrot.lane.b32.xlu0 %v573, 20
        %v1250 = vpop.permute.xlu0 %1249
        %1251 = vrot.lane.b32.xlu0 %v574, 20
        %v1252 = vpop.permute.xlu0 %1251
        %1253 = vrot.lane.b32.xlu0 %v575, 20
        %v1254 = vpop.permute.xlu0 %1253
        %1255 = vrot.lane.b32.xlu0 %v576, 20
        %v1256 = vpop.permute.xlu0 %1255
        %1257 = vrot.lane.b32.xlu0 %v577, 20
        %v1258 = vpop.permute.xlu0 %1257
        %1259 = vrot.lane.b32.xlu0 %v578, 20
        %v1260 = vpop.permute.xlu0 %1259
        %1261 = vrot.lane.b32.xlu0 %v579, 20
        %v1262 = vpop.permute.xlu0 %1261
        %1263 = vrot.lane.b32.xlu0 %v580, 20
        %v1264 = vpop.permute.xlu0 %1263
        %1265 = vrot.lane.b32.xlu0 %v581, 20
        %v1266 = vpop.permute.xlu0 %1265
        %1267 = vrot.lane.b32.xlu0 %v582, 20
        %v1268 = vpop.permute.xlu0 %1267
        %1269 = vrot.lane.b32.xlu0 %v583, 20
        %v1270 = vpop.permute.xlu0 %1269
        %1271 = vrot.lane.b32.xlu0 %v584, 20
        %v1272 = vpop.permute.xlu0 %1271
        %1273 = vrot.lane.b32.xlu0 %v585, 20
        %v1274 = vpop.permute.xlu0 %1273
        %1275 = vrot.lane.b32.xlu0 %v586, 20
        %v1276 = vpop.permute.xlu0 %1275
        %1277 = vrot.lane.b32.xlu0 %v587, 20
        %v1278 = vpop.permute.xlu0 %1277
        %1279 = vrot.lane.b32.xlu0 %v588, 20
        %v1280 = vpop.permute.xlu0 %1279
        %1281 = vrot.lane.b32.xlu0 %v589, 20
        %v1282 = vpop.permute.xlu0 %1281
        %1283 = vrot.lane.b32.xlu0 %v590, 20
        %v1284 = vpop.permute.xlu0 %1283
        %1285 = vrot.lane.b32.xlu0 %v591, 20
        %v1286 = vpop.permute.xlu0 %1285
        %1287 = vrot.lane.b32.xlu0 %v592, 20
        %v1288 = vpop.permute.xlu0 %1287
        %1289 = vrot.lane.b32.xlu0 %v593, 20
        %v1290 = vpop.permute.xlu0 %1289
        %1291 = vrot.lane.b32.xlu0 %v594, 20
        %v1292 = vpop.permute.xlu0 %1291
        %1293 = vrot.lane.b32.xlu0 %v595, 20
        %v1294 = vpop.permute.xlu0 %1293
        %1295 = vrot.lane.b32.xlu0 %v596, 20
        %v1296 = vpop.permute.xlu0 %1295
        %1297 = vrot.lane.b32.xlu0 %v597, 20
        %v1298 = vpop.permute.xlu0 %1297
        %1299 = vrot.lane.b32.xlu0 %v598, 20
        %v1300 = vpop.permute.xlu0 %1299
        %1301 = vrot.lane.b32.xlu0 %v599, 20
        %v1302 = vpop.permute.xlu0 %1301
        %1303 = vrot.lane.b32.xlu0 %v600, 20
        %v1304 = vpop.permute.xlu0 %1303
        %1305 = vrot.lane.b32.xlu0 %v601, 20
        %v1306 = vpop.permute.xlu0 %1305
        %1371 = vrot.lane.b32.xlu0 %v603, 24
        %v1372 = vpop.permute.xlu0 %1371
        %1373 = vrot.lane.b32.xlu0 %v604, 24
        %v1374 = vpop.permute.xlu0 %1373
        %1375 = vrot.lane.b32.xlu0 %v605, 24
        %v1376 = vpop.permute.xlu0 %1375
        %1377 = vrot.lane.b32.xlu0 %v606, 24
        %v1378 = vpop.permute.xlu0 %1377
        %1379 = vrot.lane.b32.xlu0 %v607, 24
        %v1380 = vpop.permute.xlu0 %1379
        %1381 = vrot.lane.b32.xlu0 %v608, 24
        %v1382 = vpop.permute.xlu0 %1381
        %1383 = vrot.lane.b32.xlu0 %v609, 24
        %v1384 = vpop.permute.xlu0 %1383
        %1385 = vrot.lane.b32.xlu0 %v610, 24
        %v1386 = vpop.permute.xlu0 %1385
        %1387 = vrot.lane.b32.xlu0 %v611, 24
        %v1388 = vpop.permute.xlu0 %1387
        %1389 = vrot.lane.b32.xlu0 %v612, 24
        %v1390 = vpop.permute.xlu0 %1389
        %1391 = vrot.lane.b32.xlu0 %v613, 24
        %v1392 = vpop.permute.xlu0 %1391
        %1393 = vrot.lane.b32.xlu0 %v614, 24
        %v1394 = vpop.permute.xlu0 %1393
        %1395 = vrot.lane.b32.xlu0 %v615, 24
        %v1396 = vpop.permute.xlu0 %1395
        %1397 = vrot.lane.b32.xlu0 %v616, 24
        %v1398 = vpop.permute.xlu0 %1397
        %1399 = vrot.lane.b32.xlu0 %v617, 24
        %v1400 = vpop.permute.xlu0 %1399
        %1401 = vrot.lane.b32.xlu0 %v618, 24
        %v1402 = vpop.permute.xlu0 %1401
        %1403 = vrot.lane.b32.xlu0 %v619, 24
        %v1404 = vpop.permute.xlu0 %1403
        %1405 = vrot.lane.b32.xlu0 %v620, 24
        %v1406 = vpop.permute.xlu0 %1405
        %1407 = vrot.lane.b32.xlu0 %v621, 24
        %v1408 = vpop.permute.xlu0 %1407
        %1409 = vrot.lane.b32.xlu0 %v622, 24
        %v1410 = vpop.permute.xlu0 %1409
        %1411 = vrot.lane.b32.xlu0 %v623, 24
        %v1412 = vpop.permute.xlu0 %1411
        %1413 = vrot.lane.b32.xlu0 %v624, 24
        %v1414 = vpop.permute.xlu0 %1413
        %1415 = vrot.lane.b32.xlu0 %v625, 24
        %v1416 = vpop.permute.xlu0 %1415
        %1417 = vrot.lane.b32.xlu0 %v626, 24
        %v1418 = vpop.permute.xlu0 %1417
        %1419 = vrot.lane.b32.xlu0 %v627, 24
        %v1420 = vpop.permute.xlu0 %1419
        %1421 = vrot.lane.b32.xlu0 %v628, 24
        %v1422 = vpop.permute.xlu0 %1421
        %1423 = vrot.lane.b32.xlu0 %v629, 24
        %v1424 = vpop.permute.xlu0 %1423
        %1425 = vrot.lane.b32.xlu0 %v630, 24
        %v1426 = vpop.permute.xlu0 %1425
        %1427 = vrot.lane.b32.xlu0 %v631, 24
        %v1428 = vpop.permute.xlu0 %1427
        %1429 = vrot.lane.b32.xlu0 %v632, 24
        %v1430 = vpop.permute.xlu0 %1429
        %1431 = vrot.lane.b32.xlu0 %v633, 24
        %v1432 = vpop.permute.xlu0 %1431
        %1433 = vrot.lane.b32.xlu0 %v634, 24
        %v1434 = vpop.permute.xlu0 %1433
        %1499 = vrot.lane.b32.xlu0 %v635, 28
        %v1500 = vpop.permute.xlu0 %1499
        %1501 = vrot.lane.b32.xlu0 %v636, 28
        %v1502 = vpop.permute.xlu0 %1501
        %1503 = vrot.lane.b32.xlu0 %v637, 28
        %v1504 = vpop.permute.xlu0 %1503
        %1505 = vrot.lane.b32.xlu0 %v638, 28
        %v1506 = vpop.permute.xlu0 %1505
        %1507 = vrot.lane.b32.xlu0 %v639, 28
        %v1508 = vpop.permute.xlu0 %1507
        %1509 = vrot.lane.b32.xlu0 %v640, 28
        %v1510 = vpop.permute.xlu0 %1509
        %1511 = vrot.lane.b32.xlu0 %v641, 28
        %v1512 = vpop.permute.xlu0 %1511
        %1513 = vrot.lane.b32.xlu0 %v642, 28
        %v1514 = vpop.permute.xlu0 %1513
        %1515 = vrot.lane.b32.xlu0 %v643, 28
        %v1516 = vpop.permute.xlu0 %1515
        %1517 = vrot.lane.b32.xlu0 %v644, 28
        %v1518 = vpop.permute.xlu0 %1517
        %1519 = vrot.lane.b32.xlu0 %v645, 28
        %v1520 = vpop.permute.xlu0 %1519
        %1521 = vrot.lane.b32.xlu0 %v646, 28
        %v1522 = vpop.permute.xlu0 %1521
        %1523 = vrot.lane.b32.xlu0 %v647, 28
        %v1524 = vpop.permute.xlu0 %1523
        %1525 = vrot.lane.b32.xlu0 %v648, 28
        %v1526 = vpop.permute.xlu0 %1525
        %1527 = vrot.lane.b32.xlu0 %v649, 28
        %v1528 = vpop.permute.xlu0 %1527
        %1529 = vrot.lane.b32.xlu0 %v650, 28
        %v1530 = vpop.permute.xlu0 %1529
        %1531 = vrot.lane.b32.xlu0 %v651, 28
        %v1532 = vpop.permute.xlu0 %1531
        %1533 = vrot.lane.b32.xlu0 %v652, 28
        %v1534 = vpop.permute.xlu0 %1533
        %1535 = vrot.lane.b32.xlu0 %v653, 28
        %v1536 = vpop.permute.xlu0 %1535
        %1537 = vrot.lane.b32.xlu0 %v654, 28
        %v1538 = vpop.permute.xlu0 %1537
        %1539 = vrot.lane.b32.xlu0 %v655, 28
        %v1540 = vpop.permute.xlu0 %1539
        %1541 = vrot.lane.b32.xlu0 %v656, 28
        %v1542 = vpop.permute.xlu0 %1541
        %1543 = vrot.lane.b32.xlu0 %v657, 28
        %v1544 = vpop.permute.xlu0 %1543
        %1545 = vrot.lane.b32.xlu0 %v658, 28
        %v1546 = vpop.permute.xlu0 %1545
        %1547 = vrot.lane.b32.xlu0 %v659, 28
        %v1548 = vpop.permute.xlu0 %1547
        %1549 = vrot.lane.b32.xlu0 %v660, 28
        %v1550 = vpop.permute.xlu0 %1549
        %1551 = vrot.lane.b32.xlu0 %v661, 28
        %v1552 = vpop.permute.xlu0 %1551
        %1553 = vrot.lane.b32.xlu0 %v662, 28
        %v1554 = vpop.permute.xlu0 %1553
        %1555 = vrot.lane.b32.xlu0 %v663, 28
        %v1556 = vpop.permute.xlu0 %1555
        %1557 = vrot.lane.b32.xlu0 %v664, 28
        %v1558 = vpop.permute.xlu0 %1557
        %1559 = vrot.lane.b32.xlu0 %v665, 28
        %v1560 = vpop.permute.xlu0 %1559
        %1561 = vrot.lane.b32.xlu0 %v666, 28
        %v1562 = vpop.permute.xlu0 %1561
        %1627 = vrot.lane.b32.xlu0 %v667, 32
        %v1628 = vpop.permute.xlu0 %1627
        %1629 = vrot.lane.b32.xlu0 %v668, 32
        %v1630 = vpop.permute.xlu0 %1629
        %1631 = vrot.lane.b32.xlu0 %v669, 32
        %v1632 = vpop.permute.xlu0 %1631
        %1633 = vrot.lane.b32.xlu0 %v670, 32
        %v1634 = vpop.permute.xlu0 %1633
        %1635 = vrot.lane.b32.xlu0 %v671, 32
        %v1636 = vpop.permute.xlu0 %1635
        %1637 = vrot.lane.b32.xlu0 %v672, 32
        %v1638 = vpop.permute.xlu0 %1637
        %1639 = vrot.lane.b32.xlu0 %v673, 32
        %v1640 = vpop.permute.xlu0 %1639
        %1641 = vrot.lane.b32.xlu0 %v674, 32
        %v1642 = vpop.permute.xlu0 %1641
        %1643 = vrot.lane.b32.xlu0 %v675, 32
        %v1644 = vpop.permute.xlu0 %1643
        %1645 = vrot.lane.b32.xlu0 %v676, 32
        %v1646 = vpop.permute.xlu0 %1645
        %1647 = vrot.lane.b32.xlu0 %v677, 32
        %v1648 = vpop.permute.xlu0 %1647
        %1649 = vrot.lane.b32.xlu0 %v678, 32
        %v1650 = vpop.permute.xlu0 %1649
        %1651 = vrot.lane.b32.xlu0 %v679, 32
        %v1652 = vpop.permute.xlu0 %1651
        %1653 = vrot.lane.b32.xlu0 %v680, 32
        %v1654 = vpop.permute.xlu0 %1653
        %1655 = vrot.lane.b32.xlu0 %v681, 32
        %v1656 = vpop.permute.xlu0 %1655
        %1657 = vrot.lane.b32.xlu0 %v682, 32
        %v1658 = vpop.permute.xlu0 %1657
        %1659 = vrot.lane.b32.xlu0 %v683, 32
        %v1660 = vpop.permute.xlu0 %1659
        %1661 = vrot.lane.b32.xlu0 %v684, 32
        %v1662 = vpop.permute.xlu0 %1661
        %1663 = vrot.lane.b32.xlu0 %v685, 32
        %v1664 = vpop.permute.xlu0 %1663
        %1665 = vrot.lane.b32.xlu0 %v686, 32
        %v1666 = vpop.permute.xlu0 %1665
        %1667 = vrot.lane.b32.xlu0 %v687, 32
        %v1668 = vpop.permute.xlu0 %1667
        %1669 = vrot.lane.b32.xlu0 %v688, 32
        %v1670 = vpop.permute.xlu0 %1669
        %1671 = vrot.lane.b32.xlu0 %v689, 32
        %v1672 = vpop.permute.xlu0 %1671
        %1673 = vrot.lane.b32.xlu0 %v690, 32
        %v1674 = vpop.permute.xlu0 %1673
        %1675 = vrot.lane.b32.xlu0 %v691, 32
        %v1676 = vpop.permute.xlu0 %1675
        %1677 = vrot.lane.b32.xlu0 %v692, 32
        %v1678 = vpop.permute.xlu0 %1677
        %1679 = vrot.lane.b32.xlu0 %v693, 32
        %v1680 = vpop.permute.xlu0 %1679
        %1681 = vrot.lane.b32.xlu0 %v694, 32
        %v1682 = vpop.permute.xlu0 %1681
        %1683 = vrot.lane.b32.xlu0 %v695, 32
        %v1684 = vpop.permute.xlu0 %1683
        %1685 = vrot.lane.b32.xlu0 %v696, 32
        %v1686 = vpop.permute.xlu0 %1685
        %1687 = vrot.lane.b32.xlu0 %v697, 32
        %v1688 = vpop.permute.xlu0 %1687
        %1689 = vrot.lane.b32.xlu0 %v698, 32
        %v1690 = vpop.permute.xlu0 %1689
        %v1723 = vsel %vm224, %v410, %v732
        %v1724 = vsel %vm224, %v411, %v734
        %v1725 = vsel %vm224, %v412, %v736
        %v1726 = vsel %vm224, %v413, %v738
        %v1727 = vsel %vm224, %v414, %v740
        %v1728 = vsel %vm224, %v415, %v742
        %v1729 = vsel %vm224, %v416, %v744
        %v1730 = vsel %vm224, %v417, %v746
        %v1731 = vsel %vm224, %v418, %v748
        %v1732 = vsel %vm224, %v419, %v750
        %v1733 = vsel %vm224, %v420, %v752
        %v1734 = vsel %vm224, %v421, %v754
        %v1735 = vsel %vm224, %v422, %v756
        %v1736 = vsel %vm224, %v423, %v758
        %v1737 = vsel %vm224, %v424, %v760
        %v1738 = vsel %vm224, %v425, %v762
        %v1739 = vsel %vm224, %v426, %v764
        %v1740 = vsel %vm224, %v427, %v766
        %v1741 = vsel %vm224, %v428, %v768
        %v1742 = vsel %vm224, %v429, %v770
        %v1743 = vsel %vm224, %v430, %v772
        %v1744 = vsel %vm224, %v431, %v774
        %v1745 = vsel %vm224, %v432, %v776
        %v1746 = vsel %vm224, %v433, %v778
        %v1747 = vsel %vm224, %v434, %v780
        %v1748 = vsel %vm224, %v435, %v782
        %v1749 = vsel %vm224, %v436, %v784
        %v1750 = vsel %vm224, %v437, %v786
        %v1751 = vsel %vm224, %v438, %v788
        %v1752 = vsel %vm224, %v439, %v790
        %v1753 = vsel %vm224, %v440, %v792
        %v1754 = vsel %vm224, %v441, %v794
        %vm1755 = vcmask 64512
        %v1756 = vsel %vm1755, %v1723, %v860
        %v1757 = vsel %vm1755, %v1724, %v862
        %v1758 = vsel %vm1755, %v1725, %v864
        %v1759 = vsel %vm1755, %v1726, %v866
        %v1760 = vsel %vm1755, %v1727, %v868
        %v1761 = vsel %vm1755, %v1728, %v870
        %v1762 = vsel %vm1755, %v1729, %v872
        %v1763 = vsel %vm1755, %v1730, %v874
        %v1764 = vsel %vm1755, %v1731, %v876
        %v1765 = vsel %vm1755, %v1732, %v878
        %v1766 = vsel %vm1755, %v1733, %v880
        %v1767 = vsel %vm1755, %v1734, %v882
        %v1768 = vsel %vm1755, %v1735, %v884
        %v1769 = vsel %vm1755, %v1736, %v886
        %v1770 = vsel %vm1755, %v1737, %v888
        %v1771 = vsel %vm1755, %v1738, %v890
        %v1772 = vsel %vm1755, %v1739, %v892
        %v1773 = vsel %vm1755, %v1740, %v894
        %v1774 = vsel %vm1755, %v1741, %v896
        %v1775 = vsel %vm1755, %v1742, %v898
        %v1776 = vsel %vm1755, %v1743, %v900
        %v1777 = vsel %vm1755, %v1744, %v902
        %v1778 = vsel %vm1755, %v1745, %v904
        %v1779 = vsel %vm1755, %v1746, %v906
        %v1780 = vsel %vm1755, %v1747, %v908
        %v1781 = vsel %vm1755, %v1748, %v910
        %v1782 = vsel %vm1755, %v1749, %v912
        %v1783 = vsel %vm1755, %v1750, %v914
        %v1784 = vsel %vm1755, %v1751, %v916
        %v1785 = vsel %vm1755, %v1752, %v918
        %v1786 = vsel %vm1755, %v1753, %v920
        %v1787 = vsel %vm1755, %v1754, %v922
        %vm1788 = vcmask 97280
        %v1789 = vsel %vm1788, %v1756, %v988
        %v1790 = vsel %vm1788, %v1757, %v990
        %v1791 = vsel %vm1788, %v1758, %v992
        %v1792 = vsel %vm1788, %v1759, %v994
        %v1793 = vsel %vm1788, %v1760, %v996
        %v1794 = vsel %vm1788, %v1761, %v998
        %v1795 = vsel %vm1788, %v1762, %v1000
        %v1796 = vsel %vm1788, %v1763, %v1002
        %v1797 = vsel %vm1788, %v1764, %v1004
        %v1798 = vsel %vm1788, %v1765, %v1006
        %v1799 = vsel %vm1788, %v1766, %v1008
        %v1800 = vsel %vm1788, %v1767, %v1010
        %v1801 = vsel %vm1788, %v1768, %v1012
        %v1802 = vsel %vm1788, %v1769, %v1014
        %v1803 = vsel %vm1788, %v1770, %v1016
        %v1804 = vsel %vm1788, %v1771, %v1018
        %v1805 = vsel %vm1788, %v1772, %v1020
        %v1806 = vsel %vm1788, %v1773, %v1022
        %v1807 = vsel %vm1788, %v1774, %v1024
        %v1808 = vsel %vm1788, %v1775, %v1026
        %v1809 = vsel %vm1788, %v1776, %v1028
        %v1810 = vsel %vm1788, %v1777, %v1030
        %v1811 = vsel %vm1788, %v1778, %v1032
        %v1812 = vsel %vm1788, %v1779, %v1034
        %v1813 = vsel %vm1788, %v1780, %v1036
        %v1814 = vsel %vm1788, %v1781, %v1038
        %v1815 = vsel %vm1788, %v1782, %v1040
        %v1816 = vsel %vm1788, %v1783, %v1042
        %v1817 = vsel %vm1788, %v1784, %v1044
        %v1818 = vsel %vm1788, %v1785, %v1046
        %v1819 = vsel %vm1788, %v1786, %v1048
        %v1820 = vsel %vm1788, %v1787, %v1050
        %vm1821 = vcmask 130048
        %v1822 = vsel %vm1821, %v1789, %v1116
        %v1823 = vsel %vm1821, %v1790, %v1118
        %v1824 = vsel %vm1821, %v1791, %v1120
        %v1825 = vsel %vm1821, %v1792, %v1122
        %v1826 = vsel %vm1821, %v1793, %v1124
        %v1827 = vsel %vm1821, %v1794, %v1126
        %v1828 = vsel %vm1821, %v1795, %v1128
        %v1829 = vsel %vm1821, %v1796, %v1130
        %v1830 = vsel %vm1821, %v1797, %v1132
        %v1831 = vsel %vm1821, %v1798, %v1134
        %v1832 = vsel %vm1821, %v1799, %v1136
        %v1833 = vsel %vm1821, %v1800, %v1138
        %v1834 = vsel %vm1821, %v1801, %v1140
        %v1835 = vsel %vm1821, %v1802, %v1142
        %v1836 = vsel %vm1821, %v1803, %v1144
        %v1837 = vsel %vm1821, %v1804, %v1146
        %v1838 = vsel %vm1821, %v1805, %v1148
        %v1839 = vsel %vm1821, %v1806, %v1150
        %v1840 = vsel %vm1821, %v1807, %v1152
        %v1841 = vsel %vm1821, %v1808, %v1154
        %v1842 = vsel %vm1821, %v1809, %v1156
        %v1843 = vsel %vm1821, %v1810, %v1158
        %v1844 = vsel %vm1821, %v1811, %v1160
        %v1845 = vsel %vm1821, %v1812, %v1162
        %v1846 = vsel %vm1821, %v1813, %v1164
        %v1847 = vsel %vm1821, %v1814, %v1166
        %v1848 = vsel %vm1821, %v1815, %v1168
        %v1849 = vsel %vm1821, %v1816, %v1170
        %v1850 = vsel %vm1821, %v1817, %v1172
        %v1851 = vsel %vm1821, %v1818, %v1174
        %v1852 = vsel %vm1821, %v1819, %v1176
        %v1853 = vsel %vm1821, %v1820, %v1178
        %vm1854 = vcmask 162816
        %v1855 = vsel %vm1854, %v1822, %v1244
        %v1856 = vsel %vm1854, %v1823, %v1246
        %v1857 = vsel %vm1854, %v1824, %v1248
        %v1858 = vsel %vm1854, %v1825, %v1250
        %v1859 = vsel %vm1854, %v1826, %v1252
        %v1860 = vsel %vm1854, %v1827, %v1254
        %v1861 = vsel %vm1854, %v1828, %v1256
        %v1862 = vsel %vm1854, %v1829, %v1258
        %v1863 = vsel %vm1854, %v1830, %v1260
        %v1864 = vsel %vm1854, %v1831, %v1262
        %v1865 = vsel %vm1854, %v1832, %v1264
        %v1866 = vsel %vm1854, %v1833, %v1266
        %v1867 = vsel %vm1854, %v1834, %v1268
        %v1868 = vsel %vm1854, %v1835, %v1270
        %v1869 = vsel %vm1854, %v1836, %v1272
        %v1870 = vsel %vm1854, %v1837, %v1274
        %v1871 = vsel %vm1854, %v1838, %v1276
        %v1872 = vsel %vm1854, %v1839, %v1278
        %v1873 = vsel %vm1854, %v1840, %v1280
        %v1874 = vsel %vm1854, %v1841, %v1282
        %v1875 = vsel %vm1854, %v1842, %v1284
        %v1876 = vsel %vm1854, %v1843, %v1286
        %v1877 = vsel %vm1854, %v1844, %v1288
        %v1878 = vsel %vm1854, %v1845, %v1290
        %v1879 = vsel %vm1854, %v1846, %v1292
        %v1880 = vsel %vm1854, %v1847, %v1294
        %v1881 = vsel %vm1854, %v1848, %v1296
        %v1882 = vsel %vm1854, %v1849, %v1298
        %v1883 = vsel %vm1854, %v1850, %v1300
        %v1884 = vsel %vm1854, %v1851, %v1302
        %v1885 = vsel %vm1854, %v1852, %v1304
        %v1886 = vsel %vm1854, %v1853, %v1306
        %vm1887 = vcmask 195584
        %v1888 = vsel %vm1887, %v1855, %v1372
        %v1889 = vsel %vm1887, %v1856, %v1374
        %v1890 = vsel %vm1887, %v1857, %v1376
        %v1891 = vsel %vm1887, %v1858, %v1378
        %v1892 = vsel %vm1887, %v1859, %v1380
        %v1893 = vsel %vm1887, %v1860, %v1382
        %v1894 = vsel %vm1887, %v1861, %v1384
        %v1895 = vsel %vm1887, %v1862, %v1386
        %v1896 = vsel %vm1887, %v1863, %v1388
        %v1897 = vsel %vm1887, %v1864, %v1390
        %v1898 = vsel %vm1887, %v1865, %v1392
        %v1899 = vsel %vm1887, %v1866, %v1394
        %v1900 = vsel %vm1887, %v1867, %v1396
        %v1901 = vsel %vm1887, %v1868, %v1398
        %v1902 = vsel %vm1887, %v1869, %v1400
        %v1903 = vsel %vm1887, %v1870, %v1402
        %v1904 = vsel %vm1887, %v1871, %v1404
        %v1905 = vsel %vm1887, %v1872, %v1406
        %v1906 = vsel %vm1887, %v1873, %v1408
        %v1907 = vsel %vm1887, %v1874, %v1410
        %v1908 = vsel %vm1887, %v1875, %v1412
        %v1909 = vsel %vm1887, %v1876, %v1414
        %v1910 = vsel %vm1887, %v1877, %v1416
        %v1911 = vsel %vm1887, %v1878, %v1418
        %v1912 = vsel %vm1887, %v1879, %v1420
        %v1913 = vsel %vm1887, %v1880, %v1422
        %v1914 = vsel %vm1887, %v1881, %v1424
        %v1915 = vsel %vm1887, %v1882, %v1426
        %v1916 = vsel %vm1887, %v1883, %v1428
        %v1917 = vsel %vm1887, %v1884, %v1430
        %v1918 = vsel %vm1887, %v1885, %v1432
        %v1919 = vsel %vm1887, %v1886, %v1434
        %vm1920 = vcmask 228352
        %v1921 = vsel %vm1920, %v1888, %v1500
        %v1922 = vsel %vm1920, %v1889, %v1502
        %v1923 = vsel %vm1920, %v1890, %v1504
        %v1924 = vsel %vm1920, %v1891, %v1506
        %v1925 = vsel %vm1920, %v1892, %v1508
        %v1926 = vsel %vm1920, %v1893, %v1510
        %v1927 = vsel %vm1920, %v1894, %v1512
        %v1928 = vsel %vm1920, %v1895, %v1514
        %v1929 = vsel %vm1920, %v1896, %v1516
        %v1930 = vsel %vm1920, %v1897, %v1518
        %v1931 = vsel %vm1920, %v1898, %v1520
        %v1932 = vsel %vm1920, %v1899, %v1522
        %v1933 = vsel %vm1920, %v1900, %v1524
        %v1934 = vsel %vm1920, %v1901, %v1526
        %v1935 = vsel %vm1920, %v1902, %v1528
        %v1936 = vsel %vm1920, %v1903, %v1530
        %v1937 = vsel %vm1920, %v1904, %v1532
        %v1938 = vsel %vm1920, %v1905, %v1534
        %v1939 = vsel %vm1920, %v1906, %v1536
        %v1940 = vsel %vm1920, %v1907, %v1538
        %v1941 = vsel %vm1920, %v1908, %v1540
        %v1942 = vsel %vm1920, %v1909, %v1542
        %v1943 = vsel %vm1920, %v1910, %v1544
        %v1944 = vsel %vm1920, %v1911, %v1546
        %v1945 = vsel %vm1920, %v1912, %v1548
        %v1946 = vsel %vm1920, %v1913, %v1550
        %v1947 = vsel %vm1920, %v1914, %v1552
        %v1948 = vsel %vm1920, %v1915, %v1554
        %v1949 = vsel %vm1920, %v1916, %v1556
        %v1950 = vsel %vm1920, %v1917, %v1558
        %v1951 = vsel %vm1920, %v1918, %v1560
        %v1952 = vsel %vm1920, %v1919, %v1562
        %vm1953 = vcmask 261120
        %v1954 = vsel %vm1953, %v1921, %v1628
        %v1955 = vsel %vm1953, %v1922, %v1630
        %v1956 = vsel %vm1953, %v1923, %v1632
        %v1957 = vsel %vm1953, %v1924, %v1634
        %v1958 = vsel %vm1953, %v1925, %v1636
        %v1959 = vsel %vm1953, %v1926, %v1638
        %v1960 = vsel %vm1953, %v1927, %v1640
        %v1961 = vsel %vm1953, %v1928, %v1642
        %v1962 = vsel %vm1953, %v1929, %v1644
        %v1963 = vsel %vm1953, %v1930, %v1646
        %v1964 = vsel %vm1953, %v1931, %v1648
        %v1965 = vsel %vm1953, %v1932, %v1650
        %v1966 = vsel %vm1953, %v1933, %v1652
        %v1967 = vsel %vm1953, %v1934, %v1654
        %v1968 = vsel %vm1953, %v1935, %v1656
        %v1969 = vsel %vm1953, %v1936, %v1658
        %v1970 = vsel %vm1953, %v1937, %v1660
        %v1971 = vsel %vm1953, %v1938, %v1662
        %v1972 = vsel %vm1953, %v1939, %v1664
        %v1973 = vsel %vm1953, %v1940, %v1666
        %v1974 = vsel %vm1953, %v1941, %v1668
        %v1975 = vsel %vm1953, %v1942, %v1670
        %v1976 = vsel %vm1953, %v1943, %v1672
        %v1977 = vsel %vm1953, %v1944, %v1674
        %v1978 = vsel %vm1953, %v1945, %v1676
        %v1979 = vsel %vm1953, %v1946, %v1678
        %v1980 = vsel %vm1953, %v1947, %v1680
        %v1981 = vsel %vm1953, %v1948, %v1682
        %v1982 = vsel %vm1953, %v1949, %v1684
        %v1983 = vsel %vm1953, %v1950, %v1686
        %v1984 = vsel %vm1953, %v1951, %v1688
        %v1985 = vsel %vm1953, %v1952, %v1690
        %v1986 = vpack.c.bf16 %v1955, %v1954
        %v1987 = vpack.c.bf16 %v1957, %v1956
        %v1988 = vpack.c.bf16 %v1959, %v1958
        %v1989 = vpack.c.bf16 %v1961, %v1960
        %v1990 = vpack.c.bf16 %v1963, %v1962
        %v1991 = vpack.c.bf16 %v1965, %v1964
        %v1992 = vpack.c.bf16 %v1967, %v1966
        %v1993 = vpack.c.bf16 %v1969, %v1968
        %v1994 = vpack.c.bf16 %v1971, %v1970
        %v1995 = vpack.c.bf16 %v1973, %v1972
        %v1996 = vpack.c.bf16 %v1975, %v1974
        %v1997 = vpack.c.bf16 %v1977, %v1976
        %v1998 = vpack.c.bf16 %v1979, %v1978
        %v1999 = vpack.c.bf16 %v1981, %v1980
        %v2000 = vpack.c.bf16 %v1983, %v1982
        %v2001 = vpack.c.bf16 %v1985, %v1984
        %v2002 = vld [vmem:[%s1] sm:$0xf]
        %v2003 = vld [vmem:[%s1 + $0x4] sm:$0xf]
        %v2004 = vld [vmem:[%s1 + $0x8] sm:$0xf]
        %v2005 = vld [vmem:[%s1 + $0xc] sm:$0xf]
        %v2006 = vld [vmem:[%s1 + $0x10] sm:$0x3]
        %v2007 = vld [vmem:[%s2] sm:$0x1]
        %v2009 = vlaneseq
        %v2010 = vshrl.u32 %v2009, 7
        %v2011 = vsub.s32 0, %v2010
        %v2012 = vrot.slane %v2007, %v2011
        %v2019 = vunpack.c.l.b16 %v2002
        %v2020 = vunpack.c.l.b16 %v2003
        %v2021 = vunpack.c.l.b16 %v2004
        %v2022 = vunpack.c.l.b16 %v2005
        %v2023 = vunpack.c.l.b16 %v2006
        %v2024 = vpack.c.b16 %v2020, %v2019
        %v2025 = vpack.c.b16 %v2022, %v2021
        %v2026 = vpack.c.b16 %v2023, %v2023
        %vm2029 = vcmask 293888
        %v2031 = vsel %vm2029, %v1986, 0
        %v2034 = vsel %vm2029, %v1987, 0
        %v2037 = vsel %vm2029, %v1988, 0
        %v2040 = vsel %vm2029, %v1989, 0
        %v2043 = vsel %vm2029, %v1990, 0
        %v2046 = vsel %vm2029, %v1991, 0
        %v2049 = vsel %vm2029, %v1992, 0
        %v2052 = vsel %vm2029, %v1993, 0
        %v2055 = vsel %vm2029, %v1994, 0
        %v2058 = vsel %vm2029, %v1995, 0
        %v2061 = vsel %vm2029, %v1996, 0
        %v2064 = vsel %vm2029, %v1997, 0
        %v2067 = vsel %vm2029, %v1998, 0
        %v2070 = vsel %vm2029, %v1999, 0
        %v2073 = vsel %vm2029, %v2000, 0
        %v2076 = vsel %vm2029, %v2001, 0
        %vm2078 = vcmask 1041408
        %v2080 = vsel %vm2078, %v2026, 0
        %2082 = vmatprep.subr.bf16.mxu0 0
        %2083 = vmatpush1.bf16.msra.mxu0 %v2024
        %2084 = vmatprep.subr.bf16.mxu0 0
        %2085 = vmatpush1.bf16.msra.mxu0 %v2025
        %2086 = vmatprep.subr.bf16.mxu0 0
        %2087 = vmatpush1.bf16.msra.mxu0 %v2080
        %2088 = vmatprep.subr.bf16.mxu0 0
        %2089 = vmatpush1.bf16.msra.mxu0 0
        %2090 = vmatprep.subr.bf16.mxu0 0
        %2091 = vmatpush1.bf16.msra.mxu0 0
        %2092 = vmatprep.subr.bf16.mxu0 0
        %2093 = vmatpush1.bf16.msra.mxu0 0
        %2094 = vmatprep.subr.bf16.mxu0 0
        %2095 = vmatpush1.bf16.msra.mxu0 0
        %2096 = vmatprep.subr.bf16.mxu0 0
        %2097 = vmatpush1.bf16.msra.mxu0 0
        %2098 = vmatprep.subr.bf16.mxu0 0
        %2099 = vmatpush1.bf16.msra.mxu0 0
        %2100 = vmatprep.subr.bf16.mxu0 0
        %2101 = vmatpush1.bf16.msra.mxu0 0
        %2102 = vmatprep.subr.bf16.mxu0 0
        %2103 = vmatpush1.bf16.msra.mxu0 0
        %2104 = vmatprep.subr.bf16.mxu0 0
        %2105 = vmatpush1.bf16.msra.mxu0 0
        %2106 = vmatprep.subr.bf16.mxu0 0
        %2107 = vmatpush1.bf16.msra.mxu0 0
        %2108 = vmatprep.subr.bf16.mxu0 0
        %2109 = vmatpush1.bf16.msra.mxu0 0
        %2110 = vmatprep.subr.bf16.mxu0 0
        %2111 = vmatpush1.bf16.msra.mxu0 0
        %2112 = vmatprep.subr.bf16.mxu0 0
        %2113 = vmatpush1.bf16.msra.mxu0 0
        %2114 = vmatprep.mubr.bf16.mxu0 0
        %2115 = vmatmul.mubr.bf16.gmra.mrb[0].mxu0 %v2031
        %v2116 = vpop.f32.mrb[0].mxu0
        %v2117 = vadd.f32 %v2012, %v2116
        %v2118 = vpop.f32.mrb[0].mxu0
        %v2119 = vpop.f32.mrb[0].mxu0
        %v2120 = vadd.f32 %v2012, %v2119
        %v2121 = vpop.f32.mrb[0].mxu0
        %2122 = vmatprep.mubr.bf16.mxu0 0
        %2123 = vmatmul.mubr.bf16.gmra.mrb[0].mxu0 %v2034
        %v2124 = vpop.f32.mrb[0].mxu0
        %v2125 = vadd.f32 %v2012, %v2124
        %v2126 = vpop.f32.mrb[0].mxu0
        %v2127 = vpop.f32.mrb[0].mxu0
        %v2128 = vadd.f32 %v2012, %v2127
        %v2129 = vpop.f32.mrb[0].mxu0
        %2130 = vmatprep.mubr.bf16.mxu0 0
        %2131 = vmatmul.mubr.bf16.gmra.mrb[0].mxu0 %v2037
        %v2132 = vpop.f32.mrb[0].mxu0
        %v2133 = vadd.f32 %v2012, %v2132
        %v2134 = vpop.f32.mrb[0].mxu0
        %v2135 = vpop.f32.mrb[0].mxu0
        %v2136 = vadd.f32 %v2012, %v2135
        %v2137 = vpop.f32.mrb[0].mxu0
        %2138 = vmatprep.mubr.bf16.mxu0 0
        %2139 = vmatmul.mubr.bf16.gmra.mrb[0].mxu0 %v2040
        %v2140 = vpop.f32.mrb[0].mxu0
        %v2141 = vadd.f32 %v2012, %v2140
        %v2142 = vpop.f32.mrb[0].mxu0
        %v2143 = vpop.f32.mrb[0].mxu0
        %v2144 = vadd.f32 %v2012, %v2143
        %v2145 = vpop.f32.mrb[0].mxu0
        %2146 = vmatprep.mubr.bf16.mxu0 0
        %2147 = vmatmul.mubr.bf16.gmra.mrb[0].mxu0 %v2043
        %v2148 = vpop.f32.mrb[0].mxu0
        %v2149 = vadd.f32 %v2012, %v2148
        %v2150 = vpop.f32.mrb[0].mxu0
        %v2151 = vpop.f32.mrb[0].mxu0
        %v2152 = vadd.f32 %v2012, %v2151
        %v2153 = vpop.f32.mrb[0].mxu0
        %2154 = vmatprep.mubr.bf16.mxu0 0
        %2155 = vmatmul.mubr.bf16.gmra.mrb[0].mxu0 %v2046
        %v2156 = vpop.f32.mrb[0].mxu0
        %v2157 = vadd.f32 %v2012, %v2156
        %v2158 = vpop.f32.mrb[0].mxu0
        %v2159 = vpop.f32.mrb[0].mxu0
        %v2160 = vadd.f32 %v2012, %v2159
        %v2161 = vpop.f32.mrb[0].mxu0
        %2162 = vmatprep.mubr.bf16.mxu0 0
        %2163 = vmatmul.mubr.bf16.gmra.mrb[0].mxu0 %v2049
        %v2164 = vpop.f32.mrb[0].mxu0
        %v2165 = vadd.f32 %v2012, %v2164
        %v2166 = vpop.f32.mrb[0].mxu0
        %v2167 = vpop.f32.mrb[0].mxu0
        %v2168 = vadd.f32 %v2012, %v2167
        %v2169 = vpop.f32.mrb[0].mxu0
        %2170 = vmatprep.mubr.bf16.mxu0 0
        %2171 = vmatmul.mubr.bf16.gmra.mrb[0].mxu0 %v2052
        %v2172 = vpop.f32.mrb[0].mxu0
        %v2173 = vadd.f32 %v2012, %v2172
        %v2174 = vpop.f32.mrb[0].mxu0
        %v2175 = vpop.f32.mrb[0].mxu0
        %v2176 = vadd.f32 %v2012, %v2175
        %v2177 = vpop.f32.mrb[0].mxu0
        %2178 = vmatprep.mubr.bf16.mxu0 0
        %2179 = vmatmul.mubr.bf16.gmra.mrb[0].mxu0 %v2055
        %v2180 = vpop.f32.mrb[0].mxu0
        %v2181 = vadd.f32 %v2012, %v2180
        %v2182 = vpop.f32.mrb[0].mxu0
        %v2183 = vpop.f32.mrb[0].mxu0
        %v2184 = vadd.f32 %v2012, %v2183
        %v2185 = vpop.f32.mrb[0].mxu0
        %2186 = vmatprep.mubr.bf16.mxu0 0
        %2187 = vmatmul.mubr.bf16.gmra.mrb[0].mxu0 %v2058
        %v2188 = vpop.f32.mrb[0].mxu0
        %v2189 = vadd.f32 %v2012, %v2188
        %v2190 = vpop.f32.mrb[0].mxu0
        %v2191 = vpop.f32.mrb[0].mxu0
        %v2192 = vadd.f32 %v2012, %v2191
        %v2193 = vpop.f32.mrb[0].mxu0
        %2194 = vmatprep.mubr.bf16.mxu0 0
        %2195 = vmatmul.mubr.bf16.gmra.mrb[0].mxu0 %v2061
        %v2196 = vpop.f32.mrb[0].mxu0
        %v2197 = vadd.f32 %v2012, %v2196
        %v2198 = vpop.f32.mrb[0].mxu0
        %v2199 = vpop.f32.mrb[0].mxu0
        %v2200 = vadd.f32 %v2012, %v2199
        %v2201 = vpop.f32.mrb[0].mxu0
        %2202 = vmatprep.mubr.bf16.mxu0 0
        %2203 = vmatmul.mubr.bf16.gmra.mrb[0].mxu0 %v2064
        %v2204 = vpop.f32.mrb[0].mxu0
        %v2205 = vadd.f32 %v2012, %v2204
        %v2206 = vpop.f32.mrb[0].mxu0
        %v2207 = vpop.f32.mrb[0].mxu0
        %v2208 = vadd.f32 %v2012, %v2207
        %v2209 = vpop.f32.mrb[0].mxu0
        %2210 = vmatprep.mubr.bf16.mxu0 0
        %2211 = vmatmul.mubr.bf16.gmra.mrb[0].mxu0 %v2067
        %v2212 = vpop.f32.mrb[0].mxu0
        %v2213 = vadd.f32 %v2012, %v2212
        %v2214 = vpop.f32.mrb[0].mxu0
        %v2215 = vpop.f32.mrb[0].mxu0
        %v2216 = vadd.f32 %v2012, %v2215
        %v2217 = vpop.f32.mrb[0].mxu0
        %2218 = vmatprep.mubr.bf16.mxu0 0
        %2219 = vmatmul.mubr.bf16.gmra.mrb[0].mxu0 %v2070
        %v2220 = vpop.f32.mrb[0].mxu0
        %v2221 = vadd.f32 %v2012, %v2220
        %v2222 = vpop.f32.mrb[0].mxu0
        %v2223 = vpop.f32.mrb[0].mxu0
        %v2224 = vadd.f32 %v2012, %v2223
        %v2225 = vpop.f32.mrb[0].mxu0
        %2226 = vmatprep.mubr.bf16.mxu0 0
        %2227 = vmatmul.mubr.bf16.gmra.mrb[0].mxu0 %v2073
        %v2228 = vpop.f32.mrb[0].mxu0
        %v2229 = vadd.f32 %v2012, %v2228
        %v2230 = vpop.f32.mrb[0].mxu0
        %v2231 = vpop.f32.mrb[0].mxu0
        %v2232 = vadd.f32 %v2012, %v2231
        %v2233 = vpop.f32.mrb[0].mxu0
        %2234 = vmatprep.mubr.bf16.mxu0 0
        %2235 = vmatmul.mubr.bf16.gmra.mrb[0].mxu0 %v2076
        %v2236 = vpop.f32.mrb[0].mxu0
        %v2237 = vadd.f32 %v2012, %v2236
        %v2238 = vpop.f32.mrb[0].mxu0
        %v2239 = vpop.f32.mrb[0].mxu0
        %v2240 = vadd.f32 %v2012, %v2239
        %v2241 = vpop.f32.mrb[0].mxu0
        %2242 = vdwg.mxu0
        %v2243 = vmax.f32 %v2117, 0.0
        %v2244 = vmax.f32 %v2120, 0.0
        %v2245 = vmax.f32 %v2125, 0.0
        %v2246 = vmax.f32 %v2128, 0.0
        %v2247 = vmax.f32 %v2133, 0.0
        %v2248 = vmax.f32 %v2136, 0.0
        %v2249 = vmax.f32 %v2141, 0.0
        %v2250 = vmax.f32 %v2144, 0.0
        %v2251 = vmax.f32 %v2149, 0.0
        %v2252 = vmax.f32 %v2152, 0.0
        %v2253 = vmax.f32 %v2157, 0.0
        %v2254 = vmax.f32 %v2160, 0.0
        %v2255 = vmax.f32 %v2165, 0.0
        %v2256 = vmax.f32 %v2168, 0.0
        %v2257 = vmax.f32 %v2173, 0.0
        %v2258 = vmax.f32 %v2176, 0.0
        %v2259 = vmax.f32 %v2181, 0.0
        %v2260 = vmax.f32 %v2184, 0.0
        %v2261 = vmax.f32 %v2189, 0.0
        %v2262 = vmax.f32 %v2192, 0.0
        %v2263 = vmax.f32 %v2197, 0.0
        %v2264 = vmax.f32 %v2200, 0.0
        %v2265 = vmax.f32 %v2205, 0.0
        %v2266 = vmax.f32 %v2208, 0.0
        %v2267 = vmax.f32 %v2213, 0.0
        %v2268 = vmax.f32 %v2216, 0.0
        %v2269 = vmax.f32 %v2221, 0.0
        %v2270 = vmax.f32 %v2224, 0.0
        %v2271 = vmax.f32 %v2229, 0.0
        %v2272 = vmax.f32 %v2232, 0.0
        %v2273 = vmax.f32 %v2237, 0.0
        %v2274 = vmax.f32 %v2240, 0.0
        %s2275 = scalar_lea.vmem [#allocation3], 24
        %2276 = vst.msk [vmem:[%s2275 + $0x1] sm:$0xff] %vm224, %v2243
        %2277 = vst.msk [vmem:[%s2275 + $0x9] sm:$0xff] %vm224, %v2244
        %2278 = vst.msk [vmem:[%s2275 + $0x19] sm:$0xff] %vm224, %v2245
        %2279 = vst.msk [vmem:[%s2275 + $0x21] sm:$0xff] %vm224, %v2246
        %2280 = vst.msk [vmem:[%s2275 + $0x31] sm:$0xff] %vm224, %v2247
        %2281 = vst.msk [vmem:[%s2275 + $0x39] sm:$0xff] %vm224, %v2248
        %2282 = vst.msk [vmem:[%s2275 + $0x49] sm:$0xff] %vm224, %v2249
        %2283 = vst.msk [vmem:[%s2275 + $0x51] sm:$0xff] %vm224, %v2250
        %2284 = vst.msk [vmem:[%s2275 + $0x61] sm:$0xff] %vm224, %v2251
        %2285 = vst.msk [vmem:[%s2275 + $0x69] sm:$0xff] %vm224, %v2252
        %2286 = vst.msk [vmem:[%s2275 + $0x79] sm:$0xff] %vm224, %v2253
        %2287 = vst.msk [vmem:[%s2275 + $0x81] sm:$0xff] %vm224, %v2254
        %2288 = vst.msk [vmem:[%s2275 + $0x91] sm:$0xff] %vm224, %v2255
        %2289 = vst.msk [vmem:[%s2275 + $0x99] sm:$0xff] %vm224, %v2256
        %2290 = vst.msk [vmem:[%s2275 + $0xa9] sm:$0xff] %vm224, %v2257
        %2291 = vst.msk [vmem:[%s2275 + $0xb1] sm:$0xff] %vm224, %v2258
        %2292 = vst.msk [vmem:[%s2275 + $0xc1] sm:$0xff] %vm224, %v2259
        %2293 = vst.msk [vmem:[%s2275 + $0xc9] sm:$0xff] %vm224, %v2260
        %2294 = vst.msk [vmem:[%s2275 + $0xd9] sm:$0xff] %vm224, %v2261
        %2295 = vst.msk [vmem:[%s2275 + $0xe1] sm:$0xff] %vm224, %v2262
        %2296 = vst.msk [vmem:[%s2275 + $0xf1] sm:$0xff] %vm224, %v2263
        %2297 = vst.msk [vmem:[%s2275 + $0xf9] sm:$0xff] %vm224, %v2264
        %2298 = vst.msk [vmem:[%s2275 + $0x109] sm:$0xff] %vm224, %v2265
        %2299 = vst.msk [vmem:[%s2275 + $0x111] sm:$0xff] %vm224, %v2266
        %2300 = vst.msk [vmem:[%s2275 + $0x121] sm:$0xff] %vm224, %v2267
        %2301 = vst.msk [vmem:[%s2275 + $0x129] sm:$0xff] %vm224, %v2268
        %2302 = vst.msk [vmem:[%s2275 + $0x139] sm:$0xff] %vm224, %v2269
        %2303 = vst.msk [vmem:[%s2275 + $0x141] sm:$0xff] %vm224, %v2270
        %2304 = vst.msk [vmem:[%s2275 + $0x151] sm:$0xff] %vm224, %v2271
        %2305 = vst.msk [vmem:[%s2275 + $0x159] sm:$0xff] %vm224, %v2272
        %2306 = vst.msk [vmem:[%s2275 + $0x169] sm:$0xff] %vm224, %v2273
        %2307 = vst.msk [vmem:[%s2275 + $0x171] sm:$0xff] %vm224, %v2274
        %v2308 = vld [vmem:[#allocation3] sm:$0xff]
        %v2309 = vld [vmem:[#allocation3 + $0x8] sm:$0xff]
        %v2310 = vld [vmem:[#allocation3 + $0x18] sm:$0xff]
        %v2311 = vld [vmem:[#allocation3 + $0x20] sm:$0xff]
        %v2312 = vld [vmem:[#allocation3 + $0x30] sm:$0xff]
        %v2313 = vld [vmem:[#allocation3 + $0x38] sm:$0xff]
        %v2314 = vld [vmem:[#allocation3 + $0x48] sm:$0xff]
        %v2315 = vld [vmem:[#allocation3 + $0x50] sm:$0xff]
        %v2316 = vld [vmem:[#allocation3 + $0x60] sm:$0xff]
        %v2317 = vld [vmem:[#allocation3 + $0x68] sm:$0xff]
        %v2318 = vld [vmem:[#allocation3 + $0x78] sm:$0xff]
        %v2319 = vld [vmem:[#allocation3 + $0x80] sm:$0xff]
        %v2320 = vld [vmem:[#allocation3 + $0x90] sm:$0xff]
        %v2321 = vld [vmem:[#allocation3 + $0x98] sm:$0xff]
        %v2322 = vld [vmem:[#allocation3 + $0xa8] sm:$0xff]
        %v2323 = vld [vmem:[#allocation3 + $0xb0] sm:$0xff]
        %v2324 = vld [vmem:[#allocation3 + $0xc0] sm:$0xff]
        %v2325 = vld [vmem:[#allocation3 + $0xc8] sm:$0xff]
        %v2326 = vld [vmem:[#allocation3 + $0xd8] sm:$0xff]
        %v2327 = vld [vmem:[#allocation3 + $0xe0] sm:$0xff]
        %v2328 = vld [vmem:[#allocation3 + $0xf0] sm:$0xff]
        %v2329 = vld [vmem:[#allocation3 + $0xf8] sm:$0xff]
        %v2330 = vld [vmem:[#allocation3 + $0x108] sm:$0xff]
        %v2331 = vld [vmem:[#allocation3 + $0x110] sm:$0xff]
        %v2332 = vld [vmem:[#allocation3 + $0x120] sm:$0xff]
        %v2333 = vld [vmem:[#allocation3 + $0x128] sm:$0xff]
        %v2334 = vld [vmem:[#allocation3 + $0x138] sm:$0xff]
        %v2335 = vld [vmem:[#allocation3 + $0x140] sm:$0xff]
        %v2336 = vld [vmem:[#allocation3 + $0x150] sm:$0xff]
        %v2337 = vld [vmem:[#allocation3 + $0x158] sm:$0xff]
        %v2338 = vld [vmem:[#allocation3 + $0x168] sm:$0xff]
        %v2339 = vld [vmem:[#allocation3 + $0x170] sm:$0xff]
        %v2340 = vld [vmem:[#allocation3 + $0x1] sm:$0xff]
        %v2341 = vld [vmem:[#allocation3 + $0x9] sm:$0xff]
        %v2342 = vld [vmem:[#allocation3 + $0x19] sm:$0xff]
        %v2343 = vld [vmem:[#allocation3 + $0x21] sm:$0xff]
        %v2344 = vld [vmem:[#allocation3 + $0x31] sm:$0xff]
        %v2345 = vld [vmem:[#allocation3 + $0x39] sm:$0xff]
        %v2346 = vld [vmem:[#allocation3 + $0x49] sm:$0xff]
        %v2347 = vld [vmem:[#allocation3 + $0x51] sm:$0xff]
        %v2348 = vld [vmem:[#allocation3 + $0x61] sm:$0xff]
        %v2349 = vld [vmem:[#allocation3 + $0x69] sm:$0xff]
        %v2350 = vld [vmem:[#allocation3 + $0x79] sm:$0xff]
        %v2351 = vld [vmem:[#allocation3 + $0x81] sm:$0xff]
        %v2352 = vld [vmem:[#allocation3 + $0x91] sm:$0xff]
        %v2353 = vld [vmem:[#allocation3 + $0x99] sm:$0xff]
        %v2354 = vld [vmem:[#allocation3 + $0xa9] sm:$0xff]
        %v2355 = vld [vmem:[#allocation3 + $0xb1] sm:$0xff]
        %v2356 = vld [vmem:[#allocation3 + $0xc1] sm:$0xff]
        %v2357 = vld [vmem:[#allocation3 + $0xc9] sm:$0xff]
        %v2358 = vld [vmem:[#allocation3 + $0xd9] sm:$0xff]
        %v2359 = vld [vmem:[#allocation3 + $0xe1] sm:$0xff]
        %v2360 = vld [vmem:[#allocation3 + $0xf1] sm:$0xff]
        %v2361 = vld [vmem:[#allocation3 + $0xf9] sm:$0xff]
        %v2362 = vld [vmem:[#allocation3 + $0x109] sm:$0xff]
        %v2363 = vld [vmem:[#allocation3 + $0x111] sm:$0xff]
        %v2364 = vld [vmem:[#allocation3 + $0x121] sm:$0xff]
        %v2365 = vld [vmem:[#allocation3 + $0x129] sm:$0xff]
        %v2366 = vld [vmem:[#allocation3 + $0x139] sm:$0xff]
        %v2367 = vld [vmem:[#allocation3 + $0x141] sm:$0xff]
        %v2368 = vld [vmem:[#allocation3 + $0x151] sm:$0xff]
        %v2369 = vld [vmem:[#allocation3 + $0x159] sm:$0xff]
        %v2370 = vld [vmem:[#allocation3 + $0x169] sm:$0xff]
        %v2371 = vld [vmem:[#allocation3 + $0x171] sm:$0xff]
        %v2372 = vld [vmem:[#allocation3 + $0x2] sm:$0xff]
        %v2373 = vld [vmem:[#allocation3 + $0xa] sm:$0xff]
        %v2374 = vld [vmem:[#allocation3 + $0x1a] sm:$0xff]
        %v2375 = vld [vmem:[#allocation3 + $0x22] sm:$0xff]
        %v2376 = vld [vmem:[#allocation3 + $0x32] sm:$0xff]
        %v2377 = vld [vmem:[#allocation3 + $0x3a] sm:$0xff]
        %v2378 = vld [vmem:[#allocation3 + $0x4a] sm:$0xff]
        %v2379 = vld [vmem:[#allocation3 + $0x52] sm:$0xff]
        %v2380 = vld [vmem:[#allocation3 + $0x62] sm:$0xff]
        %v2381 = vld [vmem:[#allocation3 + $0x6a] sm:$0xff]
        %v2382 = vld [vmem:[#allocation3 + $0x7a] sm:$0xff]
        %v2383 = vld [vmem:[#allocation3 + $0x82] sm:$0xff]
        %v2384 = vld [vmem:[#allocation3 + $0x92] sm:$0xff]
        %v2385 = vld [vmem:[#allocation3 + $0x9a] sm:$0xff]
        %v2386 = vld [vmem:[#allocation3 + $0xaa] sm:$0xff]
        %v2387 = vld [vmem:[#allocation3 + $0xb2] sm:$0xff]
        %v2388 = vld [vmem:[#allocation3 + $0xc2] sm:$0xff]
        %v2389 = vld [vmem:[#allocation3 + $0xca] sm:$0xff]
        %v2390 = vld [vmem:[#allocation3 + $0xda] sm:$0xff]
        %v2391 = vld [vmem:[#allocation3 + $0xe2] sm:$0xff]
        %v2392 = vld [vmem:[#allocation3 + $0xf2] sm:$0xff]
        %v2393 = vld [vmem:[#allocation3 + $0xfa] sm:$0xff]
        %v2394 = vld [vmem:[#allocation3 + $0x10a] sm:$0xff]
        %v2395 = vld [vmem:[#allocation3 + $0x112] sm:$0xff]
        %v2396 = vld [vmem:[#allocation3 + $0x122] sm:$0xff]
        %v2397 = vld [vmem:[#allocation3 + $0x12a] sm:$0xff]
        %v2398 = vld [vmem:[#allocation3 + $0x13a] sm:$0xff]
        %v2399 = vld [vmem:[#allocation3 + $0x142] sm:$0xff]
        %v2400 = vld [vmem:[#allocation3 + $0x152] sm:$0xff]
        %v2401 = vld [vmem:[#allocation3 + $0x15a] sm:$0xff]
        %v2402 = vld [vmem:[#allocation3 + $0x16a] sm:$0xff]
        %v2403 = vld [vmem:[#allocation3 + $0x172] sm:$0xff]
        %v2404 = vld [vmem:[%s2275] sm:$0xff]
        %v2405 = vld [vmem:[%s2275 + $0x8] sm:$0xff]
        %v2406 = vld [vmem:[%s2275 + $0x18] sm:$0xff]
        %v2407 = vld [vmem:[%s2275 + $0x20] sm:$0xff]
        %v2408 = vld [vmem:[%s2275 + $0x30] sm:$0xff]
        %v2409 = vld [vmem:[%s2275 + $0x38] sm:$0xff]
        %v2410 = vld [vmem:[%s2275 + $0x48] sm:$0xff]
        %v2411 = vld [vmem:[%s2275 + $0x50] sm:$0xff]
        %v2412 = vld [vmem:[%s2275 + $0x60] sm:$0xff]
        %v2413 = vld [vmem:[%s2275 + $0x68] sm:$0xff]
        %v2414 = vld [vmem:[%s2275 + $0x78] sm:$0xff]
        %v2415 = vld [vmem:[%s2275 + $0x80] sm:$0xff]
        %v2416 = vld [vmem:[%s2275 + $0x90] sm:$0xff]
        %v2417 = vld [vmem:[%s2275 + $0x98] sm:$0xff]
        %v2418 = vld [vmem:[%s2275 + $0xa8] sm:$0xff]
        %v2419 = vld [vmem:[%s2275 + $0xb0] sm:$0xff]
        %v2420 = vld [vmem:[%s2275 + $0xc0] sm:$0xff]
        %v2421 = vld [vmem:[%s2275 + $0xc8] sm:$0xff]
        %v2422 = vld [vmem:[%s2275 + $0xd8] sm:$0xff]
        %v2423 = vld [vmem:[%s2275 + $0xe0] sm:$0xff]
        %v2424 = vld [vmem:[%s2275 + $0xf0] sm:$0xff]
        %v2425 = vld [vmem:[%s2275 + $0xf8] sm:$0xff]
        %v2426 = vld [vmem:[%s2275 + $0x108] sm:$0xff]
        %v2427 = vld [vmem:[%s2275 + $0x110] sm:$0xff]
        %v2428 = vld [vmem:[%s2275 + $0x120] sm:$0xff]
        %v2429 = vld [vmem:[%s2275 + $0x128] sm:$0xff]
        %v2430 = vld [vmem:[%s2275 + $0x138] sm:$0xff]
        %v2431 = vld [vmem:[%s2275 + $0x140] sm:$0xff]
        %v2432 = vld [vmem:[%s2275 + $0x150] sm:$0xff]
        %v2433 = vld [vmem:[%s2275 + $0x158] sm:$0xff]
        %v2434 = vld [vmem:[%s2275 + $0x168] sm:$0xff]
        %v2435 = vld [vmem:[%s2275 + $0x170] sm:$0xff]
        %v2436 = vld [vmem:[%s2275 + $0x1] sm:$0xff]
        %v2437 = vld [vmem:[%s2275 + $0x9] sm:$0xff]
        %v2438 = vld [vmem:[%s2275 + $0x19] sm:$0xff]
        %v2439 = vld [vmem:[%s2275 + $0x21] sm:$0xff]
        %v2440 = vld [vmem:[%s2275 + $0x31] sm:$0xff]
        %v2441 = vld [vmem:[%s2275 + $0x39] sm:$0xff]
        %v2442 = vld [vmem:[%s2275 + $0x49] sm:$0xff]
        %v2443 = vld [vmem:[%s2275 + $0x51] sm:$0xff]
        %v2444 = vld [vmem:[%s2275 + $0x61] sm:$0xff]
        %v2445 = vld [vmem:[%s2275 + $0x69] sm:$0xff]
        %v2446 = vld [vmem:[%s2275 + $0x79] sm:$0xff]
        %v2447 = vld [vmem:[%s2275 + $0x81] sm:$0xff]
        %v2448 = vld [vmem:[%s2275 + $0x91] sm:$0xff]
        %v2449 = vld [vmem:[%s2275 + $0x99] sm:$0xff]
        %v2450 = vld [vmem:[%s2275 + $0xa9] sm:$0xff]
        %v2451 = vld [vmem:[%s2275 + $0xb1] sm:$0xff]
        %v2452 = vld [vmem:[%s2275 + $0xc1] sm:$0xff]
        %v2453 = vld [vmem:[%s2275 + $0xc9] sm:$0xff]
        %v2454 = vld [vmem:[%s2275 + $0xd9] sm:$0xff]
        %v2455 = vld [vmem:[%s2275 + $0xe1] sm:$0xff]
        %v2456 = vld [vmem:[%s2275 + $0xf1] sm:$0xff]
        %v2457 = vld [vmem:[%s2275 + $0xf9] sm:$0xff]
        %v2458 = vld [vmem:[%s2275 + $0x109] sm:$0xff]
        %v2459 = vld [vmem:[%s2275 + $0x111] sm:$0xff]
        %v2460 = vld [vmem:[%s2275 + $0x121] sm:$0xff]
        %v2461 = vld [vmem:[%s2275 + $0x129] sm:$0xff]
        %v2462 = vld [vmem:[%s2275 + $0x139] sm:$0xff]
        %v2463 = vld [vmem:[%s2275 + $0x141] sm:$0xff]
        %v2464 = vld [vmem:[%s2275 + $0x151] sm:$0xff]
        %v2465 = vld [vmem:[%s2275 + $0x159] sm:$0xff]
        %v2466 = vld [vmem:[%s2275 + $0x169] sm:$0xff]
        %v2467 = vld [vmem:[%s2275 + $0x171] sm:$0xff]
        %v2468 = vld [vmem:[%s2275 + $0x2] sm:$0xff]
        %v2469 = vld [vmem:[%s2275 + $0xa] sm:$0xff]
        %v2470 = vld [vmem:[%s2275 + $0x1a] sm:$0xff]
        %v2471 = vld [vmem:[%s2275 + $0x22] sm:$0xff]
        %v2472 = vld [vmem:[%s2275 + $0x32] sm:$0xff]
        %v2473 = vld [vmem:[%s2275 + $0x3a] sm:$0xff]
        %v2474 = vld [vmem:[%s2275 + $0x4a] sm:$0xff]
        %v2475 = vld [vmem:[%s2275 + $0x52] sm:$0xff]
        %v2476 = vld [vmem:[%s2275 + $0x62] sm:$0xff]
        %v2477 = vld [vmem:[%s2275 + $0x6a] sm:$0xff]
        %v2478 = vld [vmem:[%s2275 + $0x7a] sm:$0xff]
        %v2479 = vld [vmem:[%s2275 + $0x82] sm:$0xff]
        %v2480 = vld [vmem:[%s2275 + $0x92] sm:$0xff]
        %v2481 = vld [vmem:[%s2275 + $0x9a] sm:$0xff]
        %v2482 = vld [vmem:[%s2275 + $0xaa] sm:$0xff]
        %v2483 = vld [vmem:[%s2275 + $0xb2] sm:$0xff]
        %v2484 = vld [vmem:[%s2275 + $0xc2] sm:$0xff]
        %v2485 = vld [vmem:[%s2275 + $0xca] sm:$0xff]
        %v2486 = vld [vmem:[%s2275 + $0xda] sm:$0xff]
        %v2487 = vld [vmem:[%s2275 + $0xe2] sm:$0xff]
        %v2488 = vld [vmem:[%s2275 + $0xf2] sm:$0xff]
        %v2489 = vld [vmem:[%s2275 + $0xfa] sm:$0xff]
        %v2490 = vld [vmem:[%s2275 + $0x10a] sm:$0xff]
        %v2491 = vld [vmem:[%s2275 + $0x112] sm:$0xff]
        %v2492 = vld [vmem:[%s2275 + $0x122] sm:$0xff]
        %v2493 = vld [vmem:[%s2275 + $0x12a] sm:$0xff]
        %v2494 = vld [vmem:[%s2275 + $0x13a] sm:$0xff]
        %v2495 = vld [vmem:[%s2275 + $0x142] sm:$0xff]
        %v2496 = vld [vmem:[%s2275 + $0x152] sm:$0xff]
        %v2497 = vld [vmem:[%s2275 + $0x15a] sm:$0xff]
        %v2498 = vld [vmem:[%s2275 + $0x16a] sm:$0xff]
        %v2499 = vld [vmem:[%s2275 + $0x172] sm:$0xff]
        %s2500 = scalar_lea.vmem [#allocation3], 48
        %v2501 = vld [vmem:[%s2500] sm:$0xff]
        %v2502 = vld [vmem:[%s2500 + $0x8] sm:$0xff]
        %v2503 = vld [vmem:[%s2500 + $0x18] sm:$0xff]
        %v2504 = vld [vmem:[%s2500 + $0x20] sm:$0xff]
        %v2505 = vld [vmem:[%s2500 + $0x30] sm:$0xff]
        %v2506 = vld [vmem:[%s2500 + $0x38] sm:$0xff]
        %v2507 = vld [vmem:[%s2500 + $0x48] sm:$0xff]
        %v2508 = vld [vmem:[%s2500 + $0x50] sm:$0xff]
        %v2509 = vld [vmem:[%s2500 + $0x60] sm:$0xff]
        %v2510 = vld [vmem:[%s2500 + $0x68] sm:$0xff]
        %v2511 = vld [vmem:[%s2500 + $0x78] sm:$0xff]
        %v2512 = vld [vmem:[%s2500 + $0x80] sm:$0xff]
        %v2513 = vld [vmem:[%s2500 + $0x90] sm:$0xff]
        %v2514 = vld [vmem:[%s2500 + $0x98] sm:$0xff]
        %v2515 = vld [vmem:[%s2500 + $0xa8] sm:$0xff]
        %v2516 = vld [vmem:[%s2500 + $0xb0] sm:$0xff]
        %v2517 = vld [vmem:[%s2500 + $0xc0] sm:$0xff]
        %v2518 = vld [vmem:[%s2500 + $0xc8] sm:$0xff]
        %v2519 = vld [vmem:[%s2500 + $0xd8] sm:$0xff]
        %v2520 = vld [vmem:[%s2500 + $0xe0] sm:$0xff]
        %v2521 = vld [vmem:[%s2500 + $0xf0] sm:$0xff]
        %v2522 = vld [vmem:[%s2500 + $0xf8] sm:$0xff]
        %v2523 = vld [vmem:[%s2500 + $0x108] sm:$0xff]
        %v2524 = vld [vmem:[%s2500 + $0x110] sm:$0xff]
        %v2525 = vld [vmem:[%s2500 + $0x120] sm:$0xff]
        %v2526 = vld [vmem:[%s2500 + $0x128] sm:$0xff]
        %v2527 = vld [vmem:[%s2500 + $0x138] sm:$0xff]
        %v2528 = vld [vmem:[%s2500 + $0x140] sm:$0xff]
        %v2529 = vld [vmem:[%s2500 + $0x150] sm:$0xff]
        %v2530 = vld [vmem:[%s2500 + $0x158] sm:$0xff]
        %v2531 = vld [vmem:[%s2500 + $0x168] sm:$0xff]
        %v2532 = vld [vmem:[%s2500 + $0x170] sm:$0xff]
        %v2533 = vld [vmem:[%s2500 + $0x1] sm:$0xff]
        %v2534 = vld [vmem:[%s2500 + $0x9] sm:$0xff]
        %v2535 = vld [vmem:[%s2500 + $0x19] sm:$0xff]
        %v2536 = vld [vmem:[%s2500 + $0x21] sm:$0xff]
        %v2537 = vld [vmem:[%s2500 + $0x31] sm:$0xff]
        %v2538 = vld [vmem:[%s2500 + $0x39] sm:$0xff]
        %v2539 = vld [vmem:[%s2500 + $0x49] sm:$0xff]
        %v2540 = vld [vmem:[%s2500 + $0x51] sm:$0xff]
        %v2541 = vld [vmem:[%s2500 + $0x61] sm:$0xff]
        %v2542 = vld [vmem:[%s2500 + $0x69] sm:$0xff]
        %v2543 = vld [vmem:[%s2500 + $0x79] sm:$0xff]
        %v2544 = vld [vmem:[%s2500 + $0x81] sm:$0xff]
        %v2545 = vld [vmem:[%s2500 + $0x91] sm:$0xff]
        %v2546 = vld [vmem:[%s2500 + $0x99] sm:$0xff]
        %v2547 = vld [vmem:[%s2500 + $0xa9] sm:$0xff]
        %v2548 = vld [vmem:[%s2500 + $0xb1] sm:$0xff]
        %v2549 = vld [vmem:[%s2500 + $0xc1] sm:$0xff]
        %v2550 = vld [vmem:[%s2500 + $0xc9] sm:$0xff]
        %v2551 = vld [vmem:[%s2500 + $0xd9] sm:$0xff]
        %v2552 = vld [vmem:[%s2500 + $0xe1] sm:$0xff]
        %v2553 = vld [vmem:[%s2500 + $0xf1] sm:$0xff]
        %v2554 = vld [vmem:[%s2500 + $0xf9] sm:$0xff]
        %v2555 = vld [vmem:[%s2500 + $0x109] sm:$0xff]
        %v2556 = vld [vmem:[%s2500 + $0x111] sm:$0xff]
        %v2557 = vld [vmem:[%s2500 + $0x121] sm:$0xff]
        %v2558 = vld [vmem:[%s2500 + $0x129] sm:$0xff]
        %v2559 = vld [vmem:[%s2500 + $0x139] sm:$0xff]
        %v2560 = vld [vmem:[%s2500 + $0x141] sm:$0xff]
        %v2561 = vld [vmem:[%s2500 + $0x151] sm:$0xff]
        %v2562 = vld [vmem:[%s2500 + $0x159] sm:$0xff]
        %v2563 = vld [vmem:[%s2500 + $0x169] sm:$0xff]
        %v2564 = vld [vmem:[%s2500 + $0x171] sm:$0xff]
        %v2565 = vld [vmem:[%s2500 + $0x2] sm:$0xff]
        %v2566 = vld [vmem:[%s2500 + $0xa] sm:$0xff]
        %v2567 = vld [vmem:[%s2500 + $0x1a] sm:$0xff]
        %v2568 = vld [vmem:[%s2500 + $0x22] sm:$0xff]
        %v2569 = vld [vmem:[%s2500 + $0x32] sm:$0xff]
        %v2570 = vld [vmem:[%s2500 + $0x3a] sm:$0xff]
        %v2571 = vld [vmem:[%s2500 + $0x4a] sm:$0xff]
        %v2572 = vld [vmem:[%s2500 + $0x52] sm:$0xff]
        %v2573 = vld [vmem:[%s2500 + $0x62] sm:$0xff]
        %v2574 = vld [vmem:[%s2500 + $0x6a] sm:$0xff]
        %v2575 = vld [vmem:[%s2500 + $0x7a] sm:$0xff]
        %v2576 = vld [vmem:[%s2500 + $0x82] sm:$0xff]
        %v2577 = vld [vmem:[%s2500 + $0x92] sm:$0xff]
        %v2578 = vld [vmem:[%s2500 + $0x9a] sm:$0xff]
        %v2579 = vld [vmem:[%s2500 + $0xaa] sm:$0xff]
        %v2580 = vld [vmem:[%s2500 + $0xb2] sm:$0xff]
        %v2581 = vld [vmem:[%s2500 + $0xc2] sm:$0xff]
        %v2582 = vld [vmem:[%s2500 + $0xca] sm:$0xff]
        %v2583 = vld [vmem:[%s2500 + $0xda] sm:$0xff]
        %v2584 = vld [vmem:[%s2500 + $0xe2] sm:$0xff]
        %v2585 = vld [vmem:[%s2500 + $0xf2] sm:$0xff]
        %v2586 = vld [vmem:[%s2500 + $0xfa] sm:$0xff]
        %v2587 = vld [vmem:[%s2500 + $0x10a] sm:$0xff]
        %v2588 = vld [vmem:[%s2500 + $0x112] sm:$0xff]
        %v2589 = vld [vmem:[%s2500 + $0x122] sm:$0xff]
        %v2590 = vld [vmem:[%s2500 + $0x12a] sm:$0xff]
        %v2591 = vld [vmem:[%s2500 + $0x13a] sm:$0xff]
        %v2592 = vld [vmem:[%s2500 + $0x142] sm:$0xff]
        %v2593 = vld [vmem:[%s2500 + $0x152] sm:$0xff]
        %v2594 = vld [vmem:[%s2500 + $0x15a] sm:$0xff]
        %v2595 = vld [vmem:[%s2500 + $0x16a] sm:$0xff]
        %v2596 = vld [vmem:[%s2500 + $0x172] sm:$0xff]
        %2629 = vrot.lane.b32.xlu0 %v2340, 4
        %v2630 = vpop.permute.xlu0 %2629
        %2631 = vrot.lane.b32.xlu0 %v2341, 4
        %v2632 = vpop.permute.xlu0 %2631
        %2633 = vrot.lane.b32.xlu0 %v2342, 4
        %v2634 = vpop.permute.xlu0 %2633
        %2635 = vrot.lane.b32.xlu0 %v2343, 4
        %v2636 = vpop.permute.xlu0 %2635
        %2637 = vrot.lane.b32.xlu0 %v2344, 4
        %v2638 = vpop.permute.xlu0 %2637
        %2639 = vrot.lane.b32.xlu0 %v2345, 4
        %v2640 = vpop.permute.xlu0 %2639
        %2641 = vrot.lane.b32.xlu0 %v2346, 4
        %v2642 = vpop.permute.xlu0 %2641
        %2643 = vrot.lane.b32.xlu0 %v2347, 4
        %v2644 = vpop.permute.xlu0 %2643
        %2645 = vrot.lane.b32.xlu0 %v2348, 4
        %v2646 = vpop.permute.xlu0 %2645
        %2647 = vrot.lane.b32.xlu0 %v2349, 4
        %v2648 = vpop.permute.xlu0 %2647
        %2649 = vrot.lane.b32.xlu0 %v2350, 4
        %v2650 = vpop.permute.xlu0 %2649
        %2651 = vrot.lane.b32.xlu0 %v2351, 4
        %v2652 = vpop.permute.xlu0 %2651
        %2653 = vrot.lane.b32.xlu0 %v2352, 4
        %v2654 = vpop.permute.xlu0 %2653
        %2655 = vrot.lane.b32.xlu0 %v2353, 4
        %v2656 = vpop.permute.xlu0 %2655
        %2657 = vrot.lane.b32.xlu0 %v2354, 4
        %v2658 = vpop.permute.xlu0 %2657
        %2659 = vrot.lane.b32.xlu0 %v2355, 4
        %v2660 = vpop.permute.xlu0 %2659
        %2661 = vrot.lane.b32.xlu0 %v2356, 4
        %v2662 = vpop.permute.xlu0 %2661
        %2663 = vrot.lane.b32.xlu0 %v2357, 4
        %v2664 = vpop.permute.xlu0 %2663
        %2665 = vrot.lane.b32.xlu0 %v2358, 4
        %v2666 = vpop.permute.xlu0 %2665
        %2667 = vrot.lane.b32.xlu0 %v2359, 4
        %v2668 = vpop.permute.xlu0 %2667
        %2669 = vrot.lane.b32.xlu0 %v2360, 4
        %v2670 = vpop.permute.xlu0 %2669
        %2671 = vrot.lane.b32.xlu0 %v2361, 4
        %v2672 = vpop.permute.xlu0 %2671
        %2673 = vrot.lane.b32.xlu0 %v2362, 4
        %v2674 = vpop.permute.xlu0 %2673
        %2675 = vrot.lane.b32.xlu0 %v2363, 4
        %v2676 = vpop.permute.xlu0 %2675
        %2677 = vrot.lane.b32.xlu0 %v2364, 4
        %v2678 = vpop.permute.xlu0 %2677
        %2679 = vrot.lane.b32.xlu0 %v2365, 4
        %v2680 = vpop.permute.xlu0 %2679
        %2681 = vrot.lane.b32.xlu0 %v2366, 4
        %v2682 = vpop.permute.xlu0 %2681
        %2683 = vrot.lane.b32.xlu0 %v2367, 4
        %v2684 = vpop.permute.xlu0 %2683
        %2685 = vrot.lane.b32.xlu0 %v2368, 4
        %v2686 = vpop.permute.xlu0 %2685
        %2687 = vrot.lane.b32.xlu0 %v2369, 4
        %v2688 = vpop.permute.xlu0 %2687
        %2689 = vrot.lane.b32.xlu0 %v2370, 4
        %v2690 = vpop.permute.xlu0 %2689
        %2691 = vrot.lane.b32.xlu0 %v2371, 4
        %v2692 = vpop.permute.xlu0 %2691
        %2757 = vrot.lane.b32.xlu0 %v2372, 8
        %v2758 = vpop.permute.xlu0 %2757
        %2759 = vrot.lane.b32.xlu0 %v2373, 8
        %v2760 = vpop.permute.xlu0 %2759
        %2761 = vrot.lane.b32.xlu0 %v2374, 8
        %v2762 = vpop.permute.xlu0 %2761
        %2763 = vrot.lane.b32.xlu0 %v2375, 8
        %v2764 = vpop.permute.xlu0 %2763
        %2765 = vrot.lane.b32.xlu0 %v2376, 8
        %v2766 = vpop.permute.xlu0 %2765
        %2767 = vrot.lane.b32.xlu0 %v2377, 8
        %v2768 = vpop.permute.xlu0 %2767
        %2769 = vrot.lane.b32.xlu0 %v2378, 8
        %v2770 = vpop.permute.xlu0 %2769
        %2771 = vrot.lane.b32.xlu0 %v2379, 8
        %v2772 = vpop.permute.xlu0 %2771
        %2773 = vrot.lane.b32.xlu0 %v2380, 8
        %v2774 = vpop.permute.xlu0 %2773
        %2775 = vrot.lane.b32.xlu0 %v2381, 8
        %v2776 = vpop.permute.xlu0 %2775
        %2777 = vrot.lane.b32.xlu0 %v2382, 8
        %v2778 = vpop.permute.xlu0 %2777
        %2779 = vrot.lane.b32.xlu0 %v2383, 8
        %v2780 = vpop.permute.xlu0 %2779
        %2781 = vrot.lane.b32.xlu0 %v2384, 8
        %v2782 = vpop.permute.xlu0 %2781
        %2783 = vrot.lane.b32.xlu0 %v2385, 8
        %v2784 = vpop.permute.xlu0 %2783
        %2785 = vrot.lane.b32.xlu0 %v2386, 8
        %v2786 = vpop.permute.xlu0 %2785
        %2787 = vrot.lane.b32.xlu0 %v2387, 8
        %v2788 = vpop.permute.xlu0 %2787
        %2789 = vrot.lane.b32.xlu0 %v2388, 8
        %v2790 = vpop.permute.xlu0 %2789
        %2791 = vrot.lane.b32.xlu0 %v2389, 8
        %v2792 = vpop.permute.xlu0 %2791
        %2793 = vrot.lane.b32.xlu0 %v2390, 8
        %v2794 = vpop.permute.xlu0 %2793
        %2795 = vrot.lane.b32.xlu0 %v2391, 8
        %v2796 = vpop.permute.xlu0 %2795
        %2797 = vrot.lane.b32.xlu0 %v2392, 8
        %v2798 = vpop.permute.xlu0 %2797
        %2799 = vrot.lane.b32.xlu0 %v2393, 8
        %v2800 = vpop.permute.xlu0 %2799
        %2801 = vrot.lane.b32.xlu0 %v2394, 8
        %v2802 = vpop.permute.xlu0 %2801
        %2803 = vrot.lane.b32.xlu0 %v2395, 8
        %v2804 = vpop.permute.xlu0 %2803
        %2805 = vrot.lane.b32.xlu0 %v2396, 8
        %v2806 = vpop.permute.xlu0 %2805
        %2807 = vrot.lane.b32.xlu0 %v2397, 8
        %v2808 = vpop.permute.xlu0 %2807
        %2809 = vrot.lane.b32.xlu0 %v2398, 8
        %v2810 = vpop.permute.xlu0 %2809
        %2811 = vrot.lane.b32.xlu0 %v2399, 8
        %v2812 = vpop.permute.xlu0 %2811
        %2813 = vrot.lane.b32.xlu0 %v2400, 8
        %v2814 = vpop.permute.xlu0 %2813
        %2815 = vrot.lane.b32.xlu0 %v2401, 8
        %v2816 = vpop.permute.xlu0 %2815
        %2817 = vrot.lane.b32.xlu0 %v2402, 8
        %v2818 = vpop.permute.xlu0 %2817
        %2819 = vrot.lane.b32.xlu0 %v2403, 8
        %v2820 = vpop.permute.xlu0 %2819
        %2885 = vrot.lane.b32.xlu0 %v2404, 12
        %v2886 = vpop.permute.xlu0 %2885
        %2887 = vrot.lane.b32.xlu0 %v2405, 12
        %v2888 = vpop.permute.xlu0 %2887
        %2889 = vrot.lane.b32.xlu0 %v2406, 12
        %v2890 = vpop.permute.xlu0 %2889
        %2891 = vrot.lane.b32.xlu0 %v2407, 12
        %v2892 = vpop.permute.xlu0 %2891
        %2893 = vrot.lane.b32.xlu0 %v2408, 12
        %v2894 = vpop.permute.xlu0 %2893
        %2895 = vrot.lane.b32.xlu0 %v2409, 12
        %v2896 = vpop.permute.xlu0 %2895
        %2897 = vrot.lane.b32.xlu0 %v2410, 12
        %v2898 = vpop.permute.xlu0 %2897
        %2899 = vrot.lane.b32.xlu0 %v2411, 12
        %v2900 = vpop.permute.xlu0 %2899
        %2901 = vrot.lane.b32.xlu0 %v2412, 12
        %v2902 = vpop.permute.xlu0 %2901
        %2903 = vrot.lane.b32.xlu0 %v2413, 12
        %v2904 = vpop.permute.xlu0 %2903
        %2905 = vrot.lane.b32.xlu0 %v2414, 12
        %v2906 = vpop.permute.xlu0 %2905
        %2907 = vrot.lane.b32.xlu0 %v2415, 12
        %v2908 = vpop.permute.xlu0 %2907
        %2909 = vrot.lane.b32.xlu0 %v2416, 12
        %v2910 = vpop.permute.xlu0 %2909
        %2911 = vrot.lane.b32.xlu0 %v2417, 12
        %v2912 = vpop.permute.xlu0 %2911
        %2913 = vrot.lane.b32.xlu0 %v2418, 12
        %v2914 = vpop.permute.xlu0 %2913
        %2915 = vrot.lane.b32.xlu0 %v2419, 12
        %v2916 = vpop.permute.xlu0 %2915
        %2917 = vrot.lane.b32.xlu0 %v2420, 12
        %v2918 = vpop.permute.xlu0 %2917
        %2919 = vrot.lane.b32.xlu0 %v2421, 12
        %v2920 = vpop.permute.xlu0 %2919
        %2921 = vrot.lane.b32.xlu0 %v2422, 12
        %v2922 = vpop.permute.xlu0 %2921
        %2923 = vrot.lane.b32.xlu0 %v2423, 12
        %v2924 = vpop.permute.xlu0 %2923
        %2925 = vrot.lane.b32.xlu0 %v2424, 12
        %v2926 = vpop.permute.xlu0 %2925
        %2927 = vrot.lane.b32.xlu0 %v2425, 12
        %v2928 = vpop.permute.xlu0 %2927
        %2929 = vrot.lane.b32.xlu0 %v2426, 12
        %v2930 = vpop.permute.xlu0 %2929
        %2931 = vrot.lane.b32.xlu0 %v2427, 12
        %v2932 = vpop.permute.xlu0 %2931
        %2933 = vrot.lane.b32.xlu0 %v2428, 12
        %v2934 = vpop.permute.xlu0 %2933
        %2935 = vrot.lane.b32.xlu0 %v2429, 12
        %v2936 = vpop.permute.xlu0 %2935
        %2937 = vrot.lane.b32.xlu0 %v2430, 12
        %v2938 = vpop.permute.xlu0 %2937
        %2939 = vrot.lane.b32.xlu0 %v2431, 12
        %v2940 = vpop.permute.xlu0 %2939
        %2941 = vrot.lane.b32.xlu0 %v2432, 12
        %v2942 = vpop.permute.xlu0 %2941
        %2943 = vrot.lane.b32.xlu0 %v2433, 12
        %v2944 = vpop.permute.xlu0 %2943
        %2945 = vrot.lane.b32.xlu0 %v2434, 12
        %v2946 = vpop.permute.xlu0 %2945
        %2947 = vrot.lane.b32.xlu0 %v2435, 12
        %v2948 = vpop.permute.xlu0 %2947
        %3013 = vrot.lane.b32.xlu0 %v2436, 16
        %v3014 = vpop.permute.xlu0 %3013
        %3015 = vrot.lane.b32.xlu0 %v2437, 16
        %v3016 = vpop.permute.xlu0 %3015
        %3017 = vrot.lane.b32.xlu0 %v2438, 16
        %v3018 = vpop.permute.xlu0 %3017
        %3019 = vrot.lane.b32.xlu0 %v2439, 16
        %v3020 = vpop.permute.xlu0 %3019
        %3021 = vrot.lane.b32.xlu0 %v2440, 16
        %v3022 = vpop.permute.xlu0 %3021
        %3023 = vrot.lane.b32.xlu0 %v2441, 16
        %v3024 = vpop.permute.xlu0 %3023
        %3025 = vrot.lane.b32.xlu0 %v2442, 16
        %v3026 = vpop.permute.xlu0 %3025
        %3027 = vrot.lane.b32.xlu0 %v2443, 16
        %v3028 = vpop.permute.xlu0 %3027
        %3029 = vrot.lane.b32.xlu0 %v2444, 16
        %v3030 = vpop.permute.xlu0 %3029
        %3031 = vrot.lane.b32.xlu0 %v2445, 16
        %v3032 = vpop.permute.xlu0 %3031
        %3033 = vrot.lane.b32.xlu0 %v2446, 16
        %v3034 = vpop.permute.xlu0 %3033
        %3035 = vrot.lane.b32.xlu0 %v2447, 16
        %v3036 = vpop.permute.xlu0 %3035
        %3037 = vrot.lane.b32.xlu0 %v2448, 16
        %v3038 = vpop.permute.xlu0 %3037
        %3039 = vrot.lane.b32.xlu0 %v2449, 16
        %v3040 = vpop.permute.xlu0 %3039
        %3041 = vrot.lane.b32.xlu0 %v2450, 16
        %v3042 = vpop.permute.xlu0 %3041
        %3043 = vrot.lane.b32.xlu0 %v2451, 16
        %v3044 = vpop.permute.xlu0 %3043
        %3045 = vrot.lane.b32.xlu0 %v2452, 16
        %v3046 = vpop.permute.xlu0 %3045
        %3047 = vrot.lane.b32.xlu0 %v2453, 16
        %v3048 = vpop.permute.xlu0 %3047
        %3049 = vrot.lane.b32.xlu0 %v2454, 16
        %v3050 = vpop.permute.xlu0 %3049
        %3051 = vrot.lane.b32.xlu0 %v2455, 16
        %v3052 = vpop.permute.xlu0 %3051
        %3053 = vrot.lane.b32.xlu0 %v2456, 16
        %v3054 = vpop.permute.xlu0 %3053
        %3055 = vrot.lane.b32.xlu0 %v2457, 16
        %v3056 = vpop.permute.xlu0 %3055
        %3057 = vrot.lane.b32.xlu0 %v2458, 16
        %v3058 = vpop.permute.xlu0 %3057
        %3059 = vrot.lane.b32.xlu0 %v2459, 16
        %v3060 = vpop.permute.xlu0 %3059
        %3061 = vrot.lane.b32.xlu0 %v2460, 16
        %v3062 = vpop.permute.xlu0 %3061
        %3063 = vrot.lane.b32.xlu0 %v2461, 16
        %v3064 = vpop.permute.xlu0 %3063
        %3065 = vrot.lane.b32.xlu0 %v2462, 16
        %v3066 = vpop.permute.xlu0 %3065
        %3067 = vrot.lane.b32.xlu0 %v2463, 16
        %v3068 = vpop.permute.xlu0 %3067
        %3069 = vrot.lane.b32.xlu0 %v2464, 16
        %v3070 = vpop.permute.xlu0 %3069
        %3071 = vrot.lane.b32.xlu0 %v2465, 16
        %v3072 = vpop.permute.xlu0 %3071
        %3073 = vrot.lane.b32.xlu0 %v2466, 16
        %v3074 = vpop.permute.xlu0 %3073
        %3075 = vrot.lane.b32.xlu0 %v2467, 16
        %v3076 = vpop.permute.xlu0 %3075
        %3141 = vrot.lane.b32.xlu0 %v2468, 20
        %v3142 = vpop.permute.xlu0 %3141
        %3143 = vrot.lane.b32.xlu0 %v2469, 20
        %v3144 = vpop.permute.xlu0 %3143
        %3145 = vrot.lane.b32.xlu0 %v2470, 20
        %v3146 = vpop.permute.xlu0 %3145
        %3147 = vrot.lane.b32.xlu0 %v2471, 20
        %v3148 = vpop.permute.xlu0 %3147
        %3149 = vrot.lane.b32.xlu0 %v2472, 20
        %v3150 = vpop.permute.xlu0 %3149
        %3151 = vrot.lane.b32.xlu0 %v2473, 20
        %v3152 = vpop.permute.xlu0 %3151
        %3153 = vrot.lane.b32.xlu0 %v2474, 20
        %v3154 = vpop.permute.xlu0 %3153
        %3155 = vrot.lane.b32.xlu0 %v2475, 20
        %v3156 = vpop.permute.xlu0 %3155
        %3157 = vrot.lane.b32.xlu0 %v2476, 20
        %v3158 = vpop.permute.xlu0 %3157
        %3159 = vrot.lane.b32.xlu0 %v2477, 20
        %v3160 = vpop.permute.xlu0 %3159
        %3161 = vrot.lane.b32.xlu0 %v2478, 20
        %v3162 = vpop.permute.xlu0 %3161
        %3163 = vrot.lane.b32.xlu0 %v2479, 20
        %v3164 = vpop.permute.xlu0 %3163
        %3165 = vrot.lane.b32.xlu0 %v2480, 20
        %v3166 = vpop.permute.xlu0 %3165
        %3167 = vrot.lane.b32.xlu0 %v2481, 20
        %v3168 = vpop.permute.xlu0 %3167
        %3169 = vrot.lane.b32.xlu0 %v2482, 20
        %v3170 = vpop.permute.xlu0 %3169
        %3171 = vrot.lane.b32.xlu0 %v2483, 20
        %v3172 = vpop.permute.xlu0 %3171
        %3173 = vrot.lane.b32.xlu0 %v2484, 20
        %v3174 = vpop.permute.xlu0 %3173
        %3175 = vrot.lane.b32.xlu0 %v2485, 20
        %v3176 = vpop.permute.xlu0 %3175
        %3177 = vrot.lane.b32.xlu0 %v2486, 20
        %v3178 = vpop.permute.xlu0 %3177
        %3179 = vrot.lane.b32.xlu0 %v2487, 20
        %v3180 = vpop.permute.xlu0 %3179
        %3181 = vrot.lane.b32.xlu0 %v2488, 20
        %v3182 = vpop.permute.xlu0 %3181
        %3183 = vrot.lane.b32.xlu0 %v2489, 20
        %v3184 = vpop.permute.xlu0 %3183
        %3185 = vrot.lane.b32.xlu0 %v2490, 20
        %v3186 = vpop.permute.xlu0 %3185
        %3187 = vrot.lane.b32.xlu0 %v2491, 20
        %v3188 = vpop.permute.xlu0 %3187
        %3189 = vrot.lane.b32.xlu0 %v2492, 20
        %v3190 = vpop.permute.xlu0 %3189
        %3191 = vrot.lane.b32.xlu0 %v2493, 20
        %v3192 = vpop.permute.xlu0 %3191
        %3193 = vrot.lane.b32.xlu0 %v2494, 20
        %v3194 = vpop.permute.xlu0 %3193
        %3195 = vrot.lane.b32.xlu0 %v2495, 20
        %v3196 = vpop.permute.xlu0 %3195
        %3197 = vrot.lane.b32.xlu0 %v2496, 20
        %v3198 = vpop.permute.xlu0 %3197
        %3199 = vrot.lane.b32.xlu0 %v2497, 20
        %v3200 = vpop.permute.xlu0 %3199
        %3201 = vrot.lane.b32.xlu0 %v2498, 20
        %v3202 = vpop.permute.xlu0 %3201
        %3203 = vrot.lane.b32.xlu0 %v2499, 20
        %v3204 = vpop.permute.xlu0 %3203
        %3269 = vrot.lane.b32.xlu0 %v2501, 24
        %v3270 = vpop.permute.xlu0 %3269
        %3271 = vrot.lane.b32.xlu0 %v2502, 24
        %v3272 = vpop.permute.xlu0 %3271
        %3273 = vrot.lane.b32.xlu0 %v2503, 24
        %v3274 = vpop.permute.xlu0 %3273
        %3275 = vrot.lane.b32.xlu0 %v2504, 24
        %v3276 = vpop.permute.xlu0 %3275
        %3277 = vrot.lane.b32.xlu0 %v2505, 24
        %v3278 = vpop.permute.xlu0 %3277
        %3279 = vrot.lane.b32.xlu0 %v2506, 24
        %v3280 = vpop.permute.xlu0 %3279
        %3281 = vrot.lane.b32.xlu0 %v2507, 24
        %v3282 = vpop.permute.xlu0 %3281
        %3283 = vrot.lane.b32.xlu0 %v2508, 24
        %v3284 = vpop.permute.xlu0 %3283
        %3285 = vrot.lane.b32.xlu0 %v2509, 24
        %v3286 = vpop.permute.xlu0 %3285
        %3287 = vrot.lane.b32.xlu0 %v2510, 24
        %v3288 = vpop.permute.xlu0 %3287
        %3289 = vrot.lane.b32.xlu0 %v2511, 24
        %v3290 = vpop.permute.xlu0 %3289
        %3291 = vrot.lane.b32.xlu0 %v2512, 24
        %v3292 = vpop.permute.xlu0 %3291
        %3293 = vrot.lane.b32.xlu0 %v2513, 24
        %v3294 = vpop.permute.xlu0 %3293
        %3295 = vrot.lane.b32.xlu0 %v2514, 24
        %v3296 = vpop.permute.xlu0 %3295
        %3297 = vrot.lane.b32.xlu0 %v2515, 24
        %v3298 = vpop.permute.xlu0 %3297
        %3299 = vrot.lane.b32.xlu0 %v2516, 24
        %v3300 = vpop.permute.xlu0 %3299
        %3301 = vrot.lane.b32.xlu0 %v2517, 24
        %v3302 = vpop.permute.xlu0 %3301
        %3303 = vrot.lane.b32.xlu0 %v2518, 24
        %v3304 = vpop.permute.xlu0 %3303
        %3305 = vrot.lane.b32.xlu0 %v2519, 24
        %v3306 = vpop.permute.xlu0 %3305
        %3307 = vrot.lane.b32.xlu0 %v2520, 24
        %v3308 = vpop.permute.xlu0 %3307
        %3309 = vrot.lane.b32.xlu0 %v2521, 24
        %v3310 = vpop.permute.xlu0 %3309
        %3311 = vrot.lane.b32.xlu0 %v2522, 24
        %v3312 = vpop.permute.xlu0 %3311
        %3313 = vrot.lane.b32.xlu0 %v2523, 24
        %v3314 = vpop.permute.xlu0 %3313
        %3315 = vrot.lane.b32.xlu0 %v2524, 24
        %v3316 = vpop.permute.xlu0 %3315
        %3317 = vrot.lane.b32.xlu0 %v2525, 24
        %v3318 = vpop.permute.xlu0 %3317
        %3319 = vrot.lane.b32.xlu0 %v2526, 24
        %v3320 = vpop.permute.xlu0 %3319
        %3321 = vrot.lane.b32.xlu0 %v2527, 24
        %v3322 = vpop.permute.xlu0 %3321
        %3323 = vrot.lane.b32.xlu0 %v2528, 24
        %v3324 = vpop.permute.xlu0 %3323
        %3325 = vrot.lane.b32.xlu0 %v2529, 24
        %v3326 = vpop.permute.xlu0 %3325
        %3327 = vrot.lane.b32.xlu0 %v2530, 24
        %v3328 = vpop.permute.xlu0 %3327
        %3329 = vrot.lane.b32.xlu0 %v2531, 24
        %v3330 = vpop.permute.xlu0 %3329
        %3331 = vrot.lane.b32.xlu0 %v2532, 24
        %v3332 = vpop.permute.xlu0 %3331
        %3397 = vrot.lane.b32.xlu0 %v2533, 28
        %v3398 = vpop.permute.xlu0 %3397
        %3399 = vrot.lane.b32.xlu0 %v2534, 28
        %v3400 = vpop.permute.xlu0 %3399
        %3401 = vrot.lane.b32.xlu0 %v2535, 28
        %v3402 = vpop.permute.xlu0 %3401
        %3403 = vrot.lane.b32.xlu0 %v2536, 28
        %v3404 = vpop.permute.xlu0 %3403
        %3405 = vrot.lane.b32.xlu0 %v2537, 28
        %v3406 = vpop.permute.xlu0 %3405
        %3407 = vrot.lane.b32.xlu0 %v2538, 28
        %v3408 = vpop.permute.xlu0 %3407
        %3409 = vrot.lane.b32.xlu0 %v2539, 28
        %v3410 = vpop.permute.xlu0 %3409
        %3411 = vrot.lane.b32.xlu0 %v2540, 28
        %v3412 = vpop.permute.xlu0 %3411
        %3413 = vrot.lane.b32.xlu0 %v2541, 28
        %v3414 = vpop.permute.xlu0 %3413
        %3415 = vrot.lane.b32.xlu0 %v2542, 28
        %v3416 = vpop.permute.xlu0 %3415
        %3417 = vrot.lane.b32.xlu0 %v2543, 28
        %v3418 = vpop.permute.xlu0 %3417
        %3419 = vrot.lane.b32.xlu0 %v2544, 28
        %v3420 = vpop.permute.xlu0 %3419
        %3421 = vrot.lane.b32.xlu0 %v2545, 28
        %v3422 = vpop.permute.xlu0 %3421
        %3423 = vrot.lane.b32.xlu0 %v2546, 28
        %v3424 = vpop.permute.xlu0 %3423
        %3425 = vrot.lane.b32.xlu0 %v2547, 28
        %v3426 = vpop.permute.xlu0 %3425
        %3427 = vrot.lane.b32.xlu0 %v2548, 28
        %v3428 = vpop.permute.xlu0 %3427
        %3429 = vrot.lane.b32.xlu0 %v2549, 28
        %v3430 = vpop.permute.xlu0 %3429
        %3431 = vrot.lane.b32.xlu0 %v2550, 28
        %v3432 = vpop.permute.xlu0 %3431
        %3433 = vrot.lane.b32.xlu0 %v2551, 28
        %v3434 = vpop.permute.xlu0 %3433
        %3435 = vrot.lane.b32.xlu0 %v2552, 28
        %v3436 = vpop.permute.xlu0 %3435
        %3437 = vrot.lane.b32.xlu0 %v2553, 28
        %v3438 = vpop.permute.xlu0 %3437
        %3439 = vrot.lane.b32.xlu0 %v2554, 28
        %v3440 = vpop.permute.xlu0 %3439
        %3441 = vrot.lane.b32.xlu0 %v2555, 28
        %v3442 = vpop.permute.xlu0 %3441
        %3443 = vrot.lane.b32.xlu0 %v2556, 28
        %v3444 = vpop.permute.xlu0 %3443
        %3445 = vrot.lane.b32.xlu0 %v2557, 28
        %v3446 = vpop.permute.xlu0 %3445
        %3447 = vrot.lane.b32.xlu0 %v2558, 28
        %v3448 = vpop.permute.xlu0 %3447
        %3449 = vrot.lane.b32.xlu0 %v2559, 28
        %v3450 = vpop.permute.xlu0 %3449
        %3451 = vrot.lane.b32.xlu0 %v2560, 28
        %v3452 = vpop.permute.xlu0 %3451
        %3453 = vrot.lane.b32.xlu0 %v2561, 28
        %v3454 = vpop.permute.xlu0 %3453
        %3455 = vrot.lane.b32.xlu0 %v2562, 28
        %v3456 = vpop.permute.xlu0 %3455
        %3457 = vrot.lane.b32.xlu0 %v2563, 28
        %v3458 = vpop.permute.xlu0 %3457
        %3459 = vrot.lane.b32.xlu0 %v2564, 28
        %v3460 = vpop.permute.xlu0 %3459
        %3525 = vrot.lane.b32.xlu0 %v2565, 32
        %v3526 = vpop.permute.xlu0 %3525
        %3527 = vrot.lane.b32.xlu0 %v2566, 32
        %v3528 = vpop.permute.xlu0 %3527
        %3529 = vrot.lane.b32.xlu0 %v2567, 32
        %v3530 = vpop.permute.xlu0 %3529
        %3531 = vrot.lane.b32.xlu0 %v2568, 32
        %v3532 = vpop.permute.xlu0 %3531
        %3533 = vrot.lane.b32.xlu0 %v2569, 32
        %v3534 = vpop.permute.xlu0 %3533
        %3535 = vrot.lane.b32.xlu0 %v2570, 32
        %v3536 = vpop.permute.xlu0 %3535
        %3537 = vrot.lane.b32.xlu0 %v2571, 32
        %v3538 = vpop.permute.xlu0 %3537
        %3539 = vrot.lane.b32.xlu0 %v2572, 32
        %v3540 = vpop.permute.xlu0 %3539
        %3541 = vrot.lane.b32.xlu0 %v2573, 32
        %v3542 = vpop.permute.xlu0 %3541
        %3543 = vrot.lane.b32.xlu0 %v2574, 32
        %v3544 = vpop.permute.xlu0 %3543
        %3545 = vrot.lane.b32.xlu0 %v2575, 32
        %v3546 = vpop.permute.xlu0 %3545
        %3547 = vrot.lane.b32.xlu0 %v2576, 32
        %v3548 = vpop.permute.xlu0 %3547
        %3549 = vrot.lane.b32.xlu0 %v2577, 32
        %v3550 = vpop.permute.xlu0 %3549
        %3551 = vrot.lane.b32.xlu0 %v2578, 32
        %v3552 = vpop.permute.xlu0 %3551
        %3553 = vrot.lane.b32.xlu0 %v2579, 32
        %v3554 = vpop.permute.xlu0 %3553
        %3555 = vrot.lane.b32.xlu0 %v2580, 32
        %v3556 = vpop.permute.xlu0 %3555
        %3557 = vrot.lane.b32.xlu0 %v2581, 32
        %v3558 = vpop.permute.xlu0 %3557
        %3559 = vrot.lane.b32.xlu0 %v2582, 32
        %v3560 = vpop.permute.xlu0 %3559
        %3561 = vrot.lane.b32.xlu0 %v2583, 32
        %v3562 = vpop.permute.xlu0 %3561
        %3563 = vrot.lane.b32.xlu0 %v2584, 32
        %v3564 = vpop.permute.xlu0 %3563
        %3565 = vrot.lane.b32.xlu0 %v2585, 32
        %v3566 = vpop.permute.xlu0 %3565
        %3567 = vrot.lane.b32.xlu0 %v2586, 32
        %v3568 = vpop.permute.xlu0 %3567
        %3569 = vrot.lane.b32.xlu0 %v2587, 32
        %v3570 = vpop.permute.xlu0 %3569
        %3571 = vrot.lane.b32.xlu0 %v2588, 32
        %v3572 = vpop.permute.xlu0 %3571
        %3573 = vrot.lane.b32.xlu0 %v2589, 32
        %v3574 = vpop.permute.xlu0 %3573
        %3575 = vrot.lane.b32.xlu0 %v2590, 32
        %v3576 = vpop.permute.xlu0 %3575
        %3577 = vrot.lane.b32.xlu0 %v2591, 32
        %v3578 = vpop.permute.xlu0 %3577
        %3579 = vrot.lane.b32.xlu0 %v2592, 32
        %v3580 = vpop.permute.xlu0 %3579
        %3581 = vrot.lane.b32.xlu0 %v2593, 32
        %v3582 = vpop.permute.xlu0 %3581
        %3583 = vrot.lane.b32.xlu0 %v2594, 32
        %v3584 = vpop.permute.xlu0 %3583
        %3585 = vrot.lane.b32.xlu0 %v2595, 32
        %v3586 = vpop.permute.xlu0 %3585
        %3587 = vrot.lane.b32.xlu0 %v2596, 32
        %v3588 = vpop.permute.xlu0 %3587
        %v3621 = vsel %vm224, %v2308, %v2630
        %v3622 = vsel %vm224, %v2309, %v2632
        %v3623 = vsel %vm224, %v2310, %v2634
        %v3624 = vsel %vm224, %v2311, %v2636
        %v3625 = vsel %vm224, %v2312, %v2638
        %v3626 = vsel %vm224, %v2313, %v2640
        %v3627 = vsel %vm224, %v2314, %v2642
        %v3628 = vsel %vm224, %v2315, %v2644
        %v3629 = vsel %vm224, %v2316, %v2646
        %v3630 = vsel %vm224, %v2317, %v2648
        %v3631 = vsel %vm224, %v2318, %v2650
        %v3632 = vsel %vm224, %v2319, %v2652
        %v3633 = vsel %vm224, %v2320, %v2654
        %v3634 = vsel %vm224, %v2321, %v2656
        %v3635 = vsel %vm224, %v2322, %v2658
        %v3636 = vsel %vm224, %v2323, %v2660
        %v3637 = vsel %vm224, %v2324, %v2662
        %v3638 = vsel %vm224, %v2325, %v2664
        %v3639 = vsel %vm224, %v2326, %v2666
        %v3640 = vsel %vm224, %v2327, %v2668
        %v3641 = vsel %vm224, %v2328, %v2670
        %v3642 = vsel %vm224, %v2329, %v2672
        %v3643 = vsel %vm224, %v2330, %v2674
        %v3644 = vsel %vm224, %v2331, %v2676
        %v3645 = vsel %vm224, %v2332, %v2678
        %v3646 = vsel %vm224, %v2333, %v2680
        %v3647 = vsel %vm224, %v2334, %v2682
        %v3648 = vsel %vm224, %v2335, %v2684
        %v3649 = vsel %vm224, %v2336, %v2686
        %v3650 = vsel %vm224, %v2337, %v2688
        %v3651 = vsel %vm224, %v2338, %v2690
        %v3652 = vsel %vm224, %v2339, %v2692
        %v3653 = vsel %vm1755, %v3621, %v2758
        %v3654 = vsel %vm1755, %v3622, %v2760
        %v3655 = vsel %vm1755, %v3623, %v2762
        %v3656 = vsel %vm1755, %v3624, %v2764
        %v3657 = vsel %vm1755, %v3625, %v2766
        %v3658 = vsel %vm1755, %v3626, %v2768
        %v3659 = vsel %vm1755, %v3627, %v2770
        %v3660 = vsel %vm1755, %v3628, %v2772
        %v3661 = vsel %vm1755, %v3629, %v2774
        %v3662 = vsel %vm1755, %v3630, %v2776
        %v3663 = vsel %vm1755, %v3631, %v2778
        %v3664 = vsel %vm1755, %v3632, %v2780
        %v3665 = vsel %vm1755, %v3633, %v2782
        %v3666 = vsel %vm1755, %v3634, %v2784
        %v3667 = vsel %vm1755, %v3635, %v2786
        %v3668 = vsel %vm1755, %v3636, %v2788
        %v3669 = vsel %vm1755, %v3637, %v2790
        %v3670 = vsel %vm1755, %v3638, %v2792
        %v3671 = vsel %vm1755, %v3639, %v2794
        %v3672 = vsel %vm1755, %v3640, %v2796
        %v3673 = vsel %vm1755, %v3641, %v2798
        %v3674 = vsel %vm1755, %v3642, %v2800
        %v3675 = vsel %vm1755, %v3643, %v2802
        %v3676 = vsel %vm1755, %v3644, %v2804
        %v3677 = vsel %vm1755, %v3645, %v2806
        %v3678 = vsel %vm1755, %v3646, %v2808
        %v3679 = vsel %vm1755, %v3647, %v2810
        %v3680 = vsel %vm1755, %v3648, %v2812
        %v3681 = vsel %vm1755, %v3649, %v2814
        %v3682 = vsel %vm1755, %v3650, %v2816
        %v3683 = vsel %vm1755, %v3651, %v2818
        %v3684 = vsel %vm1755, %v3652, %v2820
        %v3685 = vsel %vm1788, %v3653, %v2886
        %v3686 = vsel %vm1788, %v3654, %v2888
        %v3687 = vsel %vm1788, %v3655, %v2890
        %v3688 = vsel %vm1788, %v3656, %v2892
        %v3689 = vsel %vm1788, %v3657, %v2894
        %v3690 = vsel %vm1788, %v3658, %v2896
        %v3691 = vsel %vm1788, %v3659, %v2898
        %v3692 = vsel %vm1788, %v3660, %v2900
        %v3693 = vsel %vm1788, %v3661, %v2902
        %v3694 = vsel %vm1788, %v3662, %v2904
        %v3695 = vsel %vm1788, %v3663, %v2906
        %v3696 = vsel %vm1788, %v3664, %v2908
        %v3697 = vsel %vm1788, %v3665, %v2910
        %v3698 = vsel %vm1788, %v3666, %v2912
        %v3699 = vsel %vm1788, %v3667, %v2914
        %v3700 = vsel %vm1788, %v3668, %v2916
        %v3701 = vsel %vm1788, %v3669, %v2918
        %v3702 = vsel %vm1788, %v3670, %v2920
        %v3703 = vsel %vm1788, %v3671, %v2922
        %v3704 = vsel %vm1788, %v3672, %v2924
        %v3705 = vsel %vm1788, %v3673, %v2926
        %v3706 = vsel %vm1788, %v3674, %v2928
        %v3707 = vsel %vm1788, %v3675, %v2930
        %v3708 = vsel %vm1788, %v3676, %v2932
        %v3709 = vsel %vm1788, %v3677, %v2934
        %v3710 = vsel %vm1788, %v3678, %v2936
        %v3711 = vsel %vm1788, %v3679, %v2938
        %v3712 = vsel %vm1788, %v3680, %v2940
        %v3713 = vsel %vm1788, %v3681, %v2942
        %v3714 = vsel %vm1788, %v3682, %v2944
        %v3715 = vsel %vm1788, %v3683, %v2946
        %v3716 = vsel %vm1788, %v3684, %v2948
        %v3717 = vsel %vm1821, %v3685, %v3014
        %v3718 = vsel %vm1821, %v3686, %v3016
        %v3719 = vsel %vm1821, %v3687, %v3018
        %v3720 = vsel %vm1821, %v3688, %v3020
        %v3721 = vsel %vm1821, %v3689, %v3022
        %v3722 = vsel %vm1821, %v3690, %v3024
        %v3723 = vsel %vm1821, %v3691, %v3026
        %v3724 = vsel %vm1821, %v3692, %v3028
        %v3725 = vsel %vm1821, %v3693, %v3030
        %v3726 = vsel %vm1821, %v3694, %v3032
        %v3727 = vsel %vm1821, %v3695, %v3034
        %v3728 = vsel %vm1821, %v3696, %v3036
        %v3729 = vsel %vm1821, %v3697, %v3038
        %v3730 = vsel %vm1821, %v3698, %v3040
        %v3731 = vsel %vm1821, %v3699, %v3042
        %v3732 = vsel %vm1821, %v3700, %v3044
        %v3733 = vsel %vm1821, %v3701, %v3046
        %v3734 = vsel %vm1821, %v3702, %v3048
        %v3735 = vsel %vm1821, %v3703, %v3050
        %v3736 = vsel %vm1821, %v3704, %v3052
        %v3737 = vsel %vm1821, %v3705, %v3054
        %v3738 = vsel %vm1821, %v3706, %v3056
        %v3739 = vsel %vm1821, %v3707, %v3058
        %v3740 = vsel %vm1821, %v3708, %v3060
        %v3741 = vsel %vm1821, %v3709, %v3062
        %v3742 = vsel %vm1821, %v3710, %v3064
        %v3743 = vsel %vm1821, %v3711, %v3066
        %v3744 = vsel %vm1821, %v3712, %v3068
        %v3745 = vsel %vm1821, %v3713, %v3070
        %v3746 = vsel %vm1821, %v3714, %v3072
        %v3747 = vsel %vm1821, %v3715, %v3074
        %v3748 = vsel %vm1821, %v3716, %v3076
        %v3749 = vsel %vm1854, %v3717, %v3142
        %v3750 = vsel %vm1854, %v3718, %v3144
        %v3751 = vsel %vm1854, %v3719, %v3146
        %v3752 = vsel %vm1854, %v3720, %v3148
        %v3753 = vsel %vm1854, %v3721, %v3150
        %v3754 = vsel %vm1854, %v3722, %v3152
        %v3755 = vsel %vm1854, %v3723, %v3154
        %v3756 = vsel %vm1854, %v3724, %v3156
        %v3757 = vsel %vm1854, %v3725, %v3158
        %v3758 = vsel %vm1854, %v3726, %v3160
        %v3759 = vsel %vm1854, %v3727, %v3162
        %v3760 = vsel %vm1854, %v3728, %v3164
        %v3761 = vsel %vm1854, %v3729, %v3166
        %v3762 = vsel %vm1854, %v3730, %v3168
        %v3763 = vsel %vm1854, %v3731, %v3170
        %v3764 = vsel %vm1854, %v3732, %v3172
        %v3765 = vsel %vm1854, %v3733, %v3174
        %v3766 = vsel %vm1854, %v3734, %v3176
        %v3767 = vsel %vm1854, %v3735, %v3178
        %v3768 = vsel %vm1854, %v3736, %v3180
        %v3769 = vsel %vm1854, %v3737, %v3182
        %v3770 = vsel %vm1854, %v3738, %v3184
        %v3771 = vsel %vm1854, %v3739, %v3186
        %v3772 = vsel %vm1854, %v3740, %v3188
        %v3773 = vsel %vm1854, %v3741, %v3190
        %v3774 = vsel %vm1854, %v3742, %v3192
        %v3775 = vsel %vm1854, %v3743, %v3194
        %v3776 = vsel %vm1854, %v3744, %v3196
        %v3777 = vsel %vm1854, %v3745, %v3198
        %v3778 = vsel %vm1854, %v3746, %v3200
        %v3779 = vsel %vm1854, %v3747, %v3202
        %v3780 = vsel %vm1854, %v3748, %v3204
        %v3781 = vsel %vm1887, %v3749, %v3270
        %v3782 = vsel %vm1887, %v3750, %v3272
        %v3783 = vsel %vm1887, %v3751, %v3274
        %v3784 = vsel %vm1887, %v3752, %v3276
        %v3785 = vsel %vm1887, %v3753, %v3278
        %v3786 = vsel %vm1887, %v3754, %v3280
        %v3787 = vsel %vm1887, %v3755, %v3282
        %v3788 = vsel %vm1887, %v3756, %v3284
        %v3789 = vsel %vm1887, %v3757, %v3286
        %v3790 = vsel %vm1887, %v3758, %v3288
        %v3791 = vsel %vm1887, %v3759, %v3290
        %v3792 = vsel %vm1887, %v3760, %v3292
        %v3793 = vsel %vm1887, %v3761, %v3294
        %v3794 = vsel %vm1887, %v3762, %v3296
        %v3795 = vsel %vm1887, %v3763, %v3298
        %v3796 = vsel %vm1887, %v3764, %v3300
        %v3797 = vsel %vm1887, %v3765, %v3302
        %v3798 = vsel %vm1887, %v3766, %v3304
        %v3799 = vsel %vm1887, %v3767, %v3306
        %v3800 = vsel %vm1887, %v3768, %v3308
        %v3801 = vsel %vm1887, %v3769, %v3310
        %v3802 = vsel %vm1887, %v3770, %v3312
        %v3803 = vsel %vm1887, %v3771, %v3314
        %v3804 = vsel %vm1887, %v3772, %v3316
        %v3805 = vsel %vm1887, %v3773, %v3318
        %v3806 = vsel %vm1887, %v3774, %v3320
        %v3807 = vsel %vm1887, %v3775, %v3322
        %v3808 = vsel %vm1887, %v3776, %v3324
        %v3809 = vsel %vm1887, %v3777, %v3326
        %v3810 = vsel %vm1887, %v3778, %v3328
        %v3811 = vsel %vm1887, %v3779, %v3330
        %v3812 = vsel %vm1887, %v3780, %v3332
        %v3813 = vsel %vm1920, %v3781, %v3398
        %v3814 = vsel %vm1920, %v3782, %v3400
        %v3815 = vsel %vm1920, %v3783, %v3402
        %v3816 = vsel %vm1920, %v3784, %v3404
        %v3817 = vsel %vm1920, %v3785, %v3406
        %v3818 = vsel %vm1920, %v3786, %v3408
        %v3819 = vsel %vm1920, %v3787, %v3410
        %v3820 = vsel %vm1920, %v3788, %v3412
        %v3821 = vsel %vm1920, %v3789, %v3414
        %v3822 = vsel %vm1920, %v3790, %v3416
        %v3823 = vsel %vm1920, %v3791, %v3418
        %v3824 = vsel %vm1920, %v3792, %v3420
        %v3825 = vsel %vm1920, %v3793, %v3422
        %v3826 = vsel %vm1920, %v3794, %v3424
        %v3827 = vsel %vm1920, %v3795, %v3426
        %v3828 = vsel %vm1920, %v3796, %v3428
        %v3829 = vsel %vm1920, %v3797, %v3430
        %v3830 = vsel %vm1920, %v3798, %v3432
        %v3831 = vsel %vm1920, %v3799, %v3434
        %v3832 = vsel %vm1920, %v3800, %v3436
        %v3833 = vsel %vm1920, %v3801, %v3438
        %v3834 = vsel %vm1920, %v3802, %v3440
        %v3835 = vsel %vm1920, %v3803, %v3442
        %v3836 = vsel %vm1920, %v3804, %v3444
        %v3837 = vsel %vm1920, %v3805, %v3446
        %v3838 = vsel %vm1920, %v3806, %v3448
        %v3839 = vsel %vm1920, %v3807, %v3450
        %v3840 = vsel %vm1920, %v3808, %v3452
        %v3841 = vsel %vm1920, %v3809, %v3454
        %v3842 = vsel %vm1920, %v3810, %v3456
        %v3843 = vsel %vm1920, %v3811, %v3458
        %v3844 = vsel %vm1920, %v3812, %v3460
        %v3845 = vsel %vm1953, %v3813, %v3526
        %v3846 = vsel %vm1953, %v3814, %v3528
        %v3847 = vsel %vm1953, %v3815, %v3530
        %v3848 = vsel %vm1953, %v3816, %v3532
        %v3849 = vsel %vm1953, %v3817, %v3534
        %v3850 = vsel %vm1953, %v3818, %v3536
        %v3851 = vsel %vm1953, %v3819, %v3538
        %v3852 = vsel %vm1953, %v3820, %v3540
        %v3853 = vsel %vm1953, %v3821, %v3542
        %v3854 = vsel %vm1953, %v3822, %v3544
        %v3855 = vsel %vm1953, %v3823, %v3546
        %v3856 = vsel %vm1953, %v3824, %v3548
        %v3857 = vsel %vm1953, %v3825, %v3550
        %v3858 = vsel %vm1953, %v3826, %v3552
        %v3859 = vsel %vm1953, %v3827, %v3554
        %v3860 = vsel %vm1953, %v3828, %v3556
        %v3861 = vsel %vm1953, %v3829, %v3558
        %v3862 = vsel %vm1953, %v3830, %v3560
        %v3863 = vsel %vm1953, %v3831, %v3562
        %v3864 = vsel %vm1953, %v3832, %v3564
        %v3865 = vsel %vm1953, %v3833, %v3566
        %v3866 = vsel %vm1953, %v3834, %v3568
        %v3867 = vsel %vm1953, %v3835, %v3570
        %v3868 = vsel %vm1953, %v3836, %v3572
        %v3869 = vsel %vm1953, %v3837, %v3574
        %v3870 = vsel %vm1953, %v3838, %v3576
        %v3871 = vsel %vm1953, %v3839, %v3578
        %v3872 = vsel %vm1953, %v3840, %v3580
        %v3873 = vsel %vm1953, %v3841, %v3582
        %v3874 = vsel %vm1953, %v3842, %v3584
        %v3875 = vsel %vm1953, %v3843, %v3586
        %v3876 = vsel %vm1953, %v3844, %v3588
        %v3877 = vpack.c.bf16 %v3846, %v3845
        %v3878 = vpack.c.bf16 %v3848, %v3847
        %v3879 = vpack.c.bf16 %v3850, %v3849
        %v3880 = vpack.c.bf16 %v3852, %v3851
        %v3881 = vpack.c.bf16 %v3854, %v3853
        %v3882 = vpack.c.bf16 %v3856, %v3855
        %v3883 = vpack.c.bf16 %v3858, %v3857
        %v3884 = vpack.c.bf16 %v3860, %v3859
        %v3885 = vpack.c.bf16 %v3862, %v3861
        %v3886 = vpack.c.bf16 %v3864, %v3863
        %v3887 = vpack.c.bf16 %v3866, %v3865
        %v3888 = vpack.c.bf16 %v3868, %v3867
        %v3889 = vpack.c.bf16 %v3870, %v3869
        %v3890 = vpack.c.bf16 %v3872, %v3871
        %v3891 = vpack.c.bf16 %v3874, %v3873
        %v3892 = vpack.c.bf16 %v3876, %v3875
        %v3893 = vld [vmem:[%s3] sm:$0xf]
        %v3894 = vld [vmem:[%s3 + $0x4] sm:$0xf]
        %v3895 = vld [vmem:[%s3 + $0x8] sm:$0xf]
        %v3896 = vld [vmem:[%s3 + $0xc] sm:$0xf]
        %v3897 = vld [vmem:[%s3 + $0x10] sm:$0x3]
        %v3898 = vld [vmem:[%s4] sm:$0x1]
        %v3900 = vlaneseq
        %v3901 = vshrl.u32 %v3900, 7
        %v3902 = vsub.s32 0, %v3901
        %v3903 = vrot.slane %v3898, %v3902
        %v3910 = vunpack.c.l.b16 %v3893
        %v3911 = vunpack.c.l.b16 %v3894
        %v3912 = vunpack.c.l.b16 %v3895
        %v3913 = vunpack.c.l.b16 %v3896
        %v3914 = vunpack.c.l.b16 %v3897
        %v3915 = vpack.c.b16 %v3911, %v3910
        %v3916 = vpack.c.b16 %v3913, %v3912
        %v3917 = vpack.c.b16 %v3914, %v3914
        %v3921 = vsel %vm2029, %v3877, 0
        %v3924 = vsel %vm2029, %v3878, 0
        %v3927 = vsel %vm2029, %v3879, 0
        %v3930 = vsel %vm2029, %v3880, 0
        %v3933 = vsel %vm2029, %v3881, 0
        %v3936 = vsel %vm2029, %v3882, 0
        %v3939 = vsel %vm2029, %v3883, 0
        %v3942 = vsel %vm2029, %v3884, 0
        %v3945 = vsel %vm2029, %v3885, 0
        %v3948 = vsel %vm2029, %v3886, 0
        %v3951 = vsel %vm2029, %v3887, 0
        %v3954 = vsel %vm2029, %v3888, 0
        %v3957 = vsel %vm2029, %v3889, 0
        %v3960 = vsel %vm2029, %v3890, 0
        %v3963 = vsel %vm2029, %v3891, 0
        %v3966 = vsel %vm2029, %v3892, 0
        %v3969 = vsel %vm2078, %v3917, 0
        %3971 = vmatprep.subr.bf16.mxu0 0
        %3972 = vmatpush1.bf16.msra.mxu0 %v3915
        %3973 = vmatprep.subr.bf16.mxu0 0
        %3974 = vmatpush1.bf16.msra.mxu0 %v3916
        %3975 = vmatprep.subr.bf16.mxu0 0
        %3976 = vmatpush1.bf16.msra.mxu0 %v3969
        %3977 = vmatprep.subr.bf16.mxu0 0
        %3978 = vmatpush1.bf16.msra.mxu0 0
        %3979 = vmatprep.subr.bf16.mxu0 0
        %3980 = vmatpush1.bf16.msra.mxu0 0
        %3981 = vmatprep.subr.bf16.mxu0 0
        %3982 = vmatpush1.bf16.msra.mxu0 0
        %3983 = vmatprep.subr.bf16.mxu0 0
        %3984 = vmatpush1.bf16.msra.mxu0 0
        %3985 = vmatprep.subr.bf16.mxu0 0
        %3986 = vmatpush1.bf16.msra.mxu0 0
        %3987 = vmatprep.subr.bf16.mxu0 0
        %3988 = vmatpush1.bf16.msra.mxu0 0
        %3989 = vmatprep.subr.bf16.mxu0 0
        %3990 = vmatpush1.bf16.msra.mxu0 0
        %3991 = vmatprep.subr.bf16.mxu0 0
        %3992 = vmatpush1.bf16.msra.mxu0 0
        %3993 = vmatprep.subr.bf16.mxu0 0
        %3994 = vmatpush1.bf16.msra.mxu0 0
        %3995 = vmatprep.subr.bf16.mxu0 0
        %3996 = vmatpush1.bf16.msra.mxu0 0
        %3997 = vmatprep.subr.bf16.mxu0 0
        %3998 = vmatpush1.bf16.msra.mxu0 0
        %3999 = vmatprep.subr.bf16.mxu0 0
        %4000 = vmatpush1.bf16.msra.mxu0 0
        %4001 = vmatprep.subr.bf16.mxu0 0
        %4002 = vmatpush1.bf16.msra.mxu0 0
        %4003 = vmatprep.mubr.bf16.mxu0 0
        %4004 = vmatmul.mubr.bf16.gmra.mrb[0].mxu0 %v3921
        %v4005 = vpop.f32.mrb[0].mxu0
        %v4006 = vadd.f32 %v3903, %v4005
        %v4007 = vpop.f32.mrb[0].mxu0
        %v4008 = vpop.f32.mrb[0].mxu0
        %v4009 = vadd.f32 %v3903, %v4008
        %v4010 = vpop.f32.mrb[0].mxu0
        %4011 = vmatprep.mubr.bf16.mxu0 0
        %4012 = vmatmul.mubr.bf16.gmra.mrb[0].mxu0 %v3924
        %v4013 = vpop.f32.mrb[0].mxu0
        %v4014 = vadd.f32 %v3903, %v4013
        %v4015 = vpop.f32.mrb[0].mxu0
        %v4016 = vpop.f32.mrb[0].mxu0
        %v4017 = vadd.f32 %v3903, %v4016
        %v4018 = vpop.f32.mrb[0].mxu0
        %4019 = vmatprep.mubr.bf16.mxu0 0
        %4020 = vmatmul.mubr.bf16.gmra.mrb[0].mxu0 %v3927
        %v4021 = vpop.f32.mrb[0].mxu0
        %v4022 = vadd.f32 %v3903, %v4021
        %v4023 = vpop.f32.mrb[0].mxu0
        %v4024 = vpop.f32.mrb[0].mxu0
        %v4025 = vadd.f32 %v3903, %v4024
        %v4026 = vpop.f32.mrb[0].mxu0
        %4027 = vmatprep.mubr.bf16.mxu0 0
        %4028 = vmatmul.mubr.bf16.gmra.mrb[0].mxu0 %v3930
        %v4029 = vpop.f32.mrb[0].mxu0
        %v4030 = vadd.f32 %v3903, %v4029
        %v4031 = vpop.f32.mrb[0].mxu0
        %v4032 = vpop.f32.mrb[0].mxu0
        %v4033 = vadd.f32 %v3903, %v4032
        %v4034 = vpop.f32.mrb[0].mxu0
        %4035 = vmatprep.mubr.bf16.mxu0 0
        %4036 = vmatmul.mubr.bf16.gmra.mrb[0].mxu0 %v3933
        %v4037 = vpop.f32.mrb[0].mxu0
        %v4038 = vadd.f32 %v3903, %v4037
        %v4039 = vpop.f32.mrb[0].mxu0
        %v4040 = vpop.f32.mrb[0].mxu0
        %v4041 = vadd.f32 %v3903, %v4040
        %v4042 = vpop.f32.mrb[0].mxu0
        %4043 = vmatprep.mubr.bf16.mxu0 0
        %4044 = vmatmul.mubr.bf16.gmra.mrb[0].mxu0 %v3936
        %v4045 = vpop.f32.mrb[0].mxu0
        %v4046 = vadd.f32 %v3903, %v4045
        %v4047 = vpop.f32.mrb[0].mxu0
        %v4048 = vpop.f32.mrb[0].mxu0
        %v4049 = vadd.f32 %v3903, %v4048
        %v4050 = vpop.f32.mrb[0].mxu0
        %4051 = vmatprep.mubr.bf16.mxu0 0
        %4052 = vmatmul.mubr.bf16.gmra.mrb[0].mxu0 %v3939
        %v4053 = vpop.f32.mrb[0].mxu0
        %v4054 = vadd.f32 %v3903, %v4053
        %v4055 = vpop.f32.mrb[0].mxu0
        %v4056 = vpop.f32.mrb[0].mxu0
        %v4057 = vadd.f32 %v3903, %v4056
        %v4058 = vpop.f32.mrb[0].mxu0
        %4059 = vmatprep.mubr.bf16.mxu0 0
        %4060 = vmatmul.mubr.bf16.gmra.mrb[0].mxu0 %v3942
        %v4061 = vpop.f32.mrb[0].mxu0
        %v4062 = vadd.f32 %v3903, %v4061
        %v4063 = vpop.f32.mrb[0].mxu0
        %v4064 = vpop.f32.mrb[0].mxu0
        %v4065 = vadd.f32 %v3903, %v4064
        %v4066 = vpop.f32.mrb[0].mxu0
        %4067 = vmatprep.mubr.bf16.mxu0 0
        %4068 = vmatmul.mubr.bf16.gmra.mrb[0].mxu0 %v3945
        %v4069 = vpop.f32.mrb[0].mxu0
        %v4070 = vadd.f32 %v3903, %v4069
        %v4071 = vpop.f32.mrb[0].mxu0
        %v4072 = vpop.f32.mrb[0].mxu0
        %v4073 = vadd.f32 %v3903, %v4072
        %v4074 = vpop.f32.mrb[0].mxu0
        %4075 = vmatprep.mubr.bf16.mxu0 0
        %4076 = vmatmul.mubr.bf16.gmra.mrb[0].mxu0 %v3948
        %v4077 = vpop.f32.mrb[0].mxu0
        %v4078 = vadd.f32 %v3903, %v4077
        %v4079 = vpop.f32.mrb[0].mxu0
        %v4080 = vpop.f32.mrb[0].mxu0
        %v4081 = vadd.f32 %v3903, %v4080
        %v4082 = vpop.f32.mrb[0].mxu0
        %4083 = vmatprep.mubr.bf16.mxu0 0
        %4084 = vmatmul.mubr.bf16.gmra.mrb[0].mxu0 %v3951
        %v4085 = vpop.f32.mrb[0].mxu0
        %v4086 = vadd.f32 %v3903, %v4085
        %v4087 = vpop.f32.mrb[0].mxu0
        %v4088 = vpop.f32.mrb[0].mxu0
        %v4089 = vadd.f32 %v3903, %v4088
        %v4090 = vpop.f32.mrb[0].mxu0
        %4091 = vmatprep.mubr.bf16.mxu0 0
        %4092 = vmatmul.mubr.bf16.gmra.mrb[0].mxu0 %v3954
        %v4093 = vpop.f32.mrb[0].mxu0
        %v4094 = vadd.f32 %v3903, %v4093
        %v4095 = vpop.f32.mrb[0].mxu0
        %v4096 = vpop.f32.mrb[0].mxu0
        %v4097 = vadd.f32 %v3903, %v4096
        %v4098 = vpop.f32.mrb[0].mxu0
        %4099 = vmatprep.mubr.bf16.mxu0 0
        %4100 = vmatmul.mubr.bf16.gmra.mrb[0].mxu0 %v3957
        %v4101 = vpop.f32.mrb[0].mxu0
        %v4102 = vadd.f32 %v3903, %v4101
        %v4103 = vpop.f32.mrb[0].mxu0
        %v4104 = vpop.f32.mrb[0].mxu0
        %v4105 = vadd.f32 %v3903, %v4104
        %v4106 = vpop.f32.mrb[0].mxu0
        %4107 = vmatprep.mubr.bf16.mxu0 0
        %4108 = vmatmul.mubr.bf16.gmra.mrb[0].mxu0 %v3960
        %v4109 = vpop.f32.mrb[0].mxu0
        %v4110 = vadd.f32 %v3903, %v4109
        %v4111 = vpop.f32.mrb[0].mxu0
        %v4112 = vpop.f32.mrb[0].mxu0
        %v4113 = vadd.f32 %v3903, %v4112
        %v4114 = vpop.f32.mrb[0].mxu0
        %4115 = vmatprep.mubr.bf16.mxu0 0
        %4116 = vmatmul.mubr.bf16.gmra.mrb[0].mxu0 %v3963
        %v4117 = vpop.f32.mrb[0].mxu0
        %v4118 = vadd.f32 %v3903, %v4117
        %v4119 = vpop.f32.mrb[0].mxu0
        %v4120 = vpop.f32.mrb[0].mxu0
        %v4121 = vadd.f32 %v3903, %v4120
        %v4122 = vpop.f32.mrb[0].mxu0
        %4123 = vmatprep.mubr.bf16.mxu0 0
        %4124 = vmatmul.mubr.bf16.gmra.mrb[0].mxu0 %v3966
        %v4125 = vpop.f32.mrb[0].mxu0
        %v4126 = vadd.f32 %v3903, %v4125
        %v4127 = vpop.f32.mrb[0].mxu0
        %v4128 = vpop.f32.mrb[0].mxu0
        %v4129 = vadd.f32 %v3903, %v4128
        %v4130 = vpop.f32.mrb[0].mxu0
        %4131 = vdwg.mxu0
        %4132 = vxpose.xlu0.b32.start [1/16] %v4006, 128
        %4133 = vxpose.xlu0.b32.cont [2/16] %v4009, 128
        %4134 = vxpose.xlu0.b32.cont [3/16] %v4014, 128
        %4135 = vxpose.xlu0.b32.cont [4/16] %v4017, 128
        %4136 = vxpose.xlu0.b32.cont [5/16] %v4022, 128
        %4137 = vxpose.xlu0.b32.cont [6/16] %v4025, 128
        %4138 = vxpose.xlu0.b32.cont [7/16] %v4030, 128
        %4139 = vxpose.xlu0.b32.cont [8/16] %v4033, 128
        %4140 = vxpose.xlu0.b32.cont [9/16] %v4038, 128
        %4141 = vxpose.xlu0.b32.cont [10/16] %v4041, 128
        %4142 = vxpose.xlu0.b32.cont [11/16] %v4046, 128
        %4143 = vxpose.xlu0.b32.cont [12/16] %v4049, 128
        %4144 = vxpose.xlu0.b32.cont [13/16] %v4054, 128
        %4145 = vxpose.xlu0.b32.cont [14/16] %v4057, 128
        %4146 = vxpose.xlu0.b32.cont [15/16] %v4062, 128
        %4147 = vxpose.xlu0.b32.end [16/16] %v4065, 128
        %v4148 = vpop.trf.xlu0
        %v4149 = vpop.trf.xlu0
        %v4150 = vpop.trf.xlu0
        %v4151 = vpop.trf.xlu0
        %v4152 = vpop.trf.xlu0
        %v4153 = vpop.trf.xlu0
        %v4154 = vpop.trf.xlu0
        %v4155 = vpop.trf.xlu0
        %v4156 = vpop.trf.xlu0
        %v4157 = vpop.trf.xlu0
        %v4158 = vpop.trf.xlu0
        %v4159 = vpop.trf.xlu0
        %v4160 = vpop.trf.xlu0
        %v4161 = vpop.trf.xlu0
        %v4162 = vpop.trf.xlu0
        %v4163 = vpop.trf.xlu0
        %4164 = vxpose.xlu0.b32.start [1/16] %v4070, 128
        %4165 = vxpose.xlu0.b32.cont [2/16] %v4073, 128
        %4166 = vxpose.xlu0.b32.cont [3/16] %v4078, 128
        %4167 = vxpose.xlu0.b32.cont [4/16] %v4081, 128
        %4168 = vxpose.xlu0.b32.cont [5/16] %v4086, 128
        %4169 = vxpose.xlu0.b32.cont [6/16] %v4089, 128
        %4170 = vxpose.xlu0.b32.cont [7/16] %v4094, 128
        %4171 = vxpose.xlu0.b32.cont [8/16] %v4097, 128
        %4172 = vxpose.xlu0.b32.cont [9/16] %v4102, 128
        %4173 = vxpose.xlu0.b32.cont [10/16] %v4105, 128
        %4174 = vxpose.xlu0.b32.cont [11/16] %v4110, 128
        %4175 = vxpose.xlu0.b32.cont [12/16] %v4113, 128
        %4176 = vxpose.xlu0.b32.cont [13/16] %v4118, 128
        %4177 = vxpose.xlu0.b32.cont [14/16] %v4121, 128
        %4178 = vxpose.xlu0.b32.cont [15/16] %v4126, 128
        %4179 = vxpose.xlu0.b32.end [16/16] %v4129, 128
        %v4180 = vpop.trf.xlu0
        %v4181 = vpop.trf.xlu0
        %v4182 = vpop.trf.xlu0
        %v4183 = vpop.trf.xlu0
        %v4184 = vpop.trf.xlu0
        %v4185 = vpop.trf.xlu0
        %v4186 = vpop.trf.xlu0
        %v4187 = vpop.trf.xlu0
        %v4188 = vpop.trf.xlu0
        %v4189 = vpop.trf.xlu0
        %v4190 = vpop.trf.xlu0
        %v4191 = vpop.trf.xlu0
        %v4192 = vpop.trf.xlu0
        %v4193 = vpop.trf.xlu0
        %v4194 = vpop.trf.xlu0
        %v4195 = vpop.trf.xlu0
        %v4198 = vcombine.low %v4148, %v4180
        %4200 = vst [vmem:[%s217] sm:$0xff] %v4198
        %s4201 = sand.u32 %s137, 1
        %s4202 = scalar_lea.sflag [#allocation5], %s4201
        %s4203 = sand.u32 %s137, 1
        %s4204 = smul.addr %s4203, 8
        %s4205 = scalar_lea.vmem [#allocation4], %s4204
        // Predicated region
        $region41: #{tpu_custom_call.1} parent=39 // pred_check
          %p4206 = pneg %p147
        $region42: #{tpu_custom_call.1} parent=39 // pred_check_branch
          %4208 = sbr.rel (%p4206) target = $region44
        $region43: #{tpu_custom_call.1} parent=39 // pred_region
          %s4210 = ssub.s32 128, 128
          %4211 = vsyncadd %s4202, %s4210
          %s4212 = smul.addr %s19, 2
          %s4213 = smul.addr %s4212, 64
          %s4214 = scalar_lea.hbm %s5, %s4213
          %s4216 = sshll.u32 %s4205, 4
          %s4217 = int_to_ptr.vmem [resolvable:$true] %s4216
          %4219 = dma.vmem_to_hbm [thread:$0]  %s4217, 128, %s4214, %s4202
        $region44: #{tpu_custom_call.1} parent=39 // pred_fallthru
          _
      $region40: #{tpu_custom_call.1} parent=5 // pred_fallthru
        _
      %p4220 = scmp.le.s32.totalorder 2, %s14
      // Predicated region
      $region45: #{tpu_custom_call.1} parent=5 // pred_check
        %p4221 = pneg %p4220
      $region46: #{tpu_custom_call.1} parent=5 // pred_check_branch
        %4223 = sbr.rel (%p4221) target = $region48
      $region47: #{tpu_custom_call.1} parent=5 // pred_region
        %s4224 = ssub.s32 %s14, 2
        // Predicated region
        $region49: #{tpu_custom_call.1} parent=47 // pred_check
          %p4225 = pneg %p153
        $region50: #{tpu_custom_call.1} parent=47 // pred_check_branch
          %4227 = sbr.rel (%p4225) target = $region52
        $region51: #{tpu_custom_call.1} parent=47 // pred_region
          %s4228 = sand.u32 %s138, 1
          %s4229 = scalar_lea.sflag [#allocation5], %s4228
          %s4230 = sand.u32 %s138, 1
          %s4231 = smul.addr %s4230, 8
          %s4232 = scalar_lea.vmem [#allocation4], %s4231
          %4233 = dma.done %s4229, 128
        $region52: #{tpu_custom_call.1} parent=47 // pred_fallthru
          _
      $region48: #{tpu_custom_call.1} parent=5 // pred_fallthru
        _
    $region6: #{tpu_custom_call.1} parent=1 // loop_footer
      %s18 = sadd.s32 1, %s14
    $region7: #{tpu_custom_call.1} parent=1 // loop_footer_branch
      %13 = sbr.rel target = $region3
    $region8: #{tpu_custom_call.1} parent=1 // loop_exit
      _
    %4234 = vsyncpa [#allocation5], 1
    %s4235 = scalar_lea.sflag [#allocation5], 1
    %4236 = vsyncpa %s4235, 1

</llo_original>
